<compile_context>
chip_gen: v5e
topology: v5e:2x2
jax: 0.10.0
libtpu: 0.0.40
codegen_flags: <defaults>
</compile_context>

<pallas_src>
import functools

import jax
import jax.numpy as jnp
from jax.experimental import pallas as pl
from jax.experimental.pallas import tpu as pltpu

ACT_DT = jnp.bfloat16      # MXU input dtype; all elementwise / stored data is f32
LANE = 128


def _pad_to(n, m=LANE):
    return ((n + m - 1) // m) * m


# ----------------------------------------------------------------------------
# Weight prep: fold BN scale into the conv weight (bf16), keep bias as an f32
# row, and place blocks into zero-padded lane-dense matrices so every matmul
# output is already a >=128-wide slab (no in-kernel concatenate / masked store).
# ----------------------------------------------------------------------------
def _fold_w(p):
    return p["w"] * p["scale"][None, :]


def _place_w(shape, blocks, dtype=ACT_DT):
    m = jnp.zeros(shape, jnp.float32)
    for w, r0, c0 in blocks:
        m = m.at[r0:r0 + w.shape[0], c0:c0 + w.shape[1]].set(w)
    return m.astype(dtype)


def _place_b(ncols, blocks):
    v = jnp.zeros((1, ncols), jnp.float32)
    for b, c0 in blocks:
        v = v.at[0, c0:c0 + b.shape[0]].set(b)
    return v


# ----------------------------------------------------------------------------
# BlockSpec helpers + generic launcher (row-blocked operands + resident consts)
# ----------------------------------------------------------------------------
def _row_spec(tm, *trailing):
    nt = len(trailing)
    return pl.BlockSpec((tm,) + tuple(trailing),
                        lambda i, _n=nt: (i,) + (0,) * _n)


def _full_spec(arr):
    nd = arr.ndim
    return pl.BlockSpec(arr.shape, lambda i, _n=nd: (0,) * _n)


def _launch(kernel, row_args, const_args, out_cols, *, tm, vmem_limit,
            out_dtype=jnp.float32):
    M = row_args[0].shape[0]
    in_specs = ([_row_spec(tm, *a.shape[1:]) for a in row_args]
                + [_full_spec(a) for a in const_args])
    return pl.pallas_call(
        kernel,
        out_shape=jax.ShapeDtypeStruct((M, out_cols), out_dtype),
        grid_spec=pltpu.PrefetchScalarGridSpec(
            num_scalar_prefetch=0,
            grid=(M // tm,),
            in_specs=in_specs,
            out_specs=_row_spec(tm, out_cols),
        ),
        compiler_params=pltpu.CompilerParams(
            dimension_semantics=("parallel",),
            vmem_limit_bytes=int(vmem_limit)),
    )(*row_args, *const_args)


def _pick_tm(M, row_bytes, vmem_cap):
    """Largest tile (multiple of 8, divides M) fitting the VMEM budget with
    double-buffering, keeping >=4 grid steps so each v7x TensorCore pipelines."""
    budget = int(0.35 * vmem_cap)
    cap = min(budget // max(1, 2 * row_bytes), 1024, M)
    cap = max(8, (cap // 8) * 8)
    min_steps = 4 if M >= 32 else 1
    for d in range(cap, 7, -8):
        if M % d == 0 and M // d >= min_steps:
            return d
    for d in range(cap, 7, -8):
        if M % d == 0:
            return d
    return 8


# ----------------------------------------------------------------------------
# Fused kernel bodies (closures over static channel widths)
# ----------------------------------------------------------------------------
def _kernel_a(width):
    def kernel(x_ref, w1_ref, b1_ref, wcat_ref, bcat_ref, o_ref):
        f0 = jnp.dot(x_ref[...].astype(ACT_DT), w1_ref[...],
                     preferred_element_type=jnp.float32) + b1_ref[...]
        f0 = jnp.maximum(f0, 0.0)                       # relu(BN(conv1 x))
        y = jnp.dot(f0.astype(ACT_DT), wcat_ref[...],   # [b1_sc | b1_in] fused
                    preferred_element_type=jnp.float32) + bcat_ref[...]
        lane = jax.lax.broadcasted_iota(jnp.int32, y.shape, 1)
        # slab layout: [ shortcut (BN only, no relu) | relu'd in-conv | 0 ]
        o_ref[...] = jnp.where(lane >= width, jnp.maximum(y, 0.0), y)
    return kernel


def _kernel_b(width):
    def kernel(nbr_ref, w3_ref, rowa_ref, woutp_ref, boutp_ref,
               w2inp_ref, b2inp_ref, o_ref):
        # PosPool 'xyz' masked aggregation; weights pre-fused in the wrapper.
        agg = jnp.sum(nbr_ref[...] * w3_ref[...], axis=1)          # (tm, mid)
        y1 = jnp.dot(agg.astype(ACT_DT), woutp_ref[...],
                     preferred_element_type=jnp.float32) + boutp_ref[...]
        lane = jax.lax.broadcasted_iota(jnp.int32, y1.shape, 1)
        sc = jnp.where(lane < width, rowa_ref[...], 0.0)           # proj shortcut
        f1s = jnp.maximum(y1 + sc, 0.0)                            # f1 in [0,width)
        y2 = jnp.dot(f1s.astype(ACT_DT), w2inp_ref[...],
                     preferred_element_type=jnp.float32) + b2inp_ref[...]
        o_ref[...] = f1s + jnp.maximum(y2, 0.0)                    # [ f1 | h2 | 0 ]
    return kernel


def _kernel_c(width):
    def kernel(nbr_ref, w3_ref, rowb_ref, w2outp_ref, b2outp_ref,
               wheadp_ref, bheadp_ref, wfcp_ref, bfcp_ref,
               wlogp_ref, blogp_ref, o_ref):
        agg = jnp.sum(nbr_ref[...] * w3_ref[...], axis=1)
        y = jnp.dot(agg.astype(ACT_DT), w2outp_ref[...],
                    preferred_element_type=jnp.float32) + b2outp_ref[...]
        lane = jax.lax.broadcasted_iota(jnp.int32, y.shape, 1)
        res = jnp.where(lane < width, rowb_ref[...], 0.0)          # identity (f1)
        f2s = jnp.maximum(y + res, 0.0)
        hf = jnp.maximum(
            jnp.dot(f2s.astype(ACT_DT), wheadp_ref[...],
                    preferred_element_type=jnp.float32) + bheadp_ref[...], 0.0)
        hc = jnp.maximum(
            jnp.dot(hf.astype(ACT_DT), wfcp_ref[...],
                    preferred_element_type=jnp.float32) + bfcp_ref[...], 0.0)
        # per-class logits: block-diagonal weights, kept f32 for parity
        o_ref[...] = jnp.dot(hc, wlogp_ref[...],
                             preferred_element_type=jnp.float32) + blogp_ref[...]
    return kernel


# ----------------------------------------------------------------------------
# Parameters (deterministic synthetic init, kaiming-normal-like conv weights)
# ----------------------------------------------------------------------------
def _conv_bn_params(key, cin, cout, *, bn=True):
    kw, ks, kb = jax.random.split(key, 3)
    w = jax.random.normal(kw, (cin, cout), jnp.float32) * jnp.sqrt(2.0 / cin)
    if bn:
        scale = 1.0 + 0.1 * jax.random.normal(ks, (cout,), jnp.float32)
        bias = 0.1 * jax.random.normal(kb, (cout,), jnp.float32)
    else:
        scale = jnp.ones((cout,), jnp.float32)
        bias = jnp.zeros((cout,), jnp.float32)    # conv bias init'd to zeros
    return {"w": w, "scale": scale, "bias": bias}


def init_params(key, input_features_dim, width, bottleneck_ratio,
                num_classes, num_parts):
    keys = iter(jax.random.split(key, 32))
    mid = width // bottleneck_ratio
    p = {
        "conv1": _conv_bn_params(next(keys), input_features_dim, width // 2),
        "b1_in": _conv_bn_params(next(keys), width // 2, mid),
        "b1_out": _conv_bn_params(next(keys), mid, width),
        "b1_sc": _conv_bn_params(next(keys), width // 2, width),
        "b2_in": _conv_bn_params(next(keys), width, mid),
        "b2_out": _conv_bn_params(next(keys), mid, width),
        "head_shared": _conv_bn_params(next(keys), width, width),
        "head_cls": [],
    }
    for i in range(num_classes):
        p["head_cls"].append({
            "fc1": _conv_bn_params(next(keys), width, width),
            "logits": _conv_bn_params(next(keys), width, num_parts[i], bn=False),
        })
    return p


# ----------------------------------------------------------------------------
# Glue: chunked masked KNN + row gathers (plain JAX)
# ----------------------------------------------------------------------------
def knn_indices(xyz, mask, k, *, chunk=1024):
    """Masked kNN via ||x||^2 - 2 x.y + ||y||^2 with a running top-k over key
    chunks, so the full (B, N, N) distance matrix is never materialized."""
    B, N, _ = xyz.shape
    sq = jnp.sum(xyz * xyz, axis=-1)                                 # (B, N)
    best_d = jnp.full((B, N, k), jnp.float32(1e10))
    best_i = jnp.zeros((B, N, k), jnp.int32)
    for s in range(0, N, chunk):
        e = min(N, s + chunk)
        d2 = (sq[:, :, None] + sq[:, None, s:e]
              - 2.0 * jnp.einsum("bid,bjd->bij", xyz, xyz[:, s:e]))
        d2 = jnp.where(mask[:, None, s:e] > 0, d2, 1e10)
        cols = jnp.broadcast_to(jnp.arange(s, e, dtype=jnp.int32), d2.shape)
        cd = jnp.concatenate([best_d, d2], axis=-1)
        ci = jnp.concatenate([best_i, cols], axis=-1)
        nd, sel = jax.lax.top_k(-cd, k)
        best_d = -nd
        best_i = jnp.take_along_axis(ci, sel, axis=-1)
    valid = (best_d < 1e9).astype(jnp.float32)
    return best_i, valid                                             # (B,N,k) x2


def gather_rows(x_bnc, idx):
    # x_bnc: (B, N, C), idx: (B, N, K) -> (B, N, K, C)
    return jax.vmap(lambda xb, ib: xb[ib])(x_bnc, idx)


# ----------------------------------------------------------------------------
# Forward pass (ResNet/PosPool backbone + MultiPartSegHeadResNet-style head)
# ----------------------------------------------------------------------------
def multipart_segmentation_forward(params, xyz, mask, features, *,
                                   radius, nsamples, num_classes, num_parts):
    # xyz: (B, N, 3), mask: (B, N), features: (B, C_in, N)  -- PyTorch NCW
    B, N, _ = xyz.shape
    M = B * N
    K = nsamples
    assert M % 8 == 0, "B*N must be a multiple of 8 for TPU sublane tiling"

    width = params["b1_out"]["w"].shape[1]
    mid = params["b1_in"]["w"].shape[1]
    half = params["conv1"]["w"].shape[1]
    slab_cols = _pad_to(width + mid)
    fc_cols = _pad_to(num_classes * width)
    offs = [0]
    for p_ in num_parts:
        offs.append(offs[-1] + p_)
    pout = _pad_to(offs[-1])

    # -- hardware-aware tiling / VMEM budget ---------------------------------
    try:
        vmem_cap = int(pltpu.get_tpu_info().vmem_capacity_bytes)
    except Exception:
        vmem_cap = 64 << 20                      # conservative (v7x-sized) fallback
    vmem_limit = min(int(0.80 * vmem_cap), 100 << 20)
    kpad = ((K + 7) // 8) * 8
    row_bytes = 4 * (2 * kpad * _pad_to(mid) + 2 * slab_cols + pout)
    tm = _pick_tm(M, row_bytes, vmem_cap)

    feats = jnp.transpose(features, (0, 2, 1)).reshape(M, -1)

    # ---- neighbor structure (shared by both PosPool stages) ----------------
    idx, valid = knn_indices(xyz, mask, K)
    n_xyz = gather_rows(xyz, idx)                                    # (B,N,K,3)
    rel = (n_xyz - xyz[:, :, None, :]) / radius
    nm = gather_rows(mask[..., None], idx)[..., 0] * valid           # (B,N,K)
    cnt = jnp.maximum(jnp.sum(nm, axis=-1, keepdims=True), 1.0)      # (B,N,1)
    # PosPool 'xyz' weights pre-fused: rel-coord per channel group * mask / count
    cg = mid // 3
    assert cg * 3 == mid, "PosPool 'xyz' needs the bottleneck width divisible by 3"
    w3 = (jnp.repeat(rel * nm[..., None], cg, axis=-1)
          * (1.0 / cnt)[:, :, :, None]).reshape(M, K, mid).astype(jnp.float32)

    # ---- fused weight slabs (BN scale folded, zero-padded block placement) --
    w1 = _fold_w(params["conv1"]).astype(ACT_DT)
    b1 = params["conv1"]["bias"].reshape(1, half)
    wcat = _place_w((half, slab_cols),
                    [(_fold_w(params["b1_sc"]), 0, 0),
                     (_fold_w(params["b1_in"]), 0, width)])
    bcat = _place_b(slab_cols, [(params["b1_sc"]["bias"], 0),
                                (params["b1_in"]["bias"], width)])

    woutp = _place_w((mid, slab_cols), [(_fold_w(params["b1_out"]), 0, 0)])
    boutp = _place_b(slab_cols, [(params["b1_out"]["bias"], 0)])
    w2inp = _place_w((slab_cols, slab_cols), [(_fold_w(params["b2_in"]), 0, width)])
    b2inp = _place_b(slab_cols, [(params["b2_in"]["bias"], width)])

    w2outp = _place_w((mid, slab_cols), [(_fold_w(params["b2_out"]), 0, 0)])
    b2outp = _place_b(slab_cols, [(params["b2_out"]["bias"], 0)])
    wheadp = _place_w((slab_cols, slab_cols), [(_fold_w(params["head_shared"]), 0, 0)])
    bheadp = _place_b(slab_cols, [(params["head_shared"]["bias"], 0)])
    wfcp = _place_w((slab_cols, fc_cols),
                    [(_fold_w(params["head_cls"][i]["fc1"]), 0, i * width)
                     for i in range(num_classes)])
    bfcp = _place_b(fc_cols, [(params["head_cls"][i]["fc1"]["bias"], i * width)
                              for i in range(num_classes)])
    wlogp = _place_w((fc_cols, pout),
                     [(params["head_cls"][i]["logits"]["w"], i * width, offs[i])
                      for i in range(num_classes)], dtype=jnp.float32)
    blogp = _place_b(pout, [(params["head_cls"][i]["logits"]["bias"], offs[i])
                            for i in range(num_classes)])

    def gather_feat(slab, lo, hi):
        # TODO(synk): move this gather into kernels B/C (scalar-prefetched idx
        # + per-tile DMA gather) to drop the (M, K, C) HBM round-trip.
        f = slab.reshape(B, N, -1)[:, :, lo:hi]
        return gather_rows(f, idx).reshape(M, K, hi - lo)

    # ---- kernel A: stem + bottleneck-1 in-conv + projection shortcut -------
    slab_a = _launch(_kernel_a(width), [feats], [w1, b1, wcat, bcat],
                     slab_cols, tm=tm, vmem_limit=vmem_limit)

    # ---- kernel B: PosPool(h1) + b1_out(+shortcut, relu) + b2_in -----------
    slab_b = _launch(_kernel_b(width),
                     [gather_feat(slab_a, width, width + mid), w3, slab_a],
                     [woutp, boutp, w2inp, b2inp],
                     slab_cols, tm=tm, vmem_limit=vmem_limit)

    # ---- kernel C: PosPool(h2) + b2_out(+identity, relu) + head ------------
    logits_pad = _launch(_kernel_c(width),
                         [gather_feat(slab_b, width, width + mid), w3, slab_b],
                         [w2outp, b2outp, wheadp, bheadp,
                          wfcp, bfcp, wlogp, blogp],
                         pout, tm=tm, vmem_limit=vmem_limit)

    out = []
    for i in range(num_classes):
        li = logits_pad[:, offs[i]:offs[i] + num_parts[i]]           # (M, P_i)
        out.append(jnp.transpose(li.reshape(B, N, num_parts[i]), (0, 2, 1)))
    return out                                                       # [(B, P_i, N)]


# ----------------------------------------------------------------------------
# main
# ----------------------------------------------------------------------------
if __name__ == "__main__":
    B = 2
    N = 128                      # points per cloud
    INPUT_FEATURES_DIM = 4
    WIDTH = 48                   # divisible by 2; mid=24 divisible by 3
    BOTTLENECK_RATIO = 2
    NSAMPLES = 8
    RADIUS = 0.1
    NUM_CLASSES = 3
    NUM_PARTS = [4, 3, 2]

    key = jax.random.PRNGKey(0)
    k_xyz, k_feat, k_par = jax.random.split(key, 3)

    xyz = jax.random.uniform(k_xyz, (B, N, 3), jnp.float32)
    features = jax.random.normal(k_feat, (B, INPUT_FEATURES_DIM, N), jnp.float32)
    mask = jnp.ones((B, N), jnp.float32).at[1, N - 16:].set(0.0)     # some padding

    params = init_params(k_par, INPUT_FEATURES_DIM, WIDTH, BOTTLENECK_RATIO,
                         NUM_CLASSES, NUM_PARTS)

    fwd = jax.jit(functools.partial(
        multipart_segmentation_forward,
        radius=RADIUS, nsamples=NSAMPLES,
        num_classes=NUM_CLASSES, num_parts=NUM_PARTS))

    logits = fwd(params, xyz, mask, features)
    logits = jax.block_until_ready(logits)

    for i, l in enumerate(logits):
        assert l.shape == (B, NUM_PARTS[i], N), l.shape
        assert bool(jnp.all(jnp.isfinite(l)))
    print("KERNEL_OK")
</pallas_src>

<mosaic_0001>
module attributes {stable_mosaic.version = 11 : i64} {
  func.func @kernel(%arg0: i32, %arg1: memref<64x4xf32, #tpu.memory_space<vmem>>, %arg2: memref<4x24xbf16, #tpu.memory_space<vmem>>, %arg3: memref<1x24xf32, #tpu.memory_space<vmem>>, %arg4: memref<24x128xbf16, #tpu.memory_space<vmem>>, %arg5: memref<1x128xf32, #tpu.memory_space<vmem>>, %arg6: memref<64x128xf32, #tpu.memory_space<vmem>>) attributes {dimension_semantics = [#tpu.dimension_semantics<parallel>], iteration_bounds = array<i64: 4>, scalar_prefetch = 0 : i64, scratch_operands = 0 : i64, tpu.core_type = #tpu.core_type<tc>, window_params = [{transform_indices = @transform_0, window_bounds = array<i64: 64, 4>}, {pipeline_mode = #tpu.pipeline_mode<synchronous>, transform_indices = @transform_1, window_bounds = array<i64: 4, 24>}, {pipeline_mode = #tpu.pipeline_mode<synchronous>, transform_indices = @transform_2, window_bounds = array<i64: 1, 24>}, {pipeline_mode = #tpu.pipeline_mode<synchronous>, transform_indices = @transform_3, window_bounds = array<i64: 24, 128>}, {pipeline_mode = #tpu.pipeline_mode<synchronous>, transform_indices = @transform_4, window_bounds = array<i64: 1, 128>}, {transform_indices = @transform_5, window_bounds = array<i64: 64, 128>}]} {
    %c0 = arith.constant 0 : index
    %c0_0 = arith.constant 0 : index
    %0 = vector.load %arg1[%c0, %c0_0] : memref<64x4xf32, #tpu.memory_space<vmem>>, vector<64x4xf32>
    %1 = arith.truncf %0 : vector<64x4xf32> to vector<64x4xbf16>
    %c0_1 = arith.constant 0 : index
    %c0_2 = arith.constant 0 : index
    %2 = vector.load %arg2[%c0_1, %c0_2] : memref<4x24xbf16, #tpu.memory_space<vmem>>, vector<4x24xbf16>
    %cst = arith.constant dense<0.000000e+00> : vector<64x24xf32>
    %3 = tpu.matmul %1, %2, %cst {dimension_numbers = #tpu.dot_dimension_numbers<[1], [0], [0], [1], [0, 0, 1, 1], [], []>} : vector<64x4xbf16>, vector<4x24xbf16>, vector<64x24xf32> -> vector<64x24xf32>
    %c0_3 = arith.constant 0 : index
    %c0_4 = arith.constant 0 : index
    %4 = vector.load %arg3[%c0_3, %c0_4] : memref<1x24xf32, #tpu.memory_space<vmem>>, vector<1x24xf32>
    %5 = vector.broadcast %4 : vector<1x24xf32> to vector<64x24xf32>
    %6 = arith.addf %3, %5 : vector<64x24xf32>
    %cst_5 = arith.constant 0.000000e+00 : f32
    %7 = vector.broadcast %cst_5 : f32 to vector<64x24xf32>
    %8 = arith.maximumf %6, %7 : vector<64x24xf32>
    %9 = arith.truncf %8 : vector<64x24xf32> to vector<64x24xbf16>
    %c0_6 = arith.constant 0 : index
    %c0_7 = arith.constant 0 : index
    %10 = vector.load %arg4[%c0_6, %c0_7] : memref<24x128xbf16, #tpu.memory_space<vmem>>, vector<24x128xbf16>
    %cst_8 = arith.constant dense<0.000000e+00> : vector<64x128xf32>
    %11 = tpu.matmul %9, %10, %cst_8 {dimension_numbers = #tpu.dot_dimension_numbers<[1], [0], [0], [1], [0, 0, 1, 1], [], []>} : vector<64x24xbf16>, vector<24x128xbf16>, vector<64x128xf32> -> vector<64x128xf32>
    %c0_9 = arith.constant 0 : index
    %c0_10 = arith.constant 0 : index
    %12 = vector.load %arg5[%c0_9, %c0_10] : memref<1x128xf32, #tpu.memory_space<vmem>>, vector<1x128xf32>
    %13 = vector.broadcast %12 : vector<1x128xf32> to vector<64x128xf32>
    %14 = arith.addf %11, %13 : vector<64x128xf32>
    %15 = tpu.iota {dimensions = array<i32: 1>} : vector<64x128xi32>
    %c48_i32 = arith.constant 48 : i32
    %16 = vector.broadcast %c48_i32 : i32 to vector<64x128xi32>
    %17 = arith.cmpi sge, %15, %16 : vector<64x128xi32>
    %cst_11 = arith.constant 0.000000e+00 : f32
    %18 = vector.broadcast %cst_11 : f32 to vector<64x128xf32>
    %19 = arith.maximumf %14, %18 : vector<64x128xf32>
    %20 = arith.select %17, %19, %14 : vector<64x128xi1>, vector<64x128xf32>
    %c0_12 = arith.constant 0 : index
    %c0_13 = arith.constant 0 : index
    %21 = vector.load %arg6[%c0_12, %c0_13] : memref<64x128xf32, #tpu.memory_space<vmem>>, vector<64x128xf32>
    tpu.vector_store %arg6[%c0_12, %c0_13], %20 {strides = array<i32>} : memref<64x128xf32, #tpu.memory_space<vmem>>, vector<64x128xf32>,
    return
  }
  func.func @transform_0(%arg0: i32) -> (i32, i32) {
    %c0_i32 = arith.constant 0 : i32
    %c0_i32_0 = arith.constant 0 : i32
    return %arg0, %c0_i32 : i32, i32
  }
  func.func @transform_1(%arg0: i32) -> (i32, i32) {
    %c0_i32 = arith.constant 0 : i32
    %c0_i32_0 = arith.constant 0 : i32
    %c0_i32_1 = arith.constant 0 : i32
    return %c0_i32, %c0_i32_0 : i32, i32
  }
  func.func @transform_2(%arg0: i32) -> (i32, i32) {
    %c0_i32 = arith.constant 0 : i32
    %c0_i32_0 = arith.constant 0 : i32
    %c0_i32_1 = arith.constant 0 : i32
    return %c0_i32, %c0_i32_0 : i32, i32
  }
  func.func @transform_3(%arg0: i32) -> (i32, i32) {
    %c0_i32 = arith.constant 0 : i32
    %c0_i32_0 = arith.constant 0 : i32
    %c0_i32_1 = arith.constant 0 : i32
    return %c0_i32, %c0_i32_0 : i32, i32
  }
  func.func @transform_4(%arg0: i32) -> (i32, i32) {
    %c0_i32 = arith.constant 0 : i32
    %c0_i32_0 = arith.constant 0 : i32
    %c0_i32_1 = arith.constant 0 : i32
    return %c0_i32, %c0_i32_0 : i32, i32
  }
  func.func @transform_5(%arg0: i32) -> (i32, i32) {
    %c0_i32 = arith.constant 0 : i32
    %c0_i32_0 = arith.constant 0 : i32
    return %arg0, %c0_i32 : i32, i32
  }
}

module attributes {stable_mosaic.version = 11 : i64} {
  func.func @kernel(%arg0: i32, %arg1: memref<64x8x24xf32, #tpu.memory_space<vmem>>, %arg2: memref<64x8x24xf32, #tpu.memory_space<vmem>>, %arg3: memref<64x128xf32, #tpu.memory_space<vmem>>, %arg4: memref<24x128xbf16, #tpu.memory_space<vmem>>, %arg5: memref<1x128xf32, #tpu.memory_space<vmem>>, %arg6: memref<128x128xbf16, #tpu.memory_space<vmem>>, %arg7: memref<1x128xf32, #tpu.memory_space<vmem>>, %arg8: memref<64x128xf32, #tpu.memory_space<vmem>>) attributes {dimension_semantics = [#tpu.dimension_semantics<parallel>], iteration_bounds = array<i64: 4>, scalar_prefetch = 0 : i64, scratch_operands = 0 : i64, tpu.core_type = #tpu.core_type<tc>, window_params = [{transform_indices = @transform_0, window_bounds = array<i64: 64, 8, 24>}, {transform_indices = @transform_1, window_bounds = array<i64: 64, 8, 24>}, {transform_indices = @transform_2, window_bounds = array<i64: 64, 128>}, {pipeline_mode = #tpu.pipeline_mode<synchronous>, transform_indices = @transform_3, window_bounds = array<i64: 24, 128>}, {pipeline_mode = #tpu.pipeline_mode<synchronous>, transform_indices = @transform_4, window_bounds = array<i64: 1, 128>}, {pipeline_mode = #tpu.pipeline_mode<synchronous>, transform_indices = @transform_5, window_bounds = array<i64: 128, 128>}, {pipeline_mode = #tpu.pipeline_mode<synchronous>, transform_indices = @transform_6, window_bounds = array<i64: 1, 128>}, {transform_indices = @transform_7, window_bounds = array<i64: 64, 128>}]} {
    %c0 = arith.constant 0 : index
    %c0_0 = arith.constant 0 : index
    %c0_1 = arith.constant 0 : index
    %0 = vector.load %arg1[%c0, %c0_0, %c0_1] : memref<64x8x24xf32, #tpu.memory_space<vmem>>, vector<64x8x24xf32>
    %c0_2 = arith.constant 0 : index
    %c0_3 = arith.constant 0 : index
    %c0_4 = arith.constant 0 : index
    %1 = vector.load %arg2[%c0_2, %c0_3, %c0_4] : memref<64x8x24xf32, #tpu.memory_space<vmem>>, vector<64x8x24xf32>
    %2 = arith.mulf %0, %1 : vector<64x8x24xf32>
    %cst = arith.constant dense<0.000000e+00> : vector<64x24xf32>
    %3 = vector.multi_reduction <add>, %2, %cst [1] : vector<64x8x24xf32> to vector<64x24xf32>
    %4 = arith.truncf %3 : vector<64x24xf32> to vector<64x24xbf16>
    %c0_5 = arith.constant 0 : index
    %c0_6 = arith.constant 0 : index
    %5 = vector.load %arg4[%c0_5, %c0_6] : memref<24x128xbf16, #tpu.memory_space<vmem>>, vector<24x128xbf16>
    %cst_7 = arith.constant dense<0.000000e+00> : vector<64x128xf32>
    %6 = tpu.matmul %4, %5, %cst_7 {dimension_numbers = #tpu.dot_dimension_numbers<[1], [0], [0], [1], [0, 0, 1, 1], [], []>} : vector<64x24xbf16>, vector<24x128xbf16>, vector<64x128xf32> -> vector<64x128xf32>
    %c0_8 = arith.constant 0 : index
    %c0_9 = arith.constant 0 : index
    %7 = vector.load %arg5[%c0_8, %c0_9] : memref<1x128xf32, #tpu.memory_space<vmem>>, vector<1x128xf32>
    %8 = vector.broadcast %7 : vector<1x128xf32> to vector<64x128xf32>
    %9 = arith.addf %6, %8 : vector<64x128xf32>
    %10 = tpu.iota {dimensions = array<i32: 1>} : vector<64x128xi32>
    %c48_i32 = arith.constant 48 : i32
    %11 = vector.broadcast %c48_i32 : i32 to vector<64x128xi32>
    %12 = arith.cmpi slt, %10, %11 : vector<64x128xi32>
    %c0_10 = arith.constant 0 : index
    %c0_11 = arith.constant 0 : index
    %13 = vector.load %arg3[%c0_10, %c0_11] : memref<64x128xf32, #tpu.memory_space<vmem>>, vector<64x128xf32>
    %cst_12 = arith.constant 0.000000e+00 : f32
    %14 = vector.broadcast %cst_12 : f32 to vector<64x128xf32>
    %15 = arith.select %12, %13, %14 : vector<64x128xi1>, vector<64x128xf32>
    %16 = arith.addf %9, %15 : vector<64x128xf32>
    %cst_13 = arith.constant 0.000000e+00 : f32
    %17 = vector.broadcast %cst_13 : f32 to vector<64x128xf32>
    %18 = arith.maximumf %16, %17 : vector<64x128xf32>
    %19 = arith.truncf %18 : vector<64x128xf32> to vector<64x128xbf16>
    %c0_14 = arith.constant 0 : index
    %c0_15 = arith.constant 0 : index
    %20 = vector.load %arg6[%c0_14, %c0_15] : memref<128x128xbf16, #tpu.memory_space<vmem>>, vector<128x128xbf16>
    %cst_16 = arith.constant dense<0.000000e+00> : vector<64x128xf32>
    %21 = tpu.matmul %19, %20, %cst_16 {dimension_numbers = #tpu.dot_dimension_numbers<[1], [0], [0], [1], [0, 0, 1, 1], [], []>} : vector<64x128xbf16>, vector<128x128xbf16>, vector<64x128xf32> -> vector<64x128xf32>
    %c0_17 = arith.constant 0 : index
    %c0_18 = arith.constant 0 : index
    %22 = vector.load %arg7[%c0_17, %c0_18] : memref<1x128xf32, #tpu.memory_space<vmem>>, vector<1x128xf32>
    %23 = vector.broadcast %22 : vector<1x128xf32> to vector<64x128xf32>
    %24 = arith.addf %21, %23 : vector<64x128xf32>
    %cst_19 = arith.constant 0.000000e+00 : f32
    %25 = vector.broadcast %cst_19 : f32 to vector<64x128xf32>
    %26 = arith.maximumf %24, %25 : vector<64x128xf32>
    %27 = arith.addf %18, %26 : vector<64x128xf32>
    %c0_20 = arith.constant 0 : index
    %c0_21 = arith.constant 0 : index
    %28 = vector.load %arg8[%c0_20, %c0_21] : memref<64x128xf32, #tpu.memory_space<vmem>>, vector<64x128xf32>
    tpu.vector_store %arg8[%c0_20, %c0_21], %27 {strides = array<i32>} : memref<64x128xf32, #tpu.memory_space<vmem>>, vector<64x128xf32>,
    return
  }
  func.func @transform_0(%arg0: i32) -> (i32, i32, i32) {
    %c0_i32 = arith.constant 0 : i32
    %c0_i32_0 = arith.constant 0 : i32
    %c0_i32_1 = arith.constant 0 : i32
    return %arg0, %c0_i32, %c0_i32_0 : i32, i32, i32
  }
  func.func @transform_1(%arg0: i32) -> (i32, i32, i32) {
    %c0_i32 = arith.constant 0 : i32
    %c0_i32_0 = arith.constant 0 : i32
    %c0_i32_1 = arith.constant 0 : i32
    return %arg0, %c0_i32, %c0_i32_0 : i32, i32, i32
  }
  func.func @transform_2(%arg0: i32) -> (i32, i32) {
    %c0_i32 = arith.constant 0 : i32
    %c0_i32_0 = arith.constant 0 : i32
    return %arg0, %c0_i32 : i32, i32
  }
  func.func @transform_3(%arg0: i32) -> (i32, i32) {
    %c0_i32 = arith.constant 0 : i32
    %c0_i32_0 = arith.constant 0 : i32
    %c0_i32_1 = arith.constant 0 : i32
    return %c0_i32, %c0_i32_0 : i32, i32
  }
  func.func @transform_4(%arg0: i32) -> (i32, i32) {
    %c0_i32 = arith.constant 0 : i32
    %c0_i32_0 = arith.constant 0 : i32
    %c0_i32_1 = arith.constant 0 : i32
    return %c0_i32, %c0_i32_0 : i32, i32
  }
  func.func @transform_5(%arg0: i32) -> (i32, i32) {
    %c0_i32 = arith.constant 0 : i32
    %c0_i32_0 = arith.constant 0 : i32
    %c0_i32_1 = arith.constant 0 : i32
    return %c0_i32, %c0_i32_0 : i32, i32
  }
  func.func @transform_6(%arg0: i32) -> (i32, i32) {
    %c0_i32 = arith.constant 0 : i32
    %c0_i32_0 = arith.constant 0 : i32
    %c0_i32_1 = arith.constant 0 : i32
    return %c0_i32, %c0_i32_0 : i32, i32
  }
  func.func @transform_7(%arg0: i32) -> (i32, i32) {
    %c0_i32 = arith.constant 0 : i32
    %c0_i32_0 = arith.constant 0 : i32
    return %arg0, %c0_i32 : i32, i32
  }
}

module attributes {stable_mosaic.version = 11 : i64} {
  func.func @kernel(%arg0: i32, %arg1: memref<64x8x24xf32, #tpu.memory_space<vmem>>, %arg2: memref<64x8x24xf32, #tpu.memory_space<vmem>>, %arg3: memref<64x128xf32, #tpu.memory_space<vmem>>, %arg4: memref<24x128xbf16, #tpu.memory_space<vmem>>, %arg5: memref<1x128xf32, #tpu.memory_space<vmem>>, %arg6: memref<128x128xbf16, #tpu.memory_space<vmem>>, %arg7: memref<1x128xf32, #tpu.memory_space<vmem>>, %arg8: memref<128x256xbf16, #tpu.memory_space<vmem>>, %arg9: memref<1x256xf32, #tpu.memory_space<vmem>>, %arg10: memref<256x128xf32, #tpu.memory_space<vmem>>, %arg11: memref<1x128xf32, #tpu.memory_space<vmem>>, %arg12: memref<64x128xf32, #tpu.memory_space<vmem>>) attributes {dimension_semantics = [#tpu.dimension_semantics<parallel>], iteration_bounds = array<i64: 4>, scalar_prefetch = 0 : i64, scratch_operands = 0 : i64, tpu.core_type = #tpu.core_type<tc>, window_params = [{transform_indices = @transform_0, window_bounds = array<i64: 64, 8, 24>}, {transform_indices = @transform_1, window_bounds = array<i64: 64, 8, 24>}, {transform_indices = @transform_2, window_bounds = array<i64: 64, 128>}, {pipeline_mode = #tpu.pipeline_mode<synchronous>, transform_indices = @transform_3, window_bounds = array<i64: 24, 128>}, {pipeline_mode = #tpu.pipeline_mode<synchronous>, transform_indices = @transform_4, window_bounds = array<i64: 1, 128>}, {pipeline_mode = #tpu.pipeline_mode<synchronous>, transform_indices = @transform_5, window_bounds = array<i64: 128, 128>}, {pipeline_mode = #tpu.pipeline_mode<synchronous>, transform_indices = @transform_6, window_bounds = array<i64: 1, 128>}, {pipeline_mode = #tpu.pipeline_mode<synchronous>, transform_indices = @transform_7, window_bounds = array<i64: 128, 256>}, {pipeline_mode = #tpu.pipeline_mode<synchronous>, transform_indices = @transform_8, window_bounds = array<i64: 1, 256>}, {pipeline_mode = #tpu.pipeline_mode<synchronous>, transform_indices = @transform_9, window_bounds = array<i64: 256, 128>}, {pipeline_mode = #tpu.pipeline_mode<synchronous>, transform_indices = @transform_10, window_bounds = array<i64: 1, 128>}, {transform_indices = @transform_11, window_bounds = array<i64: 64, 128>}]} {
    %c0 = arith.constant 0 : index
    %c0_0 = arith.constant 0 : index
    %c0_1 = arith.constant 0 : index
    %0 = vector.load %arg1[%c0, %c0_0, %c0_1] : memref<64x8x24xf32, #tpu.memory_space<vmem>>, vector<64x8x24xf32>
    %c0_2 = arith.constant 0 : index
    %c0_3 = arith.constant 0 : index
    %c0_4 = arith.constant 0 : index
    %1 = vector.load %arg2[%c0_2, %c0_3, %c0_4] : memref<64x8x24xf32, #tpu.memory_space<vmem>>, vector<64x8x24xf32>
    %2 = arith.mulf %0, %1 : vector<64x8x24xf32>
    %cst = arith.constant dense<0.000000e+00> : vector<64x24xf32>
    %3 = vector.multi_reduction <add>, %2, %cst [1] : vector<64x8x24xf32> to vector<64x24xf32>
    %4 = arith.truncf %3 : vector<64x24xf32> to vector<64x24xbf16>
    %c0_5 = arith.constant 0 : index
    %c0_6 = arith.constant 0 : index
    %5 = vector.load %arg4[%c0_5, %c0_6] : memref<24x128xbf16, #tpu.memory_space<vmem>>, vector<24x128xbf16>
    %cst_7 = arith.constant dense<0.000000e+00> : vector<64x128xf32>
    %6 = tpu.matmul %4, %5, %cst_7 {dimension_numbers = #tpu.dot_dimension_numbers<[1], [0], [0], [1], [0, 0, 1, 1], [], []>} : vector<64x24xbf16>, vector<24x128xbf16>, vector<64x128xf32> -> vector<64x128xf32>
    %c0_8 = arith.constant 0 : index
    %c0_9 = arith.constant 0 : index
    %7 = vector.load %arg5[%c0_8, %c0_9] : memref<1x128xf32, #tpu.memory_space<vmem>>, vector<1x128xf32>
    %8 = vector.broadcast %7 : vector<1x128xf32> to vector<64x128xf32>
    %9 = arith.addf %6, %8 : vector<64x128xf32>
    %10 = tpu.iota {dimensions = array<i32: 1>} : vector<64x128xi32>
    %c48_i32 = arith.constant 48 : i32
    %11 = vector.broadcast %c48_i32 : i32 to vector<64x128xi32>
    %12 = arith.cmpi slt, %10, %11 : vector<64x128xi32>
    %c0_10 = arith.constant 0 : index
    %c0_11 = arith.constant 0 : index
    %13 = vector.load %arg3[%c0_10, %c0_11] : memref<64x128xf32, #tpu.memory_space<vmem>>, vector<64x128xf32>
    %cst_12 = arith.constant 0.000000e+00 : f32
    %14 = vector.broadcast %cst_12 : f32 to vector<64x128xf32>
    %15 = arith.select %12, %13, %14 : vector<64x128xi1>, vector<64x128xf32>
    %16 = arith.addf %9, %15 : vector<64x128xf32>
    %cst_13 = arith.constant 0.000000e+00 : f32
    %17 = vector.broadcast %cst_13 : f32 to vector<64x128xf32>
    %18 = arith.maximumf %16, %17 : vector<64x128xf32>
    %19 = arith.truncf %18 : vector<64x128xf32> to vector<64x128xbf16>
    %c0_14 = arith.constant 0 : index
    %c0_15 = arith.constant 0 : index
    %20 = vector.load %arg6[%c0_14, %c0_15] : memref<128x128xbf16, #tpu.memory_space<vmem>>, vector<128x128xbf16>
    %cst_16 = arith.constant dense<0.000000e+00> : vector<64x128xf32>
    %21 = tpu.matmul %19, %20, %cst_16 {dimension_numbers = #tpu.dot_dimension_numbers<[1], [0], [0], [1], [0, 0, 1, 1], [], []>} : vector<64x128xbf16>, vector<128x128xbf16>, vector<64x128xf32> -> vector<64x128xf32>
    %c0_17 = arith.constant 0 : index
    %c0_18 = arith.constant 0 : index
    %22 = vector.load %arg7[%c0_17, %c0_18] : memref<1x128xf32, #tpu.memory_space<vmem>>, vector<1x128xf32>
    %23 = vector.broadcast %22 : vector<1x128xf32> to vector<64x128xf32>
    %24 = arith.addf %21, %23 : vector<64x128xf32>
    %cst_19 = arith.constant 0.000000e+00 : f32
    %25 = vector.broadcast %cst_19 : f32 to vector<64x128xf32>
    %26 = arith.maximumf %24, %25 : vector<64x128xf32>
    %27 = arith.truncf %26 : vector<64x128xf32> to vector<64x128xbf16>
    %c0_20 = arith.constant 0 : index
    %c0_21 = arith.constant 0 : index
    %28 = vector.load %arg8[%c0_20, %c0_21] : memref<128x256xbf16, #tpu.memory_space<vmem>>, vector<128x256xbf16>
    %cst_22 = arith.constant dense<0.000000e+00> : vector<64x256xf32>
    %29 = tpu.matmul %27, %28, %cst_22 {dimension_numbers = #tpu.dot_dimension_numbers<[1], [0], [0], [1], [0, 0, 1, 1], [], []>} : vector<64x128xbf16>, vector<128x256xbf16>, vector<64x256xf32> -> vector<64x256xf32>
    %c0_23 = arith.constant 0 : index
    %c0_24 = arith.constant 0 : index
    %30 = vector.load %arg9[%c0_23, %c0_24] : memref<1x256xf32, #tpu.memory_space<vmem>>, vector<1x256xf32>
    %31 = vector.broadcast %30 : vector<1x256xf32> to vector<64x256xf32>
    %32 = arith.addf %29, %31 : vector<64x256xf32>
    %cst_25 = arith.constant 0.000000e+00 : f32
    %33 = vector.broadcast %cst_25 : f32 to vector<64x256xf32>
    %34 = arith.maximumf %32, %33 : vector<64x256xf32>
    %c0_26 = arith.constant 0 : index
    %c0_27 = arith.constant 0 : index
    %35 = vector.load %arg10[%c0_26, %c0_27] : memref<256x128xf32, #tpu.memory_space<vmem>>, vector<256x128xf32>
    %cst_28 = arith.constant dense<0.000000e+00> : vector<64x128xf32>
    %36 = tpu.matmul %34, %35, %cst_28 {dimension_numbers = #tpu.dot_dimension_numbers<[1], [0], [0], [1], [0, 0, 1, 1], [], []>} : vector<64x256xf32>, vector<256x128xf32>, vector<64x128xf32> -> vector<64x128xf32>
    %c0_29 = arith.constant 0 : index
    %c0_30 = arith.constant 0 : index
    %37 = vector.load %arg11[%c0_29, %c0_30] : memref<1x128xf32, #tpu.memory_space<vmem>>, vector<1x128xf32>
    %38 = vector.broadcast %37 : vector<1x128xf32> to vector<64x128xf32>
    %39 = arith.addf %36, %38 : vector<64x128xf32>
    %c0_31 = arith.constant 0 : index
    %c0_32 = arith.constant 0 : index
    %40 = vector.load %arg12[%c0_31, %c0_32] : memref<64x128xf32, #tpu.memory_space<vmem>>, vector<64x128xf32>
    tpu.vector_store %arg12[%c0_31, %c0_32], %39 {strides = array<i32>} : memref<64x128xf32, #tpu.memory_space<vmem>>, vector<64x128xf32>,
    return
  }
  func.func @transform_0(%arg0: i32) -> (i32, i32, i32) {
    %c0_i32 = arith.constant 0 : i32
    %c0_i32_0 = arith.constant 0 : i32
    %c0_i32_1 = arith.constant 0 : i32
    return %arg0, %c0_i32, %c0_i32_0 : i32, i32, i32
  }
  func.func @transform_1(%arg0: i32) -> (i32, i32, i32) {
    %c0_i32 = arith.constant 0 : i32
    %c0_i32_0 = arith.constant 0 : i32
    %c0_i32_1 = arith.constant 0 : i32
    return %arg0, %c0_i32, %c0_i32_0 : i32, i32, i32
  }
  func.func @transform_2(%arg0: i32) -> (i32, i32) {
    %c0_i32 = arith.constant 0 : i32
    %c0_i32_0 = arith.constant 0 : i32
    return %arg0, %c0_i32 : i32, i32
  }
  func.func @transform_3(%arg0: i32) -> (i32, i32) {
    %c0_i32 = arith.constant 0 : i32
    %c0_i32_0 = arith.constant 0 : i32
    %c0_i32_1 = arith.constant 0 : i32
    return %c0_i32, %c0_i32_0 : i32, i32
  }
  func.func @transform_4(%arg0: i32) -> (i32, i32) {
    %c0_i32 = arith.constant 0 : i32
    %c0_i32_0 = arith.constant 0 : i32
    %c0_i32_1 = arith.constant 0 : i32
    return %c0_i32, %c0_i32_0 : i32, i32
  }
  func.func @transform_5(%arg0: i32) -> (i32, i32) {
    %c0_i32 = arith.constant 0 : i32
    %c0_i32_0 = arith.constant 0 : i32
    %c0_i32_1 = arith.constant 0 : i32
    return %c0_i32, %c0_i32_0 : i32, i32
  }
  func.func @transform_6(%arg0: i32) -> (i32, i32) {
    %c0_i32 = arith.constant 0 : i32
    %c0_i32_0 = arith.constant 0 : i32
    %c0_i32_1 = arith.constant 0 : i32
    return %c0_i32, %c0_i32_0 : i32, i32
  }
  func.func @transform_7(%arg0: i32) -> (i32, i32) {
    %c0_i32 = arith.constant 0 : i32
    %c0_i32_0 = arith.constant 0 : i32
    %c0_i32_1 = arith.constant 0 : i32
    return %c0_i32, %c0_i32_0 : i32, i32
  }
  func.func @transform_8(%arg0: i32) -> (i32, i32) {
    %c0_i32 = arith.constant 0 : i32
    %c0_i32_0 = arith.constant 0 : i32
    %c0_i32_1 = arith.constant 0 : i32
    return %c0_i32, %c0_i32_0 : i32, i32
  }
  func.func @transform_9(%arg0: i32) -> (i32, i32) {
    %c0_i32 = arith.constant 0 : i32
    %c0_i32_0 = arith.constant 0 : i32
    %c0_i32_1 = arith.constant 0 : i32
    return %c0_i32, %c0_i32_0 : i32, i32
  }
  func.func @transform_10(%arg0: i32) -> (i32, i32) {
    %c0_i32 = arith.constant 0 : i32
    %c0_i32_0 = arith.constant 0 : i32
    %c0_i32_1 = arith.constant 0 : i32
    return %c0_i32, %c0_i32_0 : i32, i32
  }
  func.func @transform_11(%arg0: i32) -> (i32, i32) {
    %c0_i32 = arith.constant 0 : i32
    %c0_i32_0 = arith.constant 0 : i32
    return %arg0, %c0_i32 : i32, i32
  }
}

</mosaic_0001>

<llo_original>
// kernel: multipart_segmentation_forward.3
$region0: #{multipart_segmentation_forward.3}
  #allocation0 [shape = 'u32[]', space=smem, size = 0x4, offset = 0x4, fixed_abs, tag = 'smem constant byte address 0x4 - core index']
  #allocation1 [shape = 'u32[72,128]{1,0:T(1,128)}', space=vmem, size = 0x9000, scoped, tag = 'internal scratch']
  %s0 = inlined_call_operand.vmem [shape: f32[256,4], index: 0, kind: input, shape index: {}]
  %s1 = inlined_call_operand.vmem [shape: bf16[4,24], index: 1, kind: input, shape index: {}]
  %s2 = inlined_call_operand.vmem [shape: f32[1,24], index: 2, kind: input, shape index: {}]
  %s3 = inlined_call_operand.vmem [shape: bf16[24,128], index: 3, kind: input, shape index: {}]
  %s4 = inlined_call_operand.vmem [shape: f32[1,128], index: 4, kind: input, shape index: {}]
  %s5 = inlined_call_operand.vmem [shape: f32[256,128], index: 5, kind: output, shape index: {}]
  %s6 = sld [smem:[#allocation0]]
  $region53: #{multipart_segmentation_forward.3} parent=0
    _
  %s8 = ssub.s32 1, %s6
  %s9 = scalar_select 0, %s8, %s6
  loop: start=0, step=1, limit=6
  $region2: #{multipart_segmentation_forward.3} parent=0 // loop_pre_header
    _
  $region3: #{multipart_segmentation_forward.3} parent=0 // loop_header
    %s11 = sphi 0, %s15
    %p12 = scmp.ge.s32.totalorder %s11, 6
    %s21 = sphi 0, %s23
    %s24 = sphi 0, %s21
    %s25 = sphi 0, %s24
    %s41 = sphi 0, %s25
    %s45 = sphi 0, %s45
    %s47 = sphi 0, %s45
    %s48 = sphi 0, %s47
    %s62 = sphi 0, %s48
    %s66 = sphi 0, %s66
    %s68 = sphi 0, %s66
    %s69 = sphi 0, %s68
    %s83 = sphi 0, %s69
    %s87 = sphi 0, %s87
    %s89 = sphi 0, %s87
    %s90 = sphi 0, %s89
    %s104 = sphi 0, %s90
    %s108 = sphi 0, %s108
    %s110 = sphi 0, %s108
    %s111 = sphi 0, %s110
    %s125 = sphi 0, %s111
    %s131 = sphi 0, %s133
    %s134 = sphi 0, %s131
    %s135 = sphi 0, %s134
    %s151 = sphi 0, %s135
  $region4: #{multipart_segmentation_forward.3} parent=0 // loop_header_branch
    %14 = sbr.rel (%p12) target = $region8
  $region5: #{multipart_segmentation_forward.3} parent=0 // loop_body
    %s16 = ssub.s32 %s11, 1
    %s17 = ssub.s32 %s11, 2
    %s18 = sadd.s32 %s11, 1
    %s19 = ssub.s32 %s11, %s18
    %p20 = scmp.eq.s32.totalorder %s19, 0
    %s22 = sadd.s32 %s21, 1
    %s23 = scalar_select %p20, %s21, %s22
    %p26 = pneg %p20
    %p27 = scmp.eq.s32.totalorder %s11, 3
    %p28 = por %p26, %p27
    %p29 = scmp.ne.s32.totalorder %s21, %s24
    %p30 = scmp.eq.s32.totalorder %s11, 0
    %p31 = por %p29, %p30
    %p32 = scmp.ne.s32.totalorder %s21, %s24
    %p33 = scmp.eq.s32.totalorder %s16, 3
    %p34 = por %p32, %p33
    %p35 = scmp.ne.s32.totalorder %s24, %s25
    %p36 = scmp.eq.s32.totalorder %s16, 0
    %p37 = por %p35, %p36
    %p38 = scmp.ne.s32.totalorder %s24, %s25
    %p39 = scmp.eq.s32.totalorder %s17, 3
    %p40 = por %p38, %p39
    %p42 = scmp.ne.s32.totalorder %s25, %s41
    %p43 = scmp.eq.s32.totalorder %s17, 0
    %p44 = por %p42, %p43
    %s46 = sadd.s32 %s45, 1
    %p49 = scmp.eq.s32.totalorder %s11, 3
    %p50 = scmp.ne.s32.totalorder %s45, %s47
    %p51 = scmp.eq.s32.totalorder %s11, 0
    %p52 = por %p50, %p51
    %p53 = scmp.ne.s32.totalorder %s45, %s47
    %p54 = scmp.eq.s32.totalorder %s16, 3
    %p55 = por %p53, %p54
    %p56 = scmp.ne.s32.totalorder %s47, %s48
    %p57 = scmp.eq.s32.totalorder %s16, 0
    %p58 = por %p56, %p57
    %p59 = scmp.ne.s32.totalorder %s47, %s48
    %p60 = scmp.eq.s32.totalorder %s17, 3
    %p61 = por %p59, %p60
    %p63 = scmp.ne.s32.totalorder %s48, %s62
    %p64 = scmp.eq.s32.totalorder %s17, 0
    %p65 = por %p63, %p64
    %s67 = sadd.s32 %s66, 1
    %p70 = scmp.eq.s32.totalorder %s11, 3
    %p71 = scmp.ne.s32.totalorder %s66, %s68
    %p72 = scmp.eq.s32.totalorder %s11, 0
    %p73 = por %p71, %p72
    %p74 = scmp.ne.s32.totalorder %s66, %s68
    %p75 = scmp.eq.s32.totalorder %s16, 3
    %p76 = por %p74, %p75
    %p77 = scmp.ne.s32.totalorder %s68, %s69
    %p78 = scmp.eq.s32.totalorder %s16, 0
    %p79 = por %p77, %p78
    %p80 = scmp.ne.s32.totalorder %s68, %s69
    %p81 = scmp.eq.s32.totalorder %s17, 3
    %p82 = por %p80, %p81
    %p84 = scmp.ne.s32.totalorder %s69, %s83
    %p85 = scmp.eq.s32.totalorder %s17, 0
    %p86 = por %p84, %p85
    %s88 = sadd.s32 %s87, 1
    %p91 = scmp.eq.s32.totalorder %s11, 3
    %p92 = scmp.ne.s32.totalorder %s87, %s89
    %p93 = scmp.eq.s32.totalorder %s11, 0
    %p94 = por %p92, %p93
    %p95 = scmp.ne.s32.totalorder %s87, %s89
    %p96 = scmp.eq.s32.totalorder %s16, 3
    %p97 = por %p95, %p96
    %p98 = scmp.ne.s32.totalorder %s89, %s90
    %p99 = scmp.eq.s32.totalorder %s16, 0
    %p100 = por %p98, %p99
    %p101 = scmp.ne.s32.totalorder %s89, %s90
    %p102 = scmp.eq.s32.totalorder %s17, 3
    %p103 = por %p101, %p102
    %p105 = scmp.ne.s32.totalorder %s90, %s104
    %p106 = scmp.eq.s32.totalorder %s17, 0
    %p107 = por %p105, %p106
    %s109 = sadd.s32 %s108, 1
    %p112 = scmp.eq.s32.totalorder %s11, 3
    %p113 = scmp.ne.s32.totalorder %s108, %s110
    %p114 = scmp.eq.s32.totalorder %s11, 0
    %p115 = por %p113, %p114
    %p116 = scmp.ne.s32.totalorder %s108, %s110
    %p117 = scmp.eq.s32.totalorder %s16, 3
    %p118 = por %p116, %p117
    %p119 = scmp.ne.s32.totalorder %s110, %s111
    %p120 = scmp.eq.s32.totalorder %s16, 0
    %p121 = por %p119, %p120
    %p122 = scmp.ne.s32.totalorder %s110, %s111
    %p123 = scmp.eq.s32.totalorder %s17, 3
    %p124 = por %p122, %p123
    %p126 = scmp.ne.s32.totalorder %s111, %s125
    %p127 = scmp.eq.s32.totalorder %s17, 0
    %p128 = por %p126, %p127
    %s129 = ssub.s32 %s11, %s18
    %p130 = scmp.eq.s32.totalorder %s129, 0
    %s132 = sadd.s32 %s131, 1
    %s133 = scalar_select %p130, %s131, %s132
    %p136 = pneg %p130
    %p137 = scmp.eq.s32.totalorder %s11, 3
    %p138 = por %p136, %p137
    %p139 = scmp.ne.s32.totalorder %s131, %s134
    %p140 = scmp.eq.s32.totalorder %s11, 0
    %p141 = por %p139, %p140
    %p142 = scmp.ne.s32.totalorder %s131, %s134
    %p143 = scmp.eq.s32.totalorder %s16, 3
    %p144 = por %p142, %p143
    %p145 = scmp.ne.s32.totalorder %s134, %s135
    %p146 = scmp.eq.s32.totalorder %s16, 0
    %p147 = por %p145, %p146
    %p148 = scmp.ne.s32.totalorder %s134, %s135
    %p149 = scmp.eq.s32.totalorder %s17, 3
    %p150 = por %p148, %p149
    %p152 = scmp.ne.s32.totalorder %s135, %s151
    %p153 = scmp.eq.s32.totalorder %s17, 0
    %p154 = por %p152, %p153
    %p155 = scmp.le.s32.totalorder 1, %s11
    %p156 = scmp.lt.s32.totalorder %s11, 5
    %p157 = pnand %p155, %p156
    %p158 = pneg %p157
    // Predicated region
    $region9: #{multipart_segmentation_forward.3} parent=5 // pred_check
      _
    $region10: #{multipart_segmentation_forward.3} parent=5 // pred_check_branch
      %160 = sbr.rel (%p157) target = $region12
    $region11: #{multipart_segmentation_forward.3} parent=5 // pred_region
      %s161 = ssub.s32 %s11, 1
      // Predicated region
      $region13: #{multipart_segmentation_forward.3} parent=11 // pred_check
        %p162 = pneg %p58
      $region14: #{multipart_segmentation_forward.3} parent=11 // pred_check_branch
        %164 = sbr.rel (%p162) target = $region16
      $region15: #{multipart_segmentation_forward.3} parent=11 // pred_region
        _
      $region16: #{multipart_segmentation_forward.3} parent=11 // pred_fallthru
        _
      // Predicated region
      $region17: #{multipart_segmentation_forward.3} parent=11 // pred_check
        %p165 = pneg %p79
      $region18: #{multipart_segmentation_forward.3} parent=11 // pred_check_branch
        %167 = sbr.rel (%p165) target = $region20
      $region19: #{multipart_segmentation_forward.3} parent=11 // pred_region
        _
      $region20: #{multipart_segmentation_forward.3} parent=11 // pred_fallthru
        _
      // Predicated region
      $region21: #{multipart_segmentation_forward.3} parent=11 // pred_check
        %p168 = pneg %p100
      $region22: #{multipart_segmentation_forward.3} parent=11 // pred_check_branch
        %170 = sbr.rel (%p168) target = $region24
      $region23: #{multipart_segmentation_forward.3} parent=11 // pred_region
        _
      $region24: #{multipart_segmentation_forward.3} parent=11 // pred_fallthru
        _
      // Predicated region
      $region25: #{multipart_segmentation_forward.3} parent=11 // pred_check
        %p171 = pneg %p121
      $region26: #{multipart_segmentation_forward.3} parent=11 // pred_check_branch
        %173 = sbr.rel (%p171) target = $region28
      $region27: #{multipart_segmentation_forward.3} parent=11 // pred_region
        _
      $region28: #{multipart_segmentation_forward.3} parent=11 // pred_fallthru
        _
    $region12: #{multipart_segmentation_forward.3} parent=5 // pred_fallthru
      _
    %p174 = scmp.lt.s32.totalorder %s11, 4
    // Predicated region
    $region29: #{multipart_segmentation_forward.3} parent=5 // pred_check
      %p175 = pneg %p174
    $region30: #{multipart_segmentation_forward.3} parent=5 // pred_check_branch
      %177 = sbr.rel (%p175) target = $region32
    $region31: #{multipart_segmentation_forward.3} parent=5 // pred_region
      // Predicated region
      $region33: #{multipart_segmentation_forward.3} parent=31 // pred_check
        %p178 = pneg %p31
      $region34: #{multipart_segmentation_forward.3} parent=31 // pred_check_branch
        %180 = sbr.rel (%p178) target = $region36
      $region35: #{multipart_segmentation_forward.3} parent=31 // pred_region
        %s181 = smul.u32 8, %s11
        %p182 = scmp.lt.s32.totalorder %s181, 31
        %s183 = scalar_select %p182, %s181, 31
        %s184 = smul.addr %s183, 8
        %s185 = scalar_lea.vmem %s0, %s184
        %s186 = smul.u32 8, %s11
      $region36: #{multipart_segmentation_forward.3} parent=31 // pred_fallthru
        _
    $region32: #{multipart_segmentation_forward.3} parent=5 // pred_fallthru
      _
    %p187 = scmp.le.s32.totalorder 1, %s11
    %p188 = scmp.lt.s32.totalorder %s11, 5
    %p189 = pnand %p187, %p188
    %p190 = pneg %p189
    // Predicated region
    $region37: #{multipart_segmentation_forward.3} parent=5 // pred_check
      _
    $region38: #{multipart_segmentation_forward.3} parent=5 // pred_check_branch
      %192 = sbr.rel (%p189) target = $region40
    $region39: #{multipart_segmentation_forward.3} parent=5 // pred_region
      %s193 = ssub.s32 %s11, 1
      %s194 = smul.u32 8, %s16
      %p195 = scmp.lt.s32.totalorder %s194, 31
      %s196 = scalar_select %p195, %s194, 31
      %s197 = smul.addr %s196, 8
      %s198 = scalar_lea.vmem %s0, %s197
      %p199 = pneg %p37
      %p200 = pneg %p34
      %p201 = pneg %p58
      %p202 = pneg %p55
      %p203 = pneg %p79
      %p204 = pneg %p76
      %p205 = pneg %p100
      %p206 = pneg %p97
      %p207 = pneg %p121
      %p208 = pneg %p118
      %p209 = pneg %p147
      %p210 = pneg %p144
      %s211 = smul.u32 8, %s16
      %p212 = scmp.lt.s32.totalorder %s211, 31
      %s213 = scalar_select %p212, %s211, 31
      %s214 = smul.addr %s213, 8
      %s215 = scalar_lea.vmem %s5, %s214
      %s216 = smul.u32 8, %s16
      %p217 = scmp.lt.s32.totalorder %s216, 31
      %s218 = scalar_select %p217, %s216, 31
      %s219 = smul.addr %s218, 8
      %s220 = scalar_lea.vmem %s0, %s219
      %s221 = smul.u32 8, %s16
      %s222 = smul.u32 8, %s16
      %p223 = scmp.lt.s32.totalorder %s222, 31
      %s224 = scalar_select %p223, %s222, 31
      %s225 = smul.addr %s224, 8
      %s226 = scalar_lea.vmem %s5, %s225
      %s227 = smul.u32 8, %s16
      %v229 = vld [vmem:[%s220] sm:$0xff]
      %v230 = vld [vmem:[%s220 + $0x8] sm:$0xff]
      %v231 = vld [vmem:[%s220 + $0x10] sm:$0xff]
      %v232 = vld [vmem:[%s220 + $0x18] sm:$0xff]
      %v233 = vld [vmem:[%s220 + $0x20] sm:$0xff]
      %v234 = vld [vmem:[%s220 + $0x28] sm:$0xff]
      %v235 = vld [vmem:[%s220 + $0x30] sm:$0xff]
      %v236 = vld [vmem:[%s220 + $0x38] sm:$0xff]
      %v237 = vpack.c.bf16 %v230, %v229
      %v238 = vpack.c.bf16 %v232, %v231
      %v239 = vpack.c.bf16 %v234, %v233
      %v240 = vpack.c.bf16 %v236, %v235
      %v241 = vld [vmem:[%s1] sm:$0x3]
      %v242 = vld [vmem:[%s2] sm:$0x1]
      %v244 = vperm.slane %v242, 0
      %vm246 = vcmask 31744
      %v248 = vsel %vm246, %v237, 0
      %v251 = vsel %vm246, %v238, 0
      %v254 = vsel %vm246, %v239, 0
      %v257 = vsel %vm246, %v240, 0
      %vm259 = vcmask 1041408
      %v261 = vsel %vm259, %v241, 0
      %263 = vmatpush.bf16.msra.mxu0 0
      %264 = vmatpush.bf16.msra.mxu0 0
      %265 = vmatpush.bf16.msra.mxu0 0
      %266 = vmatpush.bf16.msra.mxu0 0
      %267 = vmatpush.bf16.msra.mxu0 0
      %268 = vmatpush.bf16.msra.mxu0 0
      %269 = vmatpush.bf16.msra.mxu0 0
      %270 = vmatpush.bf16.msra.mxu0 %v261
      %271 = vmatmul.bf16.gmra.mxu0 %v248
      %v272 = vpop.f32.mrf.mxu0
      %v273 = vadd.f32 %v244, %v272
      %v274 = vpop.f32.mrf.mxu0
      %v275 = vadd.f32 %v244, %v274
      %276 = vmatmul.bf16.gmra.mxu0 %v251
      %v277 = vpop.f32.mrf.mxu0
      %v278 = vadd.f32 %v244, %v277
      %v279 = vpop.f32.mrf.mxu0
      %v280 = vadd.f32 %v244, %v279
      %281 = vmatmul.bf16.gmra.mxu0 %v254
      %v282 = vpop.f32.mrf.mxu0
      %v283 = vadd.f32 %v244, %v282
      %v284 = vpop.f32.mrf.mxu0
      %v285 = vadd.f32 %v244, %v284
      %286 = vmatmul.bf16.gmra.mxu0 %v257
      %v287 = vpop.f32.mrf.mxu0
      %v288 = vadd.f32 %v244, %v287
      %v289 = vpop.f32.mrf.mxu0
      %v290 = vadd.f32 %v244, %v289
      %291 = vdwg.mxu0
      %v292 = vmax.f32 %v273, 0.0
      %v293 = vmax.f32 %v275, 0.0
      %v294 = vmax.f32 %v278, 0.0
      %v295 = vmax.f32 %v280, 0.0
      %v296 = vmax.f32 %v283, 0.0
      %v297 = vmax.f32 %v285, 0.0
      %v298 = vmax.f32 %v288, 0.0
      %v299 = vmax.f32 %v290, 0.0
      %v300 = vpack.c.bf16 %v293, %v292
      %v301 = vpack.c.bf16 %v295, %v294
      %v302 = vpack.c.bf16 %v297, %v296
      %v303 = vpack.c.bf16 %v299, %v298
      %v304 = vld [vmem:[%s3] sm:$0xf]
      %v305 = vld [vmem:[%s3 + $0x4] sm:$0xf]
      %v306 = vld [vmem:[%s3 + $0x8] sm:$0xf]
      %v307 = vld [vmem:[%s4] sm:$0x1]
      %v309 = vperm.slane %v307, 0
      %v314 = vunpack.c.l.b16 %v304
      %v315 = vunpack.c.l.b16 %v305
      %v316 = vunpack.c.l.b16 %v306
      %v317 = vpack.c.b16 %v315, %v314
      %v318 = vpack.c.b16 %v316, %v316
      %vm320 = vcmask 195584
      %v322 = vsel %vm320, %v300, 0
      %v325 = vsel %vm320, %v301, 0
      %v328 = vsel %vm320, %v302, 0
      %v331 = vsel %vm320, %v303, 0
      %vm333 = vcmask 1043456
      %v335 = vsel %vm333, %v318, 0
      %337 = vmatpush.bf16.msra.mxu0 0
      %338 = vmatpush.bf16.msra.mxu0 0
      %339 = vmatpush.bf16.msra.mxu0 0
      %340 = vmatpush.bf16.msra.mxu0 0
      %341 = vmatpush.bf16.msra.mxu0 0
      %342 = vmatpush.bf16.msra.mxu0 0
      %343 = vmatpush.bf16.msra.mxu0 %v335
      %344 = vmatpush.bf16.msra.mxu0 %v317
      %345 = vmatmul.bf16.gmra.mxu0 %v322
      %v346 = vpop.f32.mrf.mxu0
      %v347 = vadd.f32 %v309, %v346
      %v348 = vpop.f32.mrf.mxu0
      %v349 = vadd.f32 %v309, %v348
      %350 = vmatmul.bf16.gmra.mxu0 %v325
      %v351 = vpop.f32.mrf.mxu0
      %v352 = vadd.f32 %v309, %v351
      %v353 = vpop.f32.mrf.mxu0
      %v354 = vadd.f32 %v309, %v353
      %355 = vmatmul.bf16.gmra.mxu0 %v328
      %v356 = vpop.f32.mrf.mxu0
      %v357 = vadd.f32 %v309, %v356
      %v358 = vpop.f32.mrf.mxu0
      %v359 = vadd.f32 %v309, %v358
      %360 = vmatmul.bf16.gmra.mxu0 %v331
      %v361 = vpop.f32.mrf.mxu0
      %v362 = vadd.f32 %v309, %v361
      %v363 = vpop.f32.mrf.mxu0
      %v364 = vadd.f32 %v309, %v363
      %365 = vdwg.mxu0
      %v366 = vlaneseq
      %v367 = vand.u32 %v366, 127
      %vm368 = vcmp.ge.s32.totalorder %v367, 48
      %v369 = vmax.f32 %v347, 0.0
      %v370 = vmax.f32 %v349, 0.0
      %v371 = vmax.f32 %v352, 0.0
      %v372 = vmax.f32 %v354, 0.0
      %v373 = vmax.f32 %v357, 0.0
      %v374 = vmax.f32 %v359, 0.0
      %v375 = vmax.f32 %v362, 0.0
      %v376 = vmax.f32 %v364, 0.0
      %v377 = vsel %vm368, %v369, %v347
      %v378 = vsel %vm368, %v370, %v349
      %v379 = vsel %vm368, %v371, %v352
      %v380 = vsel %vm368, %v372, %v354
      %v381 = vsel %vm368, %v373, %v357
      %v382 = vsel %vm368, %v374, %v359
      %v383 = vsel %vm368, %v375, %v362
      %v384 = vsel %vm368, %v376, %v364
      %385 = vst [vmem:[%s226] sm:$0xff] %v377
      %386 = vst [vmem:[%s226 + $0x8] sm:$0xff] %v378
      %387 = vst [vmem:[%s226 + $0x10] sm:$0xff] %v379
      %388 = vst [vmem:[%s226 + $0x18] sm:$0xff] %v380
      %389 = vst [vmem:[%s226 + $0x20] sm:$0xff] %v381
      %390 = vst [vmem:[%s226 + $0x28] sm:$0xff] %v382
      %391 = vst [vmem:[%s226 + $0x30] sm:$0xff] %v383
      %392 = vst [vmem:[%s226 + $0x38] sm:$0xff] %v384
      %s393 = smul.u32 8, %s16
      %p394 = scmp.lt.s32.totalorder %s393, 31
      %s395 = scalar_select %p394, %s393, 31
      %s396 = smul.addr %s395, 8
      %s397 = scalar_lea.vmem %s5, %s396
      // Predicated region
      $region41: #{multipart_segmentation_forward.3} parent=39 // pred_check
        %p398 = pneg %p144
      $region42: #{multipart_segmentation_forward.3} parent=39 // pred_check_branch
        %400 = sbr.rel (%p398) target = $region44
      $region43: #{multipart_segmentation_forward.3} parent=39 // pred_region
        %s401 = smul.u32 8, %s16
      $region44: #{multipart_segmentation_forward.3} parent=39 // pred_fallthru
        _
    $region40: #{multipart_segmentation_forward.3} parent=5 // pred_fallthru
      _
    %p402 = scmp.le.s32.totalorder 2, %s11
    // Predicated region
    $region45: #{multipart_segmentation_forward.3} parent=5 // pred_check
      %p403 = pneg %p402
    $region46: #{multipart_segmentation_forward.3} parent=5 // pred_check_branch
      %405 = sbr.rel (%p403) target = $region48
    $region47: #{multipart_segmentation_forward.3} parent=5 // pred_region
      %s406 = ssub.s32 %s11, 2
      // Predicated region
      $region49: #{multipart_segmentation_forward.3} parent=47 // pred_check
        %p407 = pneg %p150
      $region50: #{multipart_segmentation_forward.3} parent=47 // pred_check_branch
        %409 = sbr.rel (%p407) target = $region52
      $region51: #{multipart_segmentation_forward.3} parent=47 // pred_region
        %s410 = smul.u32 8, %s17
        %p411 = scmp.lt.s32.totalorder %s410, 31
        %s412 = scalar_select %p411, %s410, 31
        %s413 = smul.addr %s412, 8
        %s414 = scalar_lea.vmem %s5, %s413
      $region52: #{multipart_segmentation_forward.3} parent=47 // pred_fallthru
        _
    $region48: #{multipart_segmentation_forward.3} parent=5 // pred_fallthru
      _
  $region6: #{multipart_segmentation_forward.3} parent=0 // loop_footer
    %s15 = sadd.s32 1, %s11
  $region7: #{multipart_segmentation_forward.3} parent=0 // loop_footer_branch
    %10 = sbr.rel target = $region3
  $region8: #{multipart_segmentation_forward.3} parent=0 // loop_exit
    _

// kernel: squeeze.1
$region0: #{squeeze.1}
  %s0 = inlined_call_operand.vmem [shape: f32[2048], index: 0, kind: input, shape index: {}]
  %s1 = inlined_call_operand.vmem [shape: f32[2,128,8], index: 1, kind: output, shape index: {}]
  %v2 = vld [vmem:[%s0] sm:$0xff]
  %vm3 = vcmask 64512
  %4 = vst.msk [vmem:[%s1] ss:$16 sm:$0x3] %vm3, %v2
  %5 = vst.msk [vmem:[%s1] ss:$16 sm:$0xc] %vm3, %v2
  %6 = vst.msk [vmem:[%s1] ss:$16 sm:$0x30] %vm3, %v2
  %7 = vst.msk [vmem:[%s1] ss:$16 sm:$0xc0] %vm3, %v2
  %s8 = scalar_lea.vmem %s0, 8
  %v9 = vld [vmem:[%s8] sm:$0xff]
  %vm10 = vcmask 64512
  %s11 = scalar_lea.vmem %s1, 128
  %12 = vst.msk [vmem:[%s11] ss:$16 sm:$0x3] %vm10, %v9
  %s13 = scalar_lea.vmem %s1, 128
  %14 = vst.msk [vmem:[%s13] ss:$16 sm:$0xc] %vm10, %v9
  %s15 = scalar_lea.vmem %s1, 128
  %16 = vst.msk [vmem:[%s15] ss:$16 sm:$0x30] %vm10, %v9
  %s17 = scalar_lea.vmem %s1, 128
  %18 = vst.msk [vmem:[%s17] ss:$16 sm:$0xc0] %vm10, %v9
  %v19 = vld [vmem:[%s0] sm:$0xff]
  %20 = vrot.lane.b32.xlu0 %v19, 120
  %v21 = vpop.permute.xlu0 %20
  %vm22 = vcmask 64512
  %s23 = scalar_lea.vmem %s1, 1
  %24 = vst.msk [vmem:[%s23] ss:$16 sm:$0x3] %vm22, %v21
  %s25 = scalar_lea.vmem %s1, 1
  %26 = vst.msk [vmem:[%s25] ss:$16 sm:$0xc] %vm22, %v21
  %s27 = scalar_lea.vmem %s1, 1
  %28 = vst.msk [vmem:[%s27] ss:$16 sm:$0x30] %vm22, %v21
  %s29 = scalar_lea.vmem %s1, 1
  %30 = vst.msk [vmem:[%s29] ss:$16 sm:$0xc0] %vm22, %v21
  %s31 = scalar_lea.vmem %s0, 8
  %v32 = vld [vmem:[%s31] sm:$0xff]
  %33 = vrot.lane.b32.xlu0 %v32, 120
  %v34 = vpop.permute.xlu0 %33
  %vm35 = vcmask 64512
  %s36 = scalar_lea.vmem %s1, 129
  %37 = vst.msk [vmem:[%s36] ss:$16 sm:$0x3] %vm35, %v34
  %s38 = scalar_lea.vmem %s1, 129
  %39 = vst.msk [vmem:[%s38] ss:$16 sm:$0xc] %vm35, %v34
  %s40 = scalar_lea.vmem %s1, 129
  %41 = vst.msk [vmem:[%s40] ss:$16 sm:$0x30] %vm35, %v34
  %s42 = scalar_lea.vmem %s1, 129
  %43 = vst.msk [vmem:[%s42] ss:$16 sm:$0xc0] %vm35, %v34
  %v44 = vld [vmem:[%s0] sm:$0xff]
  %45 = vrot.lane.b32.xlu0 %v44, 112
  %v46 = vpop.permute.xlu0 %45
  %vm47 = vcmask 64512
  %s48 = scalar_lea.vmem %s1, 2
  %49 = vst.msk [vmem:[%s48] ss:$16 sm:$0x3] %vm47, %v46
  %s50 = scalar_lea.vmem %s1, 2
  %51 = vst.msk [vmem:[%s50] ss:$16 sm:$0xc] %vm47, %v46
  %s52 = scalar_lea.vmem %s1, 2
  %53 = vst.msk [vmem:[%s52] ss:$16 sm:$0x30] %vm47, %v46
  %s54 = scalar_lea.vmem %s1, 2
  %55 = vst.msk [vmem:[%s54] ss:$16 sm:$0xc0] %vm47, %v46
  %s56 = scalar_lea.vmem %s0, 8
  %v57 = vld [vmem:[%s56] sm:$0xff]
  %58 = vrot.lane.b32.xlu0 %v57, 112
  %v59 = vpop.permute.xlu0 %58
  %vm60 = vcmask 64512
  %s61 = scalar_lea.vmem %s1, 130
  %62 = vst.msk [vmem:[%s61] ss:$16 sm:$0x3] %vm60, %v59
  %s63 = scalar_lea.vmem %s1, 130
  %64 = vst.msk [vmem:[%s63] ss:$16 sm:$0xc] %vm60, %v59
  %s65 = scalar_lea.vmem %s1, 130
  %66 = vst.msk [vmem:[%s65] ss:$16 sm:$0x30] %vm60, %v59
  %s67 = scalar_lea.vmem %s1, 130
  %68 = vst.msk [vmem:[%s67] ss:$16 sm:$0xc0] %vm60, %v59
  %v69 = vld [vmem:[%s0] sm:$0xff]
  %70 = vrot.lane.b32.xlu0 %v69, 104
  %v71 = vpop.permute.xlu0 %70
  %vm72 = vcmask 64512
  %s73 = scalar_lea.vmem %s1, 3
  %74 = vst.msk [vmem:[%s73] ss:$16 sm:$0x3] %vm72, %v71
  %s75 = scalar_lea.vmem %s1, 3
  %76 = vst.msk [vmem:[%s75] ss:$16 sm:$0xc] %vm72, %v71
  %s77 = scalar_lea.vmem %s1, 3
  %78 = vst.msk [vmem:[%s77] ss:$16 sm:$0x30] %vm72, %v71
  %s79 = scalar_lea.vmem %s1, 3
  %80 = vst.msk [vmem:[%s79] ss:$16 sm:$0xc0] %vm72, %v71
  %s81 = scalar_lea.vmem %s0, 8
  %v82 = vld [vmem:[%s81] sm:$0xff]
  %83 = vrot.lane.b32.xlu0 %v82, 104
  %v84 = vpop.permute.xlu0 %83
  %vm85 = vcmask 64512
  %s86 = scalar_lea.vmem %s1, 131
  %87 = vst.msk [vmem:[%s86] ss:$16 sm:$0x3] %vm85, %v84
  %s88 = scalar_lea.vmem %s1, 131
  %89 = vst.msk [vmem:[%s88] ss:$16 sm:$0xc] %vm85, %v84
  %s90 = scalar_lea.vmem %s1, 131
  %91 = vst.msk [vmem:[%s90] ss:$16 sm:$0x30] %vm85, %v84
  %s92 = scalar_lea.vmem %s1, 131
  %93 = vst.msk [vmem:[%s92] ss:$16 sm:$0xc0] %vm85, %v84
  %v94 = vld [vmem:[%s0] sm:$0xff]
  %95 = vrot.lane.b32.xlu0 %v94, 96
  %v96 = vpop.permute.xlu0 %95
  %vm97 = vcmask 64512
  %s98 = scalar_lea.vmem %s1, 4
  %99 = vst.msk [vmem:[%s98] ss:$16 sm:$0x3] %vm97, %v96
  %s100 = scalar_lea.vmem %s1, 4
  %101 = vst.msk [vmem:[%s100] ss:$16 sm:$0xc] %vm97, %v96
  %s102 = scalar_lea.vmem %s1, 4
  %103 = vst.msk [vmem:[%s102] ss:$16 sm:$0x30] %vm97, %v96
  %s104 = scalar_lea.vmem %s1, 4
  %105 = vst.msk [vmem:[%s104] ss:$16 sm:$0xc0] %vm97, %v96
  %s106 = scalar_lea.vmem %s0, 8
  %v107 = vld [vmem:[%s106] sm:$0xff]
  %108 = vrot.lane.b32.xlu0 %v107, 96
  %v109 = vpop.permute.xlu0 %108
  %vm110 = vcmask 64512
  %s111 = scalar_lea.vmem %s1, 132
  %112 = vst.msk [vmem:[%s111] ss:$16 sm:$0x3] %vm110, %v109
  %s113 = scalar_lea.vmem %s1, 132
  %114 = vst.msk [vmem:[%s113] ss:$16 sm:$0xc] %vm110, %v109
  %s115 = scalar_lea.vmem %s1, 132
  %116 = vst.msk [vmem:[%s115] ss:$16 sm:$0x30] %vm110, %v109
  %s117 = scalar_lea.vmem %s1, 132
  %118 = vst.msk [vmem:[%s117] ss:$16 sm:$0xc0] %vm110, %v109
  %v119 = vld [vmem:[%s0] sm:$0xff]
  %120 = vrot.lane.b32.xlu0 %v119, 88
  %v121 = vpop.permute.xlu0 %120
  %vm122 = vcmask 64512
  %s123 = scalar_lea.vmem %s1, 5
  %124 = vst.msk [vmem:[%s123] ss:$16 sm:$0x3] %vm122, %v121
  %s125 = scalar_lea.vmem %s1, 5
  %126 = vst.msk [vmem:[%s125] ss:$16 sm:$0xc] %vm122, %v121
  %s127 = scalar_lea.vmem %s1, 5
  %128 = vst.msk [vmem:[%s127] ss:$16 sm:$0x30] %vm122, %v121
  %s129 = scalar_lea.vmem %s1, 5
  %130 = vst.msk [vmem:[%s129] ss:$16 sm:$0xc0] %vm122, %v121
  %s131 = scalar_lea.vmem %s0, 8
  %v132 = vld [vmem:[%s131] sm:$0xff]
  %133 = vrot.lane.b32.xlu0 %v132, 88
  %v134 = vpop.permute.xlu0 %133
  %vm135 = vcmask 64512
  %s136 = scalar_lea.vmem %s1, 133
  %137 = vst.msk [vmem:[%s136] ss:$16 sm:$0x3] %vm135, %v134
  %s138 = scalar_lea.vmem %s1, 133
  %139 = vst.msk [vmem:[%s138] ss:$16 sm:$0xc] %vm135, %v134
  %s140 = scalar_lea.vmem %s1, 133
  %141 = vst.msk [vmem:[%s140] ss:$16 sm:$0x30] %vm135, %v134
  %s142 = scalar_lea.vmem %s1, 133
  %143 = vst.msk [vmem:[%s142] ss:$16 sm:$0xc0] %vm135, %v134
  %v144 = vld [vmem:[%s0] sm:$0xff]
  %145 = vrot.lane.b32.xlu0 %v144, 80
  %v146 = vpop.permute.xlu0 %145
  %vm147 = vcmask 64512
  %s148 = scalar_lea.vmem %s1, 6
  %149 = vst.msk [vmem:[%s148] ss:$16 sm:$0x3] %vm147, %v146
  %s150 = scalar_lea.vmem %s1, 6
  %151 = vst.msk [vmem:[%s150] ss:$16 sm:$0xc] %vm147, %v146
  %s152 = scalar_lea.vmem %s1, 6
  %153 = vst.msk [vmem:[%s152] ss:$16 sm:$0x30] %vm147, %v146
  %s154 = scalar_lea.vmem %s1, 6
  %155 = vst.msk [vmem:[%s154] ss:$16 sm:$0xc0] %vm147, %v146
  %s156 = scalar_lea.vmem %s0, 8
  %v157 = vld [vmem:[%s156] sm:$0xff]
  %158 = vrot.lane.b32.xlu0 %v157, 80
  %v159 = vpop.permute.xlu0 %158
  %vm160 = vcmask 64512
  %s161 = scalar_lea.vmem %s1, 134
  %162 = vst.msk [vmem:[%s161] ss:$16 sm:$0x3] %vm160, %v159
  %s163 = scalar_lea.vmem %s1, 134
  %164 = vst.msk [vmem:[%s163] ss:$16 sm:$0xc] %vm160, %v159
  %s165 = scalar_lea.vmem %s1, 134
  %166 = vst.msk [vmem:[%s165] ss:$16 sm:$0x30] %vm160, %v159
  %s167 = scalar_lea.vmem %s1, 134
  %168 = vst.msk [vmem:[%s167] ss:$16 sm:$0xc0] %vm160, %v159
  %v169 = vld [vmem:[%s0] sm:$0xff]
  %170 = vrot.lane.b32.xlu0 %v169, 72
  %v171 = vpop.permute.xlu0 %170
  %vm172 = vcmask 64512
  %s173 = scalar_lea.vmem %s1, 7
  %174 = vst.msk [vmem:[%s173] ss:$16 sm:$0x3] %vm172, %v171
  %s175 = scalar_lea.vmem %s1, 7
  %176 = vst.msk [vmem:[%s175] ss:$16 sm:$0xc] %vm172, %v171
  %s177 = scalar_lea.vmem %s1, 7
  %178 = vst.msk [vmem:[%s177] ss:$16 sm:$0x30] %vm172, %v171
  %s179 = scalar_lea.vmem %s1, 7
  %180 = vst.msk [vmem:[%s179] ss:$16 sm:$0xc0] %vm172, %v171
  %s181 = scalar_lea.vmem %s0, 8
  %v182 = vld [vmem:[%s181] sm:$0xff]
  %183 = vrot.lane.b32.xlu0 %v182, 72
  %v184 = vpop.permute.xlu0 %183
  %vm185 = vcmask 64512
  %s186 = scalar_lea.vmem %s1, 135
  %187 = vst.msk [vmem:[%s186] ss:$16 sm:$0x3] %vm185, %v184
  %s188 = scalar_lea.vmem %s1, 135
  %189 = vst.msk [vmem:[%s188] ss:$16 sm:$0xc] %vm185, %v184
  %s190 = scalar_lea.vmem %s1, 135
  %191 = vst.msk [vmem:[%s190] ss:$16 sm:$0x30] %vm185, %v184
  %s192 = scalar_lea.vmem %s1, 135
  %193 = vst.msk [vmem:[%s192] ss:$16 sm:$0xc0] %vm185, %v184
  %v194 = vld [vmem:[%s0] sm:$0xff]
  %195 = vrot.lane.b32.xlu0 %v194, 64
  %v196 = vpop.permute.xlu0 %195
  %vm197 = vcmask 64512
  %s198 = scalar_lea.vmem %s1, 8
  %199 = vst.msk [vmem:[%s198] ss:$16 sm:$0x3] %vm197, %v196
  %s200 = scalar_lea.vmem %s1, 8
  %201 = vst.msk [vmem:[%s200] ss:$16 sm:$0xc] %vm197, %v196
  %s202 = scalar_lea.vmem %s1, 8
  %203 = vst.msk [vmem:[%s202] ss:$16 sm:$0x30] %vm197, %v196
  %s204 = scalar_lea.vmem %s1, 8
  %205 = vst.msk [vmem:[%s204] ss:$16 sm:$0xc0] %vm197, %v196
  %s206 = scalar_lea.vmem %s0, 8
  %v207 = vld [vmem:[%s206] sm:$0xff]
  %208 = vrot.lane.b32.xlu0 %v207, 64
  %v209 = vpop.permute.xlu0 %208
  %vm210 = vcmask 64512
  %s211 = scalar_lea.vmem %s1, 136
  %212 = vst.msk [vmem:[%s211] ss:$16 sm:$0x3] %vm210, %v209
  %s213 = scalar_lea.vmem %s1, 136
  %214 = vst.msk [vmem:[%s213] ss:$16 sm:$0xc] %vm210, %v209
  %s215 = scalar_lea.vmem %s1, 136
  %216 = vst.msk [vmem:[%s215] ss:$16 sm:$0x30] %vm210, %v209
  %s217 = scalar_lea.vmem %s1, 136
  %218 = vst.msk [vmem:[%s217] ss:$16 sm:$0xc0] %vm210, %v209
  %v219 = vld [vmem:[%s0] sm:$0xff]
  %220 = vrot.lane.b32.xlu0 %v219, 56
  %v221 = vpop.permute.xlu0 %220
  %vm222 = vcmask 64512
  %s223 = scalar_lea.vmem %s1, 9
  %224 = vst.msk [vmem:[%s223] ss:$16 sm:$0x3] %vm222, %v221
  %s225 = scalar_lea.vmem %s1, 9
  %226 = vst.msk [vmem:[%s225] ss:$16 sm:$0xc] %vm222, %v221
  %s227 = scalar_lea.vmem %s1, 9
  %228 = vst.msk [vmem:[%s227] ss:$16 sm:$0x30] %vm222, %v221
  %s229 = scalar_lea.vmem %s1, 9
  %230 = vst.msk [vmem:[%s229] ss:$16 sm:$0xc0] %vm222, %v221
  %s231 = scalar_lea.vmem %s0, 8
  %v232 = vld [vmem:[%s231] sm:$0xff]
  %233 = vrot.lane.b32.xlu0 %v232, 56
  %v234 = vpop.permute.xlu0 %233
  %vm235 = vcmask 64512
  %s236 = scalar_lea.vmem %s1, 137
  %237 = vst.msk [vmem:[%s236] ss:$16 sm:$0x3] %vm235, %v234
  %s238 = scalar_lea.vmem %s1, 137
  %239 = vst.msk [vmem:[%s238] ss:$16 sm:$0xc] %vm235, %v234
  %s240 = scalar_lea.vmem %s1, 137
  %241 = vst.msk [vmem:[%s240] ss:$16 sm:$0x30] %vm235, %v234
  %s242 = scalar_lea.vmem %s1, 137
  %243 = vst.msk [vmem:[%s242] ss:$16 sm:$0xc0] %vm235, %v234
  %v244 = vld [vmem:[%s0] sm:$0xff]
  %245 = vrot.lane.b32.xlu0 %v244, 48
  %v246 = vpop.permute.xlu0 %245
  %vm247 = vcmask 64512
  %s248 = scalar_lea.vmem %s1, 10
  %249 = vst.msk [vmem:[%s248] ss:$16 sm:$0x3] %vm247, %v246
  %s250 = scalar_lea.vmem %s1, 10
  %251 = vst.msk [vmem:[%s250] ss:$16 sm:$0xc] %vm247, %v246
  %s252 = scalar_lea.vmem %s1, 10
  %253 = vst.msk [vmem:[%s252] ss:$16 sm:$0x30] %vm247, %v246
  %s254 = scalar_lea.vmem %s1, 10
  %255 = vst.msk [vmem:[%s254] ss:$16 sm:$0xc0] %vm247, %v246
  %s256 = scalar_lea.vmem %s0, 8
  %v257 = vld [vmem:[%s256] sm:$0xff]
  %258 = vrot.lane.b32.xlu0 %v257, 48
  %v259 = vpop.permute.xlu0 %258
  %vm260 = vcmask 64512
  %s261 = scalar_lea.vmem %s1, 138
  %262 = vst.msk [vmem:[%s261] ss:$16 sm:$0x3] %vm260, %v259
  %s263 = scalar_lea.vmem %s1, 138
  %264 = vst.msk [vmem:[%s263] ss:$16 sm:$0xc] %vm260, %v259
  %s265 = scalar_lea.vmem %s1, 138
  %266 = vst.msk [vmem:[%s265] ss:$16 sm:$0x30] %vm260, %v259
  %s267 = scalar_lea.vmem %s1, 138
  %268 = vst.msk [vmem:[%s267] ss:$16 sm:$0xc0] %vm260, %v259
  %v269 = vld [vmem:[%s0] sm:$0xff]
  %270 = vrot.lane.b32.xlu0 %v269, 40
  %v271 = vpop.permute.xlu0 %270
  %vm272 = vcmask 64512
  %s273 = scalar_lea.vmem %s1, 11
  %274 = vst.msk [vmem:[%s273] ss:$16 sm:$0x3] %vm272, %v271
  %s275 = scalar_lea.vmem %s1, 11
  %276 = vst.msk [vmem:[%s275] ss:$16 sm:$0xc] %vm272, %v271
  %s277 = scalar_lea.vmem %s1, 11
  %278 = vst.msk [vmem:[%s277] ss:$16 sm:$0x30] %vm272, %v271
  %s279 = scalar_lea.vmem %s1, 11
  %280 = vst.msk [vmem:[%s279] ss:$16 sm:$0xc0] %vm272, %v271
  %s281 = scalar_lea.vmem %s0, 8
  %v282 = vld [vmem:[%s281] sm:$0xff]
  %283 = vrot.lane.b32.xlu0 %v282, 40
  %v284 = vpop.permute.xlu0 %283
  %vm285 = vcmask 64512
  %s286 = scalar_lea.vmem %s1, 139
  %287 = vst.msk [vmem:[%s286] ss:$16 sm:$0x3] %vm285, %v284
  %s288 = scalar_lea.vmem %s1, 139
  %289 = vst.msk [vmem:[%s288] ss:$16 sm:$0xc] %vm285, %v284
  %s290 = scalar_lea.vmem %s1, 139
  %291 = vst.msk [vmem:[%s290] ss:$16 sm:$0x30] %vm285, %v284
  %s292 = scalar_lea.vmem %s1, 139
  %293 = vst.msk [vmem:[%s292] ss:$16 sm:$0xc0] %vm285, %v284
  %v294 = vld [vmem:[%s0] sm:$0xff]
  %295 = vrot.lane.b32.xlu0 %v294, 32
  %v296 = vpop.permute.xlu0 %295
  %vm297 = vcmask 64512
  %s298 = scalar_lea.vmem %s1, 12
  %299 = vst.msk [vmem:[%s298] ss:$16 sm:$0x3] %vm297, %v296
  %s300 = scalar_lea.vmem %s1, 12
  %301 = vst.msk [vmem:[%s300] ss:$16 sm:$0xc] %vm297, %v296
  %s302 = scalar_lea.vmem %s1, 12
  %303 = vst.msk [vmem:[%s302] ss:$16 sm:$0x30] %vm297, %v296
  %s304 = scalar_lea.vmem %s1, 12
  %305 = vst.msk [vmem:[%s304] ss:$16 sm:$0xc0] %vm297, %v296
  %s306 = scalar_lea.vmem %s0, 8
  %v307 = vld [vmem:[%s306] sm:$0xff]
  %308 = vrot.lane.b32.xlu0 %v307, 32
  %v309 = vpop.permute.xlu0 %308
  %vm310 = vcmask 64512
  %s311 = scalar_lea.vmem %s1, 140
  %312 = vst.msk [vmem:[%s311] ss:$16 sm:$0x3] %vm310, %v309
  %s313 = scalar_lea.vmem %s1, 140
  %314 = vst.msk [vmem:[%s313] ss:$16 sm:$0xc] %vm310, %v309
  %s315 = scalar_lea.vmem %s1, 140
  %316 = vst.msk [vmem:[%s315] ss:$16 sm:$0x30] %vm310, %v309
  %s317 = scalar_lea.vmem %s1, 140
  %318 = vst.msk [vmem:[%s317] ss:$16 sm:$0xc0] %vm310, %v309
  %v319 = vld [vmem:[%s0] sm:$0xff]
  %320 = vrot.lane.b32.xlu0 %v319, 24
  %v321 = vpop.permute.xlu0 %320
  %vm322 = vcmask 64512
  %s323 = scalar_lea.vmem %s1, 13
  %324 = vst.msk [vmem:[%s323] ss:$16 sm:$0x3] %vm322, %v321
  %s325 = scalar_lea.vmem %s1, 13
  %326 = vst.msk [vmem:[%s325] ss:$16 sm:$0xc] %vm322, %v321
  %s327 = scalar_lea.vmem %s1, 13
  %328 = vst.msk [vmem:[%s327] ss:$16 sm:$0x30] %vm322, %v321
  %s329 = scalar_lea.vmem %s1, 13
  %330 = vst.msk [vmem:[%s329] ss:$16 sm:$0xc0] %vm322, %v321
  %s331 = scalar_lea.vmem %s0, 8
  %v332 = vld [vmem:[%s331] sm:$0xff]
  %333 = vrot.lane.b32.xlu0 %v332, 24
  %v334 = vpop.permute.xlu0 %333
  %vm335 = vcmask 64512
  %s336 = scalar_lea.vmem %s1, 141
  %337 = vst.msk [vmem:[%s336] ss:$16 sm:$0x3] %vm335, %v334
  %s338 = scalar_lea.vmem %s1, 141
  %339 = vst.msk [vmem:[%s338] ss:$16 sm:$0xc] %vm335, %v334
  %s340 = scalar_lea.vmem %s1, 141
  %341 = vst.msk [vmem:[%s340] ss:$16 sm:$0x30] %vm335, %v334
  %s342 = scalar_lea.vmem %s1, 141
  %343 = vst.msk [vmem:[%s342] ss:$16 sm:$0xc0] %vm335, %v334
  %v344 = vld [vmem:[%s0] sm:$0xff]
  %345 = vrot.lane.b32.xlu0 %v344, 16
  %v346 = vpop.permute.xlu0 %345
  %vm347 = vcmask 64512
  %s348 = scalar_lea.vmem %s1, 14
  %349 = vst.msk [vmem:[%s348] ss:$16 sm:$0x3] %vm347, %v346
  %s350 = scalar_lea.vmem %s1, 14
  %351 = vst.msk [vmem:[%s350] ss:$16 sm:$0xc] %vm347, %v346
  %s352 = scalar_lea.vmem %s1, 14
  %353 = vst.msk [vmem:[%s352] ss:$16 sm:$0x30] %vm347, %v346
  %s354 = scalar_lea.vmem %s1, 14
  %355 = vst.msk [vmem:[%s354] ss:$16 sm:$0xc0] %vm347, %v346
  %s356 = scalar_lea.vmem %s0, 8
  %v357 = vld [vmem:[%s356] sm:$0xff]
  %358 = vrot.lane.b32.xlu0 %v357, 16
  %v359 = vpop.permute.xlu0 %358
  %vm360 = vcmask 64512
  %s361 = scalar_lea.vmem %s1, 142
  %362 = vst.msk [vmem:[%s361] ss:$16 sm:$0x3] %vm360, %v359
  %s363 = scalar_lea.vmem %s1, 142
  %364 = vst.msk [vmem:[%s363] ss:$16 sm:$0xc] %vm360, %v359
  %s365 = scalar_lea.vmem %s1, 142
  %366 = vst.msk [vmem:[%s365] ss:$16 sm:$0x30] %vm360, %v359
  %s367 = scalar_lea.vmem %s1, 142
  %368 = vst.msk [vmem:[%s367] ss:$16 sm:$0xc0] %vm360, %v359
  %v369 = vld [vmem:[%s0] sm:$0xff]
  %370 = vrot.lane.b32.xlu0 %v369, 8
  %v371 = vpop.permute.xlu0 %370
  %vm372 = vcmask 64512
  %s373 = scalar_lea.vmem %s1, 15
  %374 = vst.msk [vmem:[%s373] ss:$16 sm:$0x3] %vm372, %v371
  %s375 = scalar_lea.vmem %s1, 15
  %376 = vst.msk [vmem:[%s375] ss:$16 sm:$0xc] %vm372, %v371
  %s377 = scalar_lea.vmem %s1, 15
  %378 = vst.msk [vmem:[%s377] ss:$16 sm:$0x30] %vm372, %v371
  %s379 = scalar_lea.vmem %s1, 15
  %380 = vst.msk [vmem:[%s379] ss:$16 sm:$0xc0] %vm372, %v371
  %s381 = scalar_lea.vmem %s0, 8
  %v382 = vld [vmem:[%s381] sm:$0xff]
  %383 = vrot.lane.b32.xlu0 %v382, 8
  %v384 = vpop.permute.xlu0 %383
  %vm385 = vcmask 64512
  %s386 = scalar_lea.vmem %s1, 143
  %387 = vst.msk [vmem:[%s386] ss:$16 sm:$0x3] %vm385, %v384
  %s388 = scalar_lea.vmem %s1, 143
  %389 = vst.msk [vmem:[%s388] ss:$16 sm:$0xc] %vm385, %v384
  %s390 = scalar_lea.vmem %s1, 143
  %391 = vst.msk [vmem:[%s390] ss:$16 sm:$0x30] %vm385, %v384
  %s392 = scalar_lea.vmem %s1, 143
  %393 = vst.msk [vmem:[%s392] ss:$16 sm:$0xc0] %vm385, %v384

// kernel: multipart_segmentation_forward.4
$region0: #{multipart_segmentation_forward.4}
  #allocation0 [shape = 'u32[]', space=smem, size = 0x4, offset = 0x4, fixed_abs, tag = 'smem constant byte address 0x4 - core index']
  #allocation1 [shape = 'u32[72,128]{1,0:T(1,128)}', space=vmem, size = 0x9000, scoped, tag = 'internal scratch']
  %s0 = inlined_call_operand.vmem [shape: f32[256,8,24], index: 0, kind: input, shape index: {}]
  %s1 = inlined_call_operand.vmem [shape: f32[256,8,24], index: 1, kind: input, shape index: {}]
  %s2 = inlined_call_operand.vmem [shape: f32[256,128], index: 2, kind: input, shape index: {}]
  %s3 = inlined_call_operand.vmem [shape: bf16[24,128], index: 3, kind: input, shape index: {}]
  %s4 = inlined_call_operand.vmem [shape: f32[1,128], index: 4, kind: input, shape index: {}]
  %s5 = inlined_call_operand.vmem [shape: bf16[128,128], index: 5, kind: input, shape index: {}]
  %s6 = inlined_call_operand.vmem [shape: f32[1,128], index: 6, kind: input, shape index: {}]
  %s7 = inlined_call_operand.vmem [shape: f32[256,128], index: 7, kind: output, shape index: {}]
  %s8 = sld [smem:[#allocation0]]
  $region61: #{multipart_segmentation_forward.4} parent=0
    _
  %s10 = ssub.s32 1, %s8
  %s11 = scalar_select 0, %s10, %s8
  loop: start=0, step=1, limit=6
  $region2: #{multipart_segmentation_forward.4} parent=0 // loop_pre_header
    _
  $region3: #{multipart_segmentation_forward.4} parent=0 // loop_header
    %s13 = sphi 0, %s17
    %p14 = scmp.ge.s32.totalorder %s13, 6
    %s23 = sphi 0, %s25
    %s26 = sphi 0, %s23
    %s27 = sphi 0, %s26
    %s43 = sphi 0, %s27
    %s49 = sphi 0, %s51
    %s52 = sphi 0, %s49
    %s53 = sphi 0, %s52
    %s69 = sphi 0, %s53
    %s75 = sphi 0, %s77
    %s78 = sphi 0, %s75
    %s79 = sphi 0, %s78
    %s95 = sphi 0, %s79
    %s99 = sphi 0, %s99
    %s101 = sphi 0, %s99
    %s102 = sphi 0, %s101
    %s116 = sphi 0, %s102
    %s120 = sphi 0, %s120
    %s122 = sphi 0, %s120
    %s123 = sphi 0, %s122
    %s137 = sphi 0, %s123
    %s141 = sphi 0, %s141
    %s143 = sphi 0, %s141
    %s144 = sphi 0, %s143
    %s158 = sphi 0, %s144
    %s162 = sphi 0, %s162
    %s164 = sphi 0, %s162
    %s165 = sphi 0, %s164
    %s179 = sphi 0, %s165
    %s185 = sphi 0, %s187
    %s188 = sphi 0, %s185
    %s189 = sphi 0, %s188
    %s205 = sphi 0, %s189
  $region4: #{multipart_segmentation_forward.4} parent=0 // loop_header_branch
    %16 = sbr.rel (%p14) target = $region8
  $region5: #{multipart_segmentation_forward.4} parent=0 // loop_body
    %s18 = ssub.s32 %s13, 1
    %s19 = ssub.s32 %s13, 2
    %s20 = sadd.s32 %s13, 1
    %s21 = ssub.s32 %s13, %s20
    %p22 = scmp.eq.s32.totalorder %s21, 0
    %s24 = sadd.s32 %s23, 1
    %s25 = scalar_select %p22, %s23, %s24
    %p28 = pneg %p22
    %p29 = scmp.eq.s32.totalorder %s13, 3
    %p30 = por %p28, %p29
    %p31 = scmp.ne.s32.totalorder %s23, %s26
    %p32 = scmp.eq.s32.totalorder %s13, 0
    %p33 = por %p31, %p32
    %p34 = scmp.ne.s32.totalorder %s23, %s26
    %p35 = scmp.eq.s32.totalorder %s18, 3
    %p36 = por %p34, %p35
    %p37 = scmp.ne.s32.totalorder %s26, %s27
    %p38 = scmp.eq.s32.totalorder %s18, 0
    %p39 = por %p37, %p38
    %p40 = scmp.ne.s32.totalorder %s26, %s27
    %p41 = scmp.eq.s32.totalorder %s19, 3
    %p42 = por %p40, %p41
    %p44 = scmp.ne.s32.totalorder %s27, %s43
    %p45 = scmp.eq.s32.totalorder %s19, 0
    %p46 = por %p44, %p45
    %s47 = ssub.s32 %s13, %s20
    %p48 = scmp.eq.s32.totalorder %s47, 0
    %s50 = sadd.s32 %s49, 1
    %s51 = scalar_select %p48, %s49, %s50
    %p54 = pneg %p48
    %p55 = scmp.eq.s32.totalorder %s13, 3
    %p56 = por %p54, %p55
    %p57 = scmp.ne.s32.totalorder %s49, %s52
    %p58 = scmp.eq.s32.totalorder %s13, 0
    %p59 = por %p57, %p58
    %p60 = scmp.ne.s32.totalorder %s49, %s52
    %p61 = scmp.eq.s32.totalorder %s18, 3
    %p62 = por %p60, %p61
    %p63 = scmp.ne.s32.totalorder %s52, %s53
    %p64 = scmp.eq.s32.totalorder %s18, 0
    %p65 = por %p63, %p64
    %p66 = scmp.ne.s32.totalorder %s52, %s53
    %p67 = scmp.eq.s32.totalorder %s19, 3
    %p68 = por %p66, %p67
    %p70 = scmp.ne.s32.totalorder %s53, %s69
    %p71 = scmp.eq.s32.totalorder %s19, 0
    %p72 = por %p70, %p71
    %s73 = ssub.s32 %s13, %s20
    %p74 = scmp.eq.s32.totalorder %s73, 0
    %s76 = sadd.s32 %s75, 1
    %s77 = scalar_select %p74, %s75, %s76
    %p80 = pneg %p74
    %p81 = scmp.eq.s32.totalorder %s13, 3
    %p82 = por %p80, %p81
    %p83 = scmp.ne.s32.totalorder %s75, %s78
    %p84 = scmp.eq.s32.totalorder %s13, 0
    %p85 = por %p83, %p84
    %p86 = scmp.ne.s32.totalorder %s75, %s78
    %p87 = scmp.eq.s32.totalorder %s18, 3
    %p88 = por %p86, %p87
    %p89 = scmp.ne.s32.totalorder %s78, %s79
    %p90 = scmp.eq.s32.totalorder %s18, 0
    %p91 = por %p89, %p90
    %p92 = scmp.ne.s32.totalorder %s78, %s79
    %p93 = scmp.eq.s32.totalorder %s19, 3
    %p94 = por %p92, %p93
    %p96 = scmp.ne.s32.totalorder %s79, %s95
    %p97 = scmp.eq.s32.totalorder %s19, 0
    %p98 = por %p96, %p97
    %s100 = sadd.s32 %s99, 1
    %p103 = scmp.eq.s32.totalorder %s13, 3
    %p104 = scmp.ne.s32.totalorder %s99, %s101
    %p105 = scmp.eq.s32.totalorder %s13, 0
    %p106 = por %p104, %p105
    %p107 = scmp.ne.s32.totalorder %s99, %s101
    %p108 = scmp.eq.s32.totalorder %s18, 3
    %p109 = por %p107, %p108
    %p110 = scmp.ne.s32.totalorder %s101, %s102
    %p111 = scmp.eq.s32.totalorder %s18, 0
    %p112 = por %p110, %p111
    %p113 = scmp.ne.s32.totalorder %s101, %s102
    %p114 = scmp.eq.s32.totalorder %s19, 3
    %p115 = por %p113, %p114
    %p117 = scmp.ne.s32.totalorder %s102, %s116
    %p118 = scmp.eq.s32.totalorder %s19, 0
    %p119 = por %p117, %p118
    %s121 = sadd.s32 %s120, 1
    %p124 = scmp.eq.s32.totalorder %s13, 3
    %p125 = scmp.ne.s32.totalorder %s120, %s122
    %p126 = scmp.eq.s32.totalorder %s13, 0
    %p127 = por %p125, %p126
    %p128 = scmp.ne.s32.totalorder %s120, %s122
    %p129 = scmp.eq.s32.totalorder %s18, 3
    %p130 = por %p128, %p129
    %p131 = scmp.ne.s32.totalorder %s122, %s123
    %p132 = scmp.eq.s32.totalorder %s18, 0
    %p133 = por %p131, %p132
    %p134 = scmp.ne.s32.totalorder %s122, %s123
    %p135 = scmp.eq.s32.totalorder %s19, 3
    %p136 = por %p134, %p135
    %p138 = scmp.ne.s32.totalorder %s123, %s137
    %p139 = scmp.eq.s32.totalorder %s19, 0
    %p140 = por %p138, %p139
    %s142 = sadd.s32 %s141, 1
    %p145 = scmp.eq.s32.totalorder %s13, 3
    %p146 = scmp.ne.s32.totalorder %s141, %s143
    %p147 = scmp.eq.s32.totalorder %s13, 0
    %p148 = por %p146, %p147
    %p149 = scmp.ne.s32.totalorder %s141, %s143
    %p150 = scmp.eq.s32.totalorder %s18, 3
    %p151 = por %p149, %p150
    %p152 = scmp.ne.s32.totalorder %s143, %s144
    %p153 = scmp.eq.s32.totalorder %s18, 0
    %p154 = por %p152, %p153
    %p155 = scmp.ne.s32.totalorder %s143, %s144
    %p156 = scmp.eq.s32.totalorder %s19, 3
    %p157 = por %p155, %p156
    %p159 = scmp.ne.s32.totalorder %s144, %s158
    %p160 = scmp.eq.s32.totalorder %s19, 0
    %p161 = por %p159, %p160
    %s163 = sadd.s32 %s162, 1
    %p166 = scmp.eq.s32.totalorder %s13, 3
    %p167 = scmp.ne.s32.totalorder %s162, %s164
    %p168 = scmp.eq.s32.totalorder %s13, 0
    %p169 = por %p167, %p168
    %p170 = scmp.ne.s32.totalorder %s162, %s164
    %p171 = scmp.eq.s32.totalorder %s18, 3
    %p172 = por %p170, %p171
    %p173 = scmp.ne.s32.totalorder %s164, %s165
    %p174 = scmp.eq.s32.totalorder %s18, 0
    %p175 = por %p173, %p174
    %p176 = scmp.ne.s32.totalorder %s164, %s165
    %p177 = scmp.eq.s32.totalorder %s19, 3
    %p178 = por %p176, %p177
    %p180 = scmp.ne.s32.totalorder %s165, %s179
    %p181 = scmp.eq.s32.totalorder %s19, 0
    %p182 = por %p180, %p181
    %s183 = ssub.s32 %s13, %s20
    %p184 = scmp.eq.s32.totalorder %s183, 0
    %s186 = sadd.s32 %s185, 1
    %s187 = scalar_select %p184, %s185, %s186
    %p190 = pneg %p184
    %p191 = scmp.eq.s32.totalorder %s13, 3
    %p192 = por %p190, %p191
    %p193 = scmp.ne.s32.totalorder %s185, %s188
    %p194 = scmp.eq.s32.totalorder %s13, 0
    %p195 = por %p193, %p194
    %p196 = scmp.ne.s32.totalorder %s185, %s188
    %p197 = scmp.eq.s32.totalorder %s18, 3
    %p198 = por %p196, %p197
    %p199 = scmp.ne.s32.totalorder %s188, %s189
    %p200 = scmp.eq.s32.totalorder %s18, 0
    %p201 = por %p199, %p200
    %p202 = scmp.ne.s32.totalorder %s188, %s189
    %p203 = scmp.eq.s32.totalorder %s19, 3
    %p204 = por %p202, %p203
    %p206 = scmp.ne.s32.totalorder %s189, %s205
    %p207 = scmp.eq.s32.totalorder %s19, 0
    %p208 = por %p206, %p207
    %p209 = scmp.le.s32.totalorder 1, %s13
    %p210 = scmp.lt.s32.totalorder %s13, 5
    %p211 = pnand %p209, %p210
    %p212 = pneg %p211
    // Predicated region
    $region9: #{multipart_segmentation_forward.4} parent=5 // pred_check
      _
    $region10: #{multipart_segmentation_forward.4} parent=5 // pred_check_branch
      %214 = sbr.rel (%p211) target = $region12
    $region11: #{multipart_segmentation_forward.4} parent=5 // pred_region
      %s215 = ssub.s32 %s13, 1
      // Predicated region
      $region13: #{multipart_segmentation_forward.4} parent=11 // pred_check
        %p216 = pneg %p112
      $region14: #{multipart_segmentation_forward.4} parent=11 // pred_check_branch
        %218 = sbr.rel (%p216) target = $region16
      $region15: #{multipart_segmentation_forward.4} parent=11 // pred_region
        _
      $region16: #{multipart_segmentation_forward.4} parent=11 // pred_fallthru
        _
      // Predicated region
      $region17: #{multipart_segmentation_forward.4} parent=11 // pred_check
        %p219 = pneg %p133
      $region18: #{multipart_segmentation_forward.4} parent=11 // pred_check_branch
        %221 = sbr.rel (%p219) target = $region20
      $region19: #{multipart_segmentation_forward.4} parent=11 // pred_region
        _
      $region20: #{multipart_segmentation_forward.4} parent=11 // pred_fallthru
        _
      // Predicated region
      $region21: #{multipart_segmentation_forward.4} parent=11 // pred_check
        %p222 = pneg %p154
      $region22: #{multipart_segmentation_forward.4} parent=11 // pred_check_branch
        %224 = sbr.rel (%p222) target = $region24
      $region23: #{multipart_segmentation_forward.4} parent=11 // pred_region
        _
      $region24: #{multipart_segmentation_forward.4} parent=11 // pred_fallthru
        _
      // Predicated region
      $region25: #{multipart_segmentation_forward.4} parent=11 // pred_check
        %p225 = pneg %p175
      $region26: #{multipart_segmentation_forward.4} parent=11 // pred_check_branch
        %227 = sbr.rel (%p225) target = $region28
      $region27: #{multipart_segmentation_forward.4} parent=11 // pred_region
        _
      $region28: #{multipart_segmentation_forward.4} parent=11 // pred_fallthru
        _
    $region12: #{multipart_segmentation_forward.4} parent=5 // pred_fallthru
      _
    %p228 = scmp.lt.s32.totalorder %s13, 4
    // Predicated region
    $region29: #{multipart_segmentation_forward.4} parent=5 // pred_check
      %p229 = pneg %p228
    $region30: #{multipart_segmentation_forward.4} parent=5 // pred_check_branch
      %231 = sbr.rel (%p229) target = $region32
    $region31: #{multipart_segmentation_forward.4} parent=5 // pred_region
      // Predicated region
      $region33: #{multipart_segmentation_forward.4} parent=31 // pred_check
        %p232 = pneg %p33
      $region34: #{multipart_segmentation_forward.4} parent=31 // pred_check_branch
        %234 = sbr.rel (%p232) target = $region36
      $region35: #{multipart_segmentation_forward.4} parent=31 // pred_region
        %s235 = smul.u32 64, %s13
        %p236 = scmp.lt.s32.totalorder %s235, 255
        %s237 = scalar_select %p236, %s235, 255
        %s238 = smul.addr %s237, 8
        %s239 = scalar_lea.vmem %s0, %s238
        %s240 = smul.u32 64, %s13
      $region36: #{multipart_segmentation_forward.4} parent=31 // pred_fallthru
        _
      // Predicated region
      $region37: #{multipart_segmentation_forward.4} parent=31 // pred_check
        %p241 = pneg %p59
      $region38: #{multipart_segmentation_forward.4} parent=31 // pred_check_branch
        %243 = sbr.rel (%p241) target = $region40
      $region39: #{multipart_segmentation_forward.4} parent=31 // pred_region
        %s244 = smul.u32 64, %s13
        %p245 = scmp.lt.s32.totalorder %s244, 255
        %s246 = scalar_select %p245, %s244, 255
        %s247 = smul.addr %s246, 8
        %s248 = scalar_lea.vmem %s1, %s247
        %s249 = smul.u32 64, %s13
      $region40: #{multipart_segmentation_forward.4} parent=31 // pred_fallthru
        _
      // Predicated region
      $region41: #{multipart_segmentation_forward.4} parent=31 // pred_check
        %p250 = pneg %p85
      $region42: #{multipart_segmentation_forward.4} parent=31 // pred_check_branch
        %252 = sbr.rel (%p250) target = $region44
      $region43: #{multipart_segmentation_forward.4} parent=31 // pred_region
        %s253 = smul.u32 8, %s13
        %p254 = scmp.lt.s32.totalorder %s253, 31
        %s255 = scalar_select %p254, %s253, 31
        %s256 = smul.addr %s255, 8
        %s257 = scalar_lea.vmem %s2, %s256
        %s258 = smul.u32 8, %s13
      $region44: #{multipart_segmentation_forward.4} parent=31 // pred_fallthru
        _
    $region32: #{multipart_segmentation_forward.4} parent=5 // pred_fallthru
      _
    %p259 = scmp.le.s32.totalorder 1, %s13
    %p260 = scmp.lt.s32.totalorder %s13, 5
    %p261 = pnand %p259, %p260
    %p262 = pneg %p261
    // Predicated region
    $region45: #{multipart_segmentation_forward.4} parent=5 // pred_check
      _
    $region46: #{multipart_segmentation_forward.4} parent=5 // pred_check_branch
      %264 = sbr.rel (%p261) target = $region48
    $region47: #{multipart_segmentation_forward.4} parent=5 // pred_region
      %s265 = ssub.s32 %s13, 1
      %s266 = smul.u32 64, %s18
      %p267 = scmp.lt.s32.totalorder %s266, 255
      %s268 = scalar_select %p267, %s266, 255
      %s269 = smul.addr %s268, 8
      %s270 = scalar_lea.vmem %s0, %s269
      %p271 = pneg %p39
      %p272 = pneg %p36
      %s273 = smul.u32 64, %s18
      %p274 = scmp.lt.s32.totalorder %s273, 255
      %s275 = scalar_select %p274, %s273, 255
      %s276 = smul.addr %s275, 8
      %s277 = scalar_lea.vmem %s1, %s276
      %p278 = pneg %p65
      %p279 = pneg %p62
      %s280 = smul.u32 8, %s18
      %p281 = scmp.lt.s32.totalorder %s280, 31
      %s282 = scalar_select %p281, %s280, 31
      %s283 = smul.addr %s282, 8
      %s284 = scalar_lea.vmem %s2, %s283
      %p285 = pneg %p91
      %p286 = pneg %p88
      %p287 = pneg %p112
      %p288 = pneg %p109
      %p289 = pneg %p133
      %p290 = pneg %p130
      %p291 = pneg %p154
      %p292 = pneg %p151
      %p293 = pneg %p175
      %p294 = pneg %p172
      %p295 = pneg %p201
      %p296 = pneg %p198
      %s297 = smul.u32 8, %s18
      %p298 = scmp.lt.s32.totalorder %s297, 31
      %s299 = scalar_select %p298, %s297, 31
      %s300 = smul.addr %s299, 8
      %s301 = scalar_lea.vmem %s7, %s300
      %s302 = smul.u32 64, %s18
      %p303 = scmp.lt.s32.totalorder %s302, 255
      %s304 = scalar_select %p303, %s302, 255
      %s305 = smul.addr %s304, 8
      %s306 = scalar_lea.vmem %s0, %s305
      %s307 = smul.u32 64, %s18
      %s308 = smul.u32 64, %s18
      %p309 = scmp.lt.s32.totalorder %s308, 255
      %s310 = scalar_select %p309, %s308, 255
      %s311 = smul.addr %s310, 8
      %s312 = scalar_lea.vmem %s1, %s311
      %s313 = smul.u32 64, %s18
      %s314 = smul.u32 8, %s18
      %p315 = scmp.lt.s32.totalorder %s314, 31
      %s316 = scalar_select %p315, %s314, 31
      %s317 = smul.addr %s316, 8
      %s318 = scalar_lea.vmem %s2, %s317
      %s319 = smul.u32 8, %s18
      %s320 = smul.u32 8, %s18
      %p321 = scmp.lt.s32.totalorder %s320, 31
      %s322 = scalar_select %p321, %s320, 31
      %s323 = smul.addr %s322, 8
      %s324 = scalar_lea.vmem %s7, %s323
      %s325 = smul.u32 8, %s18
      %v327 = vld [vmem:[%s306] sm:$0xff]
      %v328 = vld [vmem:[%s306 + $0x8] sm:$0xff]
      %v329 = vld [vmem:[%s306 + $0x10] sm:$0xff]
      %v330 = vld [vmem:[%s306 + $0x18] sm:$0xff]
      %v331 = vld [vmem:[%s306 + $0x20] sm:$0xff]
      %v332 = vld [vmem:[%s306 + $0x28] sm:$0xff]
      %v333 = vld [vmem:[%s306 + $0x30] sm:$0xff]
      %v334 = vld [vmem:[%s306 + $0x38] sm:$0xff]
      %v335 = vld [vmem:[%s306 + $0x40] sm:$0xff]
      %v336 = vld [vmem:[%s306 + $0x48] sm:$0xff]
      %v337 = vld [vmem:[%s306 + $0x50] sm:$0xff]
      %v338 = vld [vmem:[%s306 + $0x58] sm:$0xff]
      %v339 = vld [vmem:[%s306 + $0x60] sm:$0xff]
      %v340 = vld [vmem:[%s306 + $0x68] sm:$0xff]
      %v341 = vld [vmem:[%s306 + $0x70] sm:$0xff]
      %v342 = vld [vmem:[%s306 + $0x78] sm:$0xff]
      %v343 = vld [vmem:[%s306 + $0x80] sm:$0xff]
      %v344 = vld [vmem:[%s306 + $0x88] sm:$0xff]
      %v345 = vld [vmem:[%s306 + $0x90] sm:$0xff]
      %v346 = vld [vmem:[%s306 + $0x98] sm:$0xff]
      %v347 = vld [vmem:[%s306 + $0xa0] sm:$0xff]
      %v348 = vld [vmem:[%s306 + $0xa8] sm:$0xff]
      %v349 = vld [vmem:[%s306 + $0xb0] sm:$0xff]
      %v350 = vld [vmem:[%s306 + $0xb8] sm:$0xff]
      %v351 = vld [vmem:[%s306 + $0xc0] sm:$0xff]
      %v352 = vld [vmem:[%s306 + $0xc8] sm:$0xff]
      %v353 = vld [vmem:[%s306 + $0xd0] sm:$0xff]
      %v354 = vld [vmem:[%s306 + $0xd8] sm:$0xff]
      %v355 = vld [vmem:[%s306 + $0xe0] sm:$0xff]
      %v356 = vld [vmem:[%s306 + $0xe8] sm:$0xff]
      %v357 = vld [vmem:[%s306 + $0xf0] sm:$0xff]
      %v358 = vld [vmem:[%s306 + $0xf8] sm:$0xff]
      %v359 = vld [vmem:[%s306 + $0x100] sm:$0xff]
      %v360 = vld [vmem:[%s306 + $0x108] sm:$0xff]
      %v361 = vld [vmem:[%s306 + $0x110] sm:$0xff]
      %v362 = vld [vmem:[%s306 + $0x118] sm:$0xff]
      %v363 = vld [vmem:[%s306 + $0x120] sm:$0xff]
      %v364 = vld [vmem:[%s306 + $0x128] sm:$0xff]
      %v365 = vld [vmem:[%s306 + $0x130] sm:$0xff]
      %v366 = vld [vmem:[%s306 + $0x138] sm:$0xff]
      %v367 = vld [vmem:[%s306 + $0x140] sm:$0xff]
      %v368 = vld [vmem:[%s306 + $0x148] sm:$0xff]
      %v369 = vld [vmem:[%s306 + $0x150] sm:$0xff]
      %v370 = vld [vmem:[%s306 + $0x158] sm:$0xff]
      %v371 = vld [vmem:[%s306 + $0x160] sm:$0xff]
      %v372 = vld [vmem:[%s306 + $0x168] sm:$0xff]
      %v373 = vld [vmem:[%s306 + $0x170] sm:$0xff]
      %v374 = vld [vmem:[%s306 + $0x178] sm:$0xff]
      %v375 = vld [vmem:[%s306 + $0x180] sm:$0xff]
      %v376 = vld [vmem:[%s306 + $0x188] sm:$0xff]
      %v377 = vld [vmem:[%s306 + $0x190] sm:$0xff]
      %v378 = vld [vmem:[%s306 + $0x198] sm:$0xff]
      %v379 = vld [vmem:[%s306 + $0x1a0] sm:$0xff]
      %v380 = vld [vmem:[%s306 + $0x1a8] sm:$0xff]
      %v381 = vld [vmem:[%s306 + $0x1b0] sm:$0xff]
      %v382 = vld [vmem:[%s306 + $0x1b8] sm:$0xff]
      %v383 = vld [vmem:[%s306 + $0x1c0] sm:$0xff]
      %v384 = vld [vmem:[%s306 + $0x1c8] sm:$0xff]
      %v385 = vld [vmem:[%s306 + $0x1d0] sm:$0xff]
      %v386 = vld [vmem:[%s306 + $0x1d8] sm:$0xff]
      %v387 = vld [vmem:[%s306 + $0x1e0] sm:$0xff]
      %v388 = vld [vmem:[%s306 + $0x1e8] sm:$0xff]
      %v389 = vld [vmem:[%s306 + $0x1f0] sm:$0xff]
      %v390 = vld [vmem:[%s306 + $0x1f8] sm:$0xff]
      %v391 = vld [vmem:[%s312] sm:$0xff]
      %v392 = vld [vmem:[%s312 + $0x8] sm:$0xff]
      %v393 = vld [vmem:[%s312 + $0x10] sm:$0xff]
      %v394 = vld [vmem:[%s312 + $0x18] sm:$0xff]
      %v395 = vld [vmem:[%s312 + $0x20] sm:$0xff]
      %v396 = vld [vmem:[%s312 + $0x28] sm:$0xff]
      %v397 = vld [vmem:[%s312 + $0x30] sm:$0xff]
      %v398 = vld [vmem:[%s312 + $0x38] sm:$0xff]
      %v399 = vld [vmem:[%s312 + $0x40] sm:$0xff]
      %v400 = vld [vmem:[%s312 + $0x48] sm:$0xff]
      %v401 = vld [vmem:[%s312 + $0x50] sm:$0xff]
      %v402 = vld [vmem:[%s312 + $0x58] sm:$0xff]
      %v403 = vld [vmem:[%s312 + $0x60] sm:$0xff]
      %v404 = vld [vmem:[%s312 + $0x68] sm:$0xff]
      %v405 = vld [vmem:[%s312 + $0x70] sm:$0xff]
      %v406 = vld [vmem:[%s312 + $0x78] sm:$0xff]
      %v407 = vld [vmem:[%s312 + $0x80] sm:$0xff]
      %v408 = vld [vmem:[%s312 + $0x88] sm:$0xff]
      %v409 = vld [vmem:[%s312 + $0x90] sm:$0xff]
      %v410 = vld [vmem:[%s312 + $0x98] sm:$0xff]
      %v411 = vld [vmem:[%s312 + $0xa0] sm:$0xff]
      %v412 = vld [vmem:[%s312 + $0xa8] sm:$0xff]
      %v413 = vld [vmem:[%s312 + $0xb0] sm:$0xff]
      %v414 = vld [vmem:[%s312 + $0xb8] sm:$0xff]
      %v415 = vld [vmem:[%s312 + $0xc0] sm:$0xff]
      %v416 = vld [vmem:[%s312 + $0xc8] sm:$0xff]
      %v417 = vld [vmem:[%s312 + $0xd0] sm:$0xff]
      %v418 = vld [vmem:[%s312 + $0xd8] sm:$0xff]
      %v419 = vld [vmem:[%s312 + $0xe0] sm:$0xff]
      %v420 = vld [vmem:[%s312 + $0xe8] sm:$0xff]
      %v421 = vld [vmem:[%s312 + $0xf0] sm:$0xff]
      %v422 = vld [vmem:[%s312 + $0xf8] sm:$0xff]
      %v423 = vld [vmem:[%s312 + $0x100] sm:$0xff]
      %v424 = vld [vmem:[%s312 + $0x108] sm:$0xff]
      %v425 = vld [vmem:[%s312 + $0x110] sm:$0xff]
      %v426 = vld [vmem:[%s312 + $0x118] sm:$0xff]
      %v427 = vld [vmem:[%s312 + $0x120] sm:$0xff]
      %v428 = vld [vmem:[%s312 + $0x128] sm:$0xff]
      %v429 = vld [vmem:[%s312 + $0x130] sm:$0xff]
      %v430 = vld [vmem:[%s312 + $0x138] sm:$0xff]
      %v431 = vld [vmem:[%s312 + $0x140] sm:$0xff]
      %v432 = vld [vmem:[%s312 + $0x148] sm:$0xff]
      %v433 = vld [vmem:[%s312 + $0x150] sm:$0xff]
      %v434 = vld [vmem:[%s312 + $0x158] sm:$0xff]
      %v435 = vld [vmem:[%s312 + $0x160] sm:$0xff]
      %v436 = vld [vmem:[%s312 + $0x168] sm:$0xff]
      %v437 = vld [vmem:[%s312 + $0x170] sm:$0xff]
      %v438 = vld [vmem:[%s312 + $0x178] sm:$0xff]
      %v439 = vld [vmem:[%s312 + $0x180] sm:$0xff]
      %v440 = vld [vmem:[%s312 + $0x188] sm:$0xff]
      %v441 = vld [vmem:[%s312 + $0x190] sm:$0xff]
      %v442 = vld [vmem:[%s312 + $0x198] sm:$0xff]
      %v443 = vld [vmem:[%s312 + $0x1a0] sm:$0xff]
      %v444 = vld [vmem:[%s312 + $0x1a8] sm:$0xff]
      %v445 = vld [vmem:[%s312 + $0x1b0] sm:$0xff]
      %v446 = vld [vmem:[%s312 + $0x1b8] sm:$0xff]
      %v447 = vld [vmem:[%s312 + $0x1c0] sm:$0xff]
      %v448 = vld [vmem:[%s312 + $0x1c8] sm:$0xff]
      %v449 = vld [vmem:[%s312 + $0x1d0] sm:$0xff]
      %v450 = vld [vmem:[%s312 + $0x1d8] sm:$0xff]
      %v451 = vld [vmem:[%s312 + $0x1e0] sm:$0xff]
      %v452 = vld [vmem:[%s312 + $0x1e8] sm:$0xff]
      %v453 = vld [vmem:[%s312 + $0x1f0] sm:$0xff]
      %v454 = vld [vmem:[%s312 + $0x1f8] sm:$0xff]
      %v455 = vmul.f32 %v327, %v391
      %v456 = vmul.f32 %v328, %v392
      %v457 = vmul.f32 %v329, %v393
      %v458 = vmul.f32 %v330, %v394
      %v459 = vmul.f32 %v331, %v395
      %v460 = vmul.f32 %v332, %v396
      %v461 = vmul.f32 %v333, %v397
      %v462 = vmul.f32 %v334, %v398
      %v463 = vmul.f32 %v335, %v399
      %v464 = vmul.f32 %v336, %v400
      %v465 = vmul.f32 %v337, %v401
      %v466 = vmul.f32 %v338, %v402
      %v467 = vmul.f32 %v339, %v403
      %v468 = vmul.f32 %v340, %v404
      %v469 = vmul.f32 %v341, %v405
      %v470 = vmul.f32 %v342, %v406
      %v471 = vmul.f32 %v343, %v407
      %v472 = vmul.f32 %v344, %v408
      %v473 = vmul.f32 %v345, %v409
      %v474 = vmul.f32 %v346, %v410
      %v475 = vmul.f32 %v347, %v411
      %v476 = vmul.f32 %v348, %v412
      %v477 = vmul.f32 %v349, %v413
      %v478 = vmul.f32 %v350, %v414
      %v479 = vmul.f32 %v351, %v415
      %v480 = vmul.f32 %v352, %v416
      %v481 = vmul.f32 %v353, %v417
      %v482 = vmul.f32 %v354, %v418
      %v483 = vmul.f32 %v355, %v419
      %v484 = vmul.f32 %v356, %v420
      %v485 = vmul.f32 %v357, %v421
      %v486 = vmul.f32 %v358, %v422
      %v487 = vmul.f32 %v359, %v423
      %v488 = vmul.f32 %v360, %v424
      %v489 = vmul.f32 %v361, %v425
      %v490 = vmul.f32 %v362, %v426
      %v491 = vmul.f32 %v363, %v427
      %v492 = vmul.f32 %v364, %v428
      %v493 = vmul.f32 %v365, %v429
      %v494 = vmul.f32 %v366, %v430
      %v495 = vmul.f32 %v367, %v431
      %v496 = vmul.f32 %v368, %v432
      %v497 = vmul.f32 %v369, %v433
      %v498 = vmul.f32 %v370, %v434
      %v499 = vmul.f32 %v371, %v435
      %v500 = vmul.f32 %v372, %v436
      %v501 = vmul.f32 %v373, %v437
      %v502 = vmul.f32 %v374, %v438
      %v503 = vmul.f32 %v375, %v439
      %v504 = vmul.f32 %v376, %v440
      %v505 = vmul.f32 %v377, %v441
      %v506 = vmul.f32 %v378, %v442
      %v507 = vmul.f32 %v379, %v443
      %v508 = vmul.f32 %v380, %v444
      %v509 = vmul.f32 %v381, %v445
      %v510 = vmul.f32 %v382, %v446
      %v511 = vmul.f32 %v383, %v447
      %v512 = vmul.f32 %v384, %v448
      %v513 = vmul.f32 %v385, %v449
      %v514 = vmul.f32 %v386, %v450
      %v515 = vmul.f32 %v387, %v451
      %v516 = vmul.f32 %v388, %v452
      %v517 = vmul.f32 %v389, %v453
      %v518 = vmul.f32 %v390, %v454
      %vm519 = vcmask 195584
      %v520 = vsel %vm519, %v455, 0.0
      %v521 = vrot.slane %v520, 4
      %v522 = vadd.f32 %v520, %v521
      %v523 = vrot.slane %v522, 2
      %v524 = vadd.f32 %v522, %v523
      %v525 = vrot.slane %v524, 1
      %v526 = vadd.f32 %v524, %v525
      %v527 = vsel %vm519, %v456, 0.0
      %v528 = vrot.slane %v527, 4
      %v529 = vadd.f32 %v527, %v528
      %v530 = vrot.slane %v529, 2
      %v531 = vadd.f32 %v529, %v530
      %v532 = vrot.slane %v531, 1
      %v533 = vadd.f32 %v531, %v532
      %v534 = vsel %vm519, %v457, 0.0
      %v535 = vrot.slane %v534, 4
      %v536 = vadd.f32 %v534, %v535
      %v537 = vrot.slane %v536, 2
      %v538 = vadd.f32 %v536, %v537
      %v539 = vrot.slane %v538, 1
      %v540 = vadd.f32 %v538, %v539
      %v541 = vsel %vm519, %v458, 0.0
      %v542 = vrot.slane %v541, 4
      %v543 = vadd.f32 %v541, %v542
      %v544 = vrot.slane %v543, 2
      %v545 = vadd.f32 %v543, %v544
      %v546 = vrot.slane %v545, 1
      %v547 = vadd.f32 %v545, %v546
      %v548 = vsel %vm519, %v459, 0.0
      %v549 = vrot.slane %v548, 4
      %v550 = vadd.f32 %v548, %v549
      %v551 = vrot.slane %v550, 2
      %v552 = vadd.f32 %v550, %v551
      %v553 = vrot.slane %v552, 1
      %v554 = vadd.f32 %v552, %v553
      %v555 = vsel %vm519, %v460, 0.0
      %v556 = vrot.slane %v555, 4
      %v557 = vadd.f32 %v555, %v556
      %v558 = vrot.slane %v557, 2
      %v559 = vadd.f32 %v557, %v558
      %v560 = vrot.slane %v559, 1
      %v561 = vadd.f32 %v559, %v560
      %v562 = vsel %vm519, %v461, 0.0
      %v563 = vrot.slane %v562, 4
      %v564 = vadd.f32 %v562, %v563
      %v565 = vrot.slane %v564, 2
      %v566 = vadd.f32 %v564, %v565
      %v567 = vrot.slane %v566, 1
      %v568 = vadd.f32 %v566, %v567
      %v569 = vsel %vm519, %v462, 0.0
      %v570 = vrot.slane %v569, 4
      %v571 = vadd.f32 %v569, %v570
      %v572 = vrot.slane %v571, 2
      %v573 = vadd.f32 %v571, %v572
      %v574 = vrot.slane %v573, 1
      %v575 = vadd.f32 %v573, %v574
      %v576 = vsel %vm519, %v463, 0.0
      %v577 = vrot.slane %v576, 4
      %v578 = vadd.f32 %v576, %v577
      %v579 = vrot.slane %v578, 2
      %v580 = vadd.f32 %v578, %v579
      %v581 = vrot.slane %v580, 1
      %v582 = vadd.f32 %v580, %v581
      %v583 = vsel %vm519, %v464, 0.0
      %v584 = vrot.slane %v583, 4
      %v585 = vadd.f32 %v583, %v584
      %v586 = vrot.slane %v585, 2
      %v587 = vadd.f32 %v585, %v586
      %v588 = vrot.slane %v587, 1
      %v589 = vadd.f32 %v587, %v588
      %v590 = vsel %vm519, %v465, 0.0
      %v591 = vrot.slane %v590, 4
      %v592 = vadd.f32 %v590, %v591
      %v593 = vrot.slane %v592, 2
      %v594 = vadd.f32 %v592, %v593
      %v595 = vrot.slane %v594, 1
      %v596 = vadd.f32 %v594, %v595
      %v597 = vsel %vm519, %v466, 0.0
      %v598 = vrot.slane %v597, 4
      %v599 = vadd.f32 %v597, %v598
      %v600 = vrot.slane %v599, 2
      %v601 = vadd.f32 %v599, %v600
      %v602 = vrot.slane %v601, 1
      %v603 = vadd.f32 %v601, %v602
      %v604 = vsel %vm519, %v467, 0.0
      %v605 = vrot.slane %v604, 4
      %v606 = vadd.f32 %v604, %v605
      %v607 = vrot.slane %v606, 2
      %v608 = vadd.f32 %v606, %v607
      %v609 = vrot.slane %v608, 1
      %v610 = vadd.f32 %v608, %v609
      %v611 = vsel %vm519, %v468, 0.0
      %v612 = vrot.slane %v611, 4
      %v613 = vadd.f32 %v611, %v612
      %v614 = vrot.slane %v613, 2
      %v615 = vadd.f32 %v613, %v614
      %v616 = vrot.slane %v615, 1
      %v617 = vadd.f32 %v615, %v616
      %v618 = vsel %vm519, %v469, 0.0
      %v619 = vrot.slane %v618, 4
      %v620 = vadd.f32 %v618, %v619
      %v621 = vrot.slane %v620, 2
      %v622 = vadd.f32 %v620, %v621
      %v623 = vrot.slane %v622, 1
      %v624 = vadd.f32 %v622, %v623
      %v625 = vsel %vm519, %v470, 0.0
      %v626 = vrot.slane %v625, 4
      %v627 = vadd.f32 %v625, %v626
      %v628 = vrot.slane %v627, 2
      %v629 = vadd.f32 %v627, %v628
      %v630 = vrot.slane %v629, 1
      %v631 = vadd.f32 %v629, %v630
      %v632 = vsel %vm519, %v471, 0.0
      %v633 = vrot.slane %v632, 4
      %v634 = vadd.f32 %v632, %v633
      %v635 = vrot.slane %v634, 2
      %v636 = vadd.f32 %v634, %v635
      %v637 = vrot.slane %v636, 1
      %v638 = vadd.f32 %v636, %v637
      %v639 = vsel %vm519, %v472, 0.0
      %v640 = vrot.slane %v639, 4
      %v641 = vadd.f32 %v639, %v640
      %v642 = vrot.slane %v641, 2
      %v643 = vadd.f32 %v641, %v642
      %v644 = vrot.slane %v643, 1
      %v645 = vadd.f32 %v643, %v644
      %v646 = vsel %vm519, %v473, 0.0
      %v647 = vrot.slane %v646, 4
      %v648 = vadd.f32 %v646, %v647
      %v649 = vrot.slane %v648, 2
      %v650 = vadd.f32 %v648, %v649
      %v651 = vrot.slane %v650, 1
      %v652 = vadd.f32 %v650, %v651
      %v653 = vsel %vm519, %v474, 0.0
      %v654 = vrot.slane %v653, 4
      %v655 = vadd.f32 %v653, %v654
      %v656 = vrot.slane %v655, 2
      %v657 = vadd.f32 %v655, %v656
      %v658 = vrot.slane %v657, 1
      %v659 = vadd.f32 %v657, %v658
      %v660 = vsel %vm519, %v475, 0.0
      %v661 = vrot.slane %v660, 4
      %v662 = vadd.f32 %v660, %v661
      %v663 = vrot.slane %v662, 2
      %v664 = vadd.f32 %v662, %v663
      %v665 = vrot.slane %v664, 1
      %v666 = vadd.f32 %v664, %v665
      %v667 = vsel %vm519, %v476, 0.0
      %v668 = vrot.slane %v667, 4
      %v669 = vadd.f32 %v667, %v668
      %v670 = vrot.slane %v669, 2
      %v671 = vadd.f32 %v669, %v670
      %v672 = vrot.slane %v671, 1
      %v673 = vadd.f32 %v671, %v672
      %v674 = vsel %vm519, %v477, 0.0
      %v675 = vrot.slane %v674, 4
      %v676 = vadd.f32 %v674, %v675
      %v677 = vrot.slane %v676, 2
      %v678 = vadd.f32 %v676, %v677
      %v679 = vrot.slane %v678, 1
      %v680 = vadd.f32 %v678, %v679
      %v681 = vsel %vm519, %v478, 0.0
      %v682 = vrot.slane %v681, 4
      %v683 = vadd.f32 %v681, %v682
      %v684 = vrot.slane %v683, 2
      %v685 = vadd.f32 %v683, %v684
      %v686 = vrot.slane %v685, 1
      %v687 = vadd.f32 %v685, %v686
      %v688 = vsel %vm519, %v479, 0.0
      %v689 = vrot.slane %v688, 4
      %v690 = vadd.f32 %v688, %v689
      %v691 = vrot.slane %v690, 2
      %v692 = vadd.f32 %v690, %v691
      %v693 = vrot.slane %v692, 1
      %v694 = vadd.f32 %v692, %v693
      %v695 = vsel %vm519, %v480, 0.0
      %v696 = vrot.slane %v695, 4
      %v697 = vadd.f32 %v695, %v696
      %v698 = vrot.slane %v697, 2
      %v699 = vadd.f32 %v697, %v698
      %v700 = vrot.slane %v699, 1
      %v701 = vadd.f32 %v699, %v700
      %v702 = vsel %vm519, %v481, 0.0
      %v703 = vrot.slane %v702, 4
      %v704 = vadd.f32 %v702, %v703
      %v705 = vrot.slane %v704, 2
      %v706 = vadd.f32 %v704, %v705
      %v707 = vrot.slane %v706, 1
      %v708 = vadd.f32 %v706, %v707
      %v709 = vsel %vm519, %v482, 0.0
      %v710 = vrot.slane %v709, 4
      %v711 = vadd.f32 %v709, %v710
      %v712 = vrot.slane %v711, 2
      %v713 = vadd.f32 %v711, %v712
      %v714 = vrot.slane %v713, 1
      %v715 = vadd.f32 %v713, %v714
      %v716 = vsel %vm519, %v483, 0.0
      %v717 = vrot.slane %v716, 4
      %v718 = vadd.f32 %v716, %v717
      %v719 = vrot.slane %v718, 2
      %v720 = vadd.f32 %v718, %v719
      %v721 = vrot.slane %v720, 1
      %v722 = vadd.f32 %v720, %v721
      %v723 = vsel %vm519, %v484, 0.0
      %v724 = vrot.slane %v723, 4
      %v725 = vadd.f32 %v723, %v724
      %v726 = vrot.slane %v725, 2
      %v727 = vadd.f32 %v725, %v726
      %v728 = vrot.slane %v727, 1
      %v729 = vadd.f32 %v727, %v728
      %v730 = vsel %vm519, %v485, 0.0
      %v731 = vrot.slane %v730, 4
      %v732 = vadd.f32 %v730, %v731
      %v733 = vrot.slane %v732, 2
      %v734 = vadd.f32 %v732, %v733
      %v735 = vrot.slane %v734, 1
      %v736 = vadd.f32 %v734, %v735
      %v737 = vsel %vm519, %v486, 0.0
      %v738 = vrot.slane %v737, 4
      %v739 = vadd.f32 %v737, %v738
      %v740 = vrot.slane %v739, 2
      %v741 = vadd.f32 %v739, %v740
      %v742 = vrot.slane %v741, 1
      %v743 = vadd.f32 %v741, %v742
      %v744 = vsel %vm519, %v487, 0.0
      %v745 = vrot.slane %v744, 4
      %v746 = vadd.f32 %v744, %v745
      %v747 = vrot.slane %v746, 2
      %v748 = vadd.f32 %v746, %v747
      %v749 = vrot.slane %v748, 1
      %v750 = vadd.f32 %v748, %v749
      %v751 = vsel %vm519, %v488, 0.0
      %v752 = vrot.slane %v751, 4
      %v753 = vadd.f32 %v751, %v752
      %v754 = vrot.slane %v753, 2
      %v755 = vadd.f32 %v753, %v754
      %v756 = vrot.slane %v755, 1
      %v757 = vadd.f32 %v755, %v756
      %v758 = vsel %vm519, %v489, 0.0
      %v759 = vrot.slane %v758, 4
      %v760 = vadd.f32 %v758, %v759
      %v761 = vrot.slane %v760, 2
      %v762 = vadd.f32 %v760, %v761
      %v763 = vrot.slane %v762, 1
      %v764 = vadd.f32 %v762, %v763
      %v765 = vsel %vm519, %v490, 0.0
      %v766 = vrot.slane %v765, 4
      %v767 = vadd.f32 %v765, %v766
      %v768 = vrot.slane %v767, 2
      %v769 = vadd.f32 %v767, %v768
      %v770 = vrot.slane %v769, 1
      %v771 = vadd.f32 %v769, %v770
      %v772 = vsel %vm519, %v491, 0.0
      %v773 = vrot.slane %v772, 4
      %v774 = vadd.f32 %v772, %v773
      %v775 = vrot.slane %v774, 2
      %v776 = vadd.f32 %v774, %v775
      %v777 = vrot.slane %v776, 1
      %v778 = vadd.f32 %v776, %v777
      %v779 = vsel %vm519, %v492, 0.0
      %v780 = vrot.slane %v779, 4
      %v781 = vadd.f32 %v779, %v780
      %v782 = vrot.slane %v781, 2
      %v783 = vadd.f32 %v781, %v782
      %v784 = vrot.slane %v783, 1
      %v785 = vadd.f32 %v783, %v784
      %v786 = vsel %vm519, %v493, 0.0
      %v787 = vrot.slane %v786, 4
      %v788 = vadd.f32 %v786, %v787
      %v789 = vrot.slane %v788, 2
      %v790 = vadd.f32 %v788, %v789
      %v791 = vrot.slane %v790, 1
      %v792 = vadd.f32 %v790, %v791
      %v793 = vsel %vm519, %v494, 0.0
      %v794 = vrot.slane %v793, 4
      %v795 = vadd.f32 %v793, %v794
      %v796 = vrot.slane %v795, 2
      %v797 = vadd.f32 %v795, %v796
      %v798 = vrot.slane %v797, 1
      %v799 = vadd.f32 %v797, %v798
      %v800 = vsel %vm519, %v495, 0.0
      %v801 = vrot.slane %v800, 4
      %v802 = vadd.f32 %v800, %v801
      %v803 = vrot.slane %v802, 2
      %v804 = vadd.f32 %v802, %v803
      %v805 = vrot.slane %v804, 1
      %v806 = vadd.f32 %v804, %v805
      %v807 = vsel %vm519, %v496, 0.0
      %v808 = vrot.slane %v807, 4
      %v809 = vadd.f32 %v807, %v808
      %v810 = vrot.slane %v809, 2
      %v811 = vadd.f32 %v809, %v810
      %v812 = vrot.slane %v811, 1
      %v813 = vadd.f32 %v811, %v812
      %v814 = vsel %vm519, %v497, 0.0
      %v815 = vrot.slane %v814, 4
      %v816 = vadd.f32 %v814, %v815
      %v817 = vrot.slane %v816, 2
      %v818 = vadd.f32 %v816, %v817
      %v819 = vrot.slane %v818, 1
      %v820 = vadd.f32 %v818, %v819
      %v821 = vsel %vm519, %v498, 0.0
      %v822 = vrot.slane %v821, 4
      %v823 = vadd.f32 %v821, %v822
      %v824 = vrot.slane %v823, 2
      %v825 = vadd.f32 %v823, %v824
      %v826 = vrot.slane %v825, 1
      %v827 = vadd.f32 %v825, %v826
      %v828 = vsel %vm519, %v499, 0.0
      %v829 = vrot.slane %v828, 4
      %v830 = vadd.f32 %v828, %v829
      %v831 = vrot.slane %v830, 2
      %v832 = vadd.f32 %v830, %v831
      %v833 = vrot.slane %v832, 1
      %v834 = vadd.f32 %v832, %v833
      %v835 = vsel %vm519, %v500, 0.0
      %v836 = vrot.slane %v835, 4
      %v837 = vadd.f32 %v835, %v836
      %v838 = vrot.slane %v837, 2
      %v839 = vadd.f32 %v837, %v838
      %v840 = vrot.slane %v839, 1
      %v841 = vadd.f32 %v839, %v840
      %v842 = vsel %vm519, %v501, 0.0
      %v843 = vrot.slane %v842, 4
      %v844 = vadd.f32 %v842, %v843
      %v845 = vrot.slane %v844, 2
      %v846 = vadd.f32 %v844, %v845
      %v847 = vrot.slane %v846, 1
      %v848 = vadd.f32 %v846, %v847
      %v849 = vsel %vm519, %v502, 0.0
      %v850 = vrot.slane %v849, 4
      %v851 = vadd.f32 %v849, %v850
      %v852 = vrot.slane %v851, 2
      %v853 = vadd.f32 %v851, %v852
      %v854 = vrot.slane %v853, 1
      %v855 = vadd.f32 %v853, %v854
      %v856 = vsel %vm519, %v503, 0.0
      %v857 = vrot.slane %v856, 4
      %v858 = vadd.f32 %v856, %v857
      %v859 = vrot.slane %v858, 2
      %v860 = vadd.f32 %v858, %v859
      %v861 = vrot.slane %v860, 1
      %v862 = vadd.f32 %v860, %v861
      %v863 = vsel %vm519, %v504, 0.0
      %v864 = vrot.slane %v863, 4
      %v865 = vadd.f32 %v863, %v864
      %v866 = vrot.slane %v865, 2
      %v867 = vadd.f32 %v865, %v866
      %v868 = vrot.slane %v867, 1
      %v869 = vadd.f32 %v867, %v868
      %v870 = vsel %vm519, %v505, 0.0
      %v871 = vrot.slane %v870, 4
      %v872 = vadd.f32 %v870, %v871
      %v873 = vrot.slane %v872, 2
      %v874 = vadd.f32 %v872, %v873
      %v875 = vrot.slane %v874, 1
      %v876 = vadd.f32 %v874, %v875
      %v877 = vsel %vm519, %v506, 0.0
      %v878 = vrot.slane %v877, 4
      %v879 = vadd.f32 %v877, %v878
      %v880 = vrot.slane %v879, 2
      %v881 = vadd.f32 %v879, %v880
      %v882 = vrot.slane %v881, 1
      %v883 = vadd.f32 %v881, %v882
      %v884 = vsel %vm519, %v507, 0.0
      %v885 = vrot.slane %v884, 4
      %v886 = vadd.f32 %v884, %v885
      %v887 = vrot.slane %v886, 2
      %v888 = vadd.f32 %v886, %v887
      %v889 = vrot.slane %v888, 1
      %v890 = vadd.f32 %v888, %v889
      %v891 = vsel %vm519, %v508, 0.0
      %v892 = vrot.slane %v891, 4
      %v893 = vadd.f32 %v891, %v892
      %v894 = vrot.slane %v893, 2
      %v895 = vadd.f32 %v893, %v894
      %v896 = vrot.slane %v895, 1
      %v897 = vadd.f32 %v895, %v896
      %v898 = vsel %vm519, %v509, 0.0
      %v899 = vrot.slane %v898, 4
      %v900 = vadd.f32 %v898, %v899
      %v901 = vrot.slane %v900, 2
      %v902 = vadd.f32 %v900, %v901
      %v903 = vrot.slane %v902, 1
      %v904 = vadd.f32 %v902, %v903
      %v905 = vsel %vm519, %v510, 0.0
      %v906 = vrot.slane %v905, 4
      %v907 = vadd.f32 %v905, %v906
      %v908 = vrot.slane %v907, 2
      %v909 = vadd.f32 %v907, %v908
      %v910 = vrot.slane %v909, 1
      %v911 = vadd.f32 %v909, %v910
      %v912 = vsel %vm519, %v511, 0.0
      %v913 = vrot.slane %v912, 4
      %v914 = vadd.f32 %v912, %v913
      %v915 = vrot.slane %v914, 2
      %v916 = vadd.f32 %v914, %v915
      %v917 = vrot.slane %v916, 1
      %v918 = vadd.f32 %v916, %v917
      %v919 = vsel %vm519, %v512, 0.0
      %v920 = vrot.slane %v919, 4
      %v921 = vadd.f32 %v919, %v920
      %v922 = vrot.slane %v921, 2
      %v923 = vadd.f32 %v921, %v922
      %v924 = vrot.slane %v923, 1
      %v925 = vadd.f32 %v923, %v924
      %v926 = vsel %vm519, %v513, 0.0
      %v927 = vrot.slane %v926, 4
      %v928 = vadd.f32 %v926, %v927
      %v929 = vrot.slane %v928, 2
      %v930 = vadd.f32 %v928, %v929
      %v931 = vrot.slane %v930, 1
      %v932 = vadd.f32 %v930, %v931
      %v933 = vsel %vm519, %v514, 0.0
      %v934 = vrot.slane %v933, 4
      %v935 = vadd.f32 %v933, %v934
      %v936 = vrot.slane %v935, 2
      %v937 = vadd.f32 %v935, %v936
      %v938 = vrot.slane %v937, 1
      %v939 = vadd.f32 %v937, %v938
      %v940 = vsel %vm519, %v515, 0.0
      %v941 = vrot.slane %v940, 4
      %v942 = vadd.f32 %v940, %v941
      %v943 = vrot.slane %v942, 2
      %v944 = vadd.f32 %v942, %v943
      %v945 = vrot.slane %v944, 1
      %v946 = vadd.f32 %v944, %v945
      %v947 = vsel %vm519, %v516, 0.0
      %v948 = vrot.slane %v947, 4
      %v949 = vadd.f32 %v947, %v948
      %v950 = vrot.slane %v949, 2
      %v951 = vadd.f32 %v949, %v950
      %v952 = vrot.slane %v951, 1
      %v953 = vadd.f32 %v951, %v952
      %v954 = vsel %vm519, %v517, 0.0
      %v955 = vrot.slane %v954, 4
      %v956 = vadd.f32 %v954, %v955
      %v957 = vrot.slane %v956, 2
      %v958 = vadd.f32 %v956, %v957
      %v959 = vrot.slane %v958, 1
      %v960 = vadd.f32 %v958, %v959
      %v961 = vsel %vm519, %v518, 0.0
      %v962 = vrot.slane %v961, 4
      %v963 = vadd.f32 %v961, %v962
      %v964 = vrot.slane %v963, 2
      %v965 = vadd.f32 %v963, %v964
      %v966 = vrot.slane %v965, 1
      %v967 = vadd.f32 %v965, %v966
      %v968 = vpack.c.bf16 %v526, %v526
      %v969 = vpack.c.bf16 %v533, %v533
      %v970 = vpack.c.bf16 %v540, %v540
      %v971 = vpack.c.bf16 %v547, %v547
      %v972 = vpack.c.bf16 %v554, %v554
      %v973 = vpack.c.bf16 %v561, %v561
      %v974 = vpack.c.bf16 %v568, %v568
      %v975 = vpack.c.bf16 %v575, %v575
      %v976 = vpack.c.bf16 %v582, %v582
      %v977 = vpack.c.bf16 %v589, %v589
      %v978 = vpack.c.bf16 %v596, %v596
      %v979 = vpack.c.bf16 %v603, %v603
      %v980 = vpack.c.bf16 %v610, %v610
      %v981 = vpack.c.bf16 %v617, %v617
      %v982 = vpack.c.bf16 %v624, %v624
      %v983 = vpack.c.bf16 %v631, %v631
      %v984 = vpack.c.bf16 %v638, %v638
      %v985 = vpack.c.bf16 %v645, %v645
      %v986 = vpack.c.bf16 %v652, %v652
      %v987 = vpack.c.bf16 %v659, %v659
      %v988 = vpack.c.bf16 %v666, %v666
      %v989 = vpack.c.bf16 %v673, %v673
      %v990 = vpack.c.bf16 %v680, %v680
      %v991 = vpack.c.bf16 %v687, %v687
      %v992 = vpack.c.bf16 %v694, %v694
      %v993 = vpack.c.bf16 %v701, %v701
      %v994 = vpack.c.bf16 %v708, %v708
      %v995 = vpack.c.bf16 %v715, %v715
      %v996 = vpack.c.bf16 %v722, %v722
      %v997 = vpack.c.bf16 %v729, %v729
      %v998 = vpack.c.bf16 %v736, %v736
      %v999 = vpack.c.bf16 %v743, %v743
      %v1000 = vpack.c.bf16 %v750, %v750
      %v1001 = vpack.c.bf16 %v757, %v757
      %v1002 = vpack.c.bf16 %v764, %v764
      %v1003 = vpack.c.bf16 %v771, %v771
      %v1004 = vpack.c.bf16 %v778, %v778
      %v1005 = vpack.c.bf16 %v785, %v785
      %v1006 = vpack.c.bf16 %v792, %v792
      %v1007 = vpack.c.bf16 %v799, %v799
      %v1008 = vpack.c.bf16 %v806, %v806
      %v1009 = vpack.c.bf16 %v813, %v813
      %v1010 = vpack.c.bf16 %v820, %v820
      %v1011 = vpack.c.bf16 %v827, %v827
      %v1012 = vpack.c.bf16 %v834, %v834
      %v1013 = vpack.c.bf16 %v841, %v841
      %v1014 = vpack.c.bf16 %v848, %v848
      %v1015 = vpack.c.bf16 %v855, %v855
      %v1016 = vpack.c.bf16 %v862, %v862
      %v1017 = vpack.c.bf16 %v869, %v869
      %v1018 = vpack.c.bf16 %v876, %v876
      %v1019 = vpack.c.bf16 %v883, %v883
      %v1020 = vpack.c.bf16 %v890, %v890
      %v1021 = vpack.c.bf16 %v897, %v897
      %v1022 = vpack.c.bf16 %v904, %v904
      %v1023 = vpack.c.bf16 %v911, %v911
      %v1024 = vpack.c.bf16 %v918, %v918
      %v1025 = vpack.c.bf16 %v925, %v925
      %v1026 = vpack.c.bf16 %v932, %v932
      %v1027 = vpack.c.bf16 %v939, %v939
      %v1028 = vpack.c.bf16 %v946, %v946
      %v1029 = vpack.c.bf16 %v953, %v953
      %v1030 = vpack.c.bf16 %v960, %v960
      %v1031 = vpack.c.bf16 %v967, %v967
      %v1032 = vld [vmem:[%s3] sm:$0xf]
      %v1033 = vld [vmem:[%s3 + $0x4] sm:$0xf]
      %v1034 = vld [vmem:[%s3 + $0x8] sm:$0xf]
      %v1035 = vld [vmem:[%s4] sm:$0x1]
      %v1037 = vperm.slane %v1035, 0
      %v1103 = vunpack.c.l.b16 %v968
      %v1104 = vunpack.c.l.b16 %v969
      %v1105 = vunpack.c.l.b16 %v970
      %v1106 = vunpack.c.l.b16 %v971
      %v1107 = vunpack.c.l.b16 %v972
      %v1108 = vunpack.c.l.b16 %v973
      %v1109 = vunpack.c.l.b16 %v974
      %v1110 = vunpack.c.l.b16 %v975
      %v1111 = vunpack.c.l.b16 %v976
      %v1112 = vunpack.c.l.b16 %v977
      %v1113 = vunpack.c.l.b16 %v978
      %v1114 = vunpack.c.l.b16 %v979
      %v1115 = vunpack.c.l.b16 %v980
      %v1116 = vunpack.c.l.b16 %v981
      %v1117 = vunpack.c.l.b16 %v982
      %v1118 = vunpack.c.l.b16 %v983
      %v1119 = vunpack.c.l.b16 %v984
      %v1120 = vunpack.c.l.b16 %v985
      %v1121 = vunpack.c.l.b16 %v986
      %v1122 = vunpack.c.l.b16 %v987
      %v1123 = vunpack.c.l.b16 %v988
      %v1124 = vunpack.c.l.b16 %v989
      %v1125 = vunpack.c.l.b16 %v990
      %v1126 = vunpack.c.l.b16 %v991
      %v1127 = vunpack.c.l.b16 %v992
      %v1128 = vunpack.c.l.b16 %v993
      %v1129 = vunpack.c.l.b16 %v994
      %v1130 = vunpack.c.l.b16 %v995
      %v1131 = vunpack.c.l.b16 %v996
      %v1132 = vunpack.c.l.b16 %v997
      %v1133 = vunpack.c.l.b16 %v998
      %v1134 = vunpack.c.l.b16 %v999
      %v1135 = vunpack.c.l.b16 %v1000
      %v1136 = vunpack.c.l.b16 %v1001
      %v1137 = vunpack.c.l.b16 %v1002
      %v1138 = vunpack.c.l.b16 %v1003
      %v1139 = vunpack.c.l.b16 %v1004
      %v1140 = vunpack.c.l.b16 %v1005
      %v1141 = vunpack.c.l.b16 %v1006
      %v1142 = vunpack.c.l.b16 %v1007
      %v1143 = vunpack.c.l.b16 %v1008
      %v1144 = vunpack.c.l.b16 %v1009
      %v1145 = vunpack.c.l.b16 %v1010
      %v1146 = vunpack.c.l.b16 %v1011
      %v1147 = vunpack.c.l.b16 %v1012
      %v1148 = vunpack.c.l.b16 %v1013
      %v1149 = vunpack.c.l.b16 %v1014
      %v1150 = vunpack.c.l.b16 %v1015
      %v1151 = vunpack.c.l.b16 %v1016
      %v1152 = vunpack.c.l.b16 %v1017
      %v1153 = vunpack.c.l.b16 %v1018
      %v1154 = vunpack.c.l.b16 %v1019
      %v1155 = vunpack.c.l.b16 %v1020
      %v1156 = vunpack.c.l.b16 %v1021
      %v1157 = vunpack.c.l.b16 %v1022
      %v1158 = vunpack.c.l.b16 %v1023
      %v1159 = vunpack.c.l.b16 %v1024
      %v1160 = vunpack.c.l.b16 %v1025
      %v1161 = vunpack.c.l.b16 %v1026
      %v1162 = vunpack.c.l.b16 %v1027
      %v1163 = vunpack.c.l.b16 %v1028
      %v1164 = vunpack.c.l.b16 %v1029
      %v1165 = vunpack.c.l.b16 %v1030
      %v1166 = vunpack.c.l.b16 %v1031
      %vm1167 = vcmask 1041409
      %v1168 = vsel %vm1167, %v1104, %v1103
      %vm1169 = vcmask 1042434
      %v1170 = vsel %vm1169, %v1105, %v1168
      %vm1171 = vcmask 1043459
      %v1172 = vsel %vm1171, %v1106, %v1170
      %vm1173 = vcmask 1044484
      %v1174 = vsel %vm1173, %v1107, %v1172
      %vm1175 = vcmask 1045509
      %v1176 = vsel %vm1175, %v1108, %v1174
      %vm1177 = vcmask 1046534
      %v1178 = vsel %vm1177, %v1109, %v1176
      %vm1179 = vcmask 1047559
      %v1180 = vsel %vm1179, %v1110, %v1178
      %v1181 = vsel %vm1167, %v1112, %v1111
      %v1182 = vsel %vm1169, %v1113, %v1181
      %v1183 = vsel %vm1171, %v1114, %v1182
      %v1184 = vsel %vm1173, %v1115, %v1183
      %v1185 = vsel %vm1175, %v1116, %v1184
      %v1186 = vsel %vm1177, %v1117, %v1185
      %v1187 = vsel %vm1179, %v1118, %v1186
      %v1188 = vsel %vm1167, %v1120, %v1119
      %v1189 = vsel %vm1169, %v1121, %v1188
      %v1190 = vsel %vm1171, %v1122, %v1189
      %v1191 = vsel %vm1173, %v1123, %v1190
      %v1192 = vsel %vm1175, %v1124, %v1191
      %v1193 = vsel %vm1177, %v1125, %v1192
      %v1194 = vsel %vm1179, %v1126, %v1193
      %v1195 = vsel %vm1167, %v1128, %v1127
      %v1196 = vsel %vm1169, %v1129, %v1195
      %v1197 = vsel %vm1171, %v1130, %v1196
      %v1198 = vsel %vm1173, %v1131, %v1197
      %v1199 = vsel %vm1175, %v1132, %v1198
      %v1200 = vsel %vm1177, %v1133, %v1199
      %v1201 = vsel %vm1179, %v1134, %v1200
      %v1202 = vsel %vm1167, %v1136, %v1135
      %v1203 = vsel %vm1169, %v1137, %v1202
      %v1204 = vsel %vm1171, %v1138, %v1203
      %v1205 = vsel %vm1173, %v1139, %v1204
      %v1206 = vsel %vm1175, %v1140, %v1205
      %v1207 = vsel %vm1177, %v1141, %v1206
      %v1208 = vsel %vm1179, %v1142, %v1207
      %v1209 = vsel %vm1167, %v1144, %v1143
      %v1210 = vsel %vm1169, %v1145, %v1209
      %v1211 = vsel %vm1171, %v1146, %v1210
      %v1212 = vsel %vm1173, %v1147, %v1211
      %v1213 = vsel %vm1175, %v1148, %v1212
      %v1214 = vsel %vm1177, %v1149, %v1213
      %v1215 = vsel %vm1179, %v1150, %v1214
      %v1216 = vsel %vm1167, %v1152, %v1151
      %v1217 = vsel %vm1169, %v1153, %v1216
      %v1218 = vsel %vm1171, %v1154, %v1217
      %v1219 = vsel %vm1173, %v1155, %v1218
      %v1220 = vsel %vm1175, %v1156, %v1219
      %v1221 = vsel %vm1177, %v1157, %v1220
      %v1222 = vsel %vm1179, %v1158, %v1221
      %v1223 = vsel %vm1167, %v1160, %v1159
      %v1224 = vsel %vm1169, %v1161, %v1223
      %v1225 = vsel %vm1171, %v1162, %v1224
      %v1226 = vsel %vm1173, %v1163, %v1225
      %v1227 = vsel %vm1175, %v1164, %v1226
      %v1228 = vsel %vm1177, %v1165, %v1227
      %v1229 = vsel %vm1179, %v1166, %v1228
      %v1230 = vpack.c.b16 %v1187, %v1180
      %v1231 = vpack.c.b16 %v1201, %v1194
      %v1232 = vpack.c.b16 %v1215, %v1208
      %v1233 = vpack.c.b16 %v1229, %v1222
      %v1237 = vunpack.c.l.b16 %v1032
      %v1238 = vunpack.c.l.b16 %v1033
      %v1239 = vunpack.c.l.b16 %v1034
      %v1240 = vpack.c.b16 %v1238, %v1237
      %v1241 = vpack.c.b16 %v1239, %v1239
      %v1244 = vsel %vm519, %v1230, 0
      %v1247 = vsel %vm519, %v1231, 0
      %v1250 = vsel %vm519, %v1232, 0
      %v1253 = vsel %vm519, %v1233, 0
      %vm1255 = vcmask 1043456
      %v1257 = vsel %vm1255, %v1241, 0
      %1259 = vmatpush.bf16.msra.mxu0 0
      %1260 = vmatpush.bf16.msra.mxu0 0
      %1261 = vmatpush.bf16.msra.mxu0 0
      %1262 = vmatpush.bf16.msra.mxu0 0
      %1263 = vmatpush.bf16.msra.mxu0 0
      %1264 = vmatpush.bf16.msra.mxu0 0
      %1265 = vmatpush.bf16.msra.mxu0 %v1257
      %1266 = vmatpush.bf16.msra.mxu0 %v1240
      %1267 = vmatmul.bf16.gmra.mxu0 %v1244
      %v1268 = vpop.f32.mrf.mxu0
      %v1269 = vadd.f32 %v1037, %v1268
      %v1270 = vpop.f32.mrf.mxu0
      %v1271 = vadd.f32 %v1037, %v1270
      %1272 = vmatmul.bf16.gmra.mxu0 %v1247
      %v1273 = vpop.f32.mrf.mxu0
      %v1274 = vadd.f32 %v1037, %v1273
      %v1275 = vpop.f32.mrf.mxu0
      %v1276 = vadd.f32 %v1037, %v1275
      %1277 = vmatmul.bf16.gmra.mxu0 %v1250
      %v1278 = vpop.f32.mrf.mxu0
      %v1279 = vadd.f32 %v1037, %v1278
      %v1280 = vpop.f32.mrf.mxu0
      %v1281 = vadd.f32 %v1037, %v1280
      %1282 = vmatmul.bf16.gmra.mxu0 %v1253
      %v1283 = vpop.f32.mrf.mxu0
      %v1284 = vadd.f32 %v1037, %v1283
      %v1285 = vpop.f32.mrf.mxu0
      %v1286 = vadd.f32 %v1037, %v1285
      %1287 = vdwg.mxu0
      %v1288 = vlaneseq
      %v1289 = vand.u32 %v1288, 127
      %vm1290 = vcmp.lt.s32.totalorder %v1289, 48
      %v1291 = vld [vmem:[%s318] sm:$0xff]
      %v1292 = vld [vmem:[%s318 + $0x8] sm:$0xff]
      %v1293 = vld [vmem:[%s318 + $0x10] sm:$0xff]
      %v1294 = vld [vmem:[%s318 + $0x18] sm:$0xff]
      %v1295 = vld [vmem:[%s318 + $0x20] sm:$0xff]
      %v1296 = vld [vmem:[%s318 + $0x28] sm:$0xff]
      %v1297 = vld [vmem:[%s318 + $0x30] sm:$0xff]
      %v1298 = vld [vmem:[%s318 + $0x38] sm:$0xff]
      %v1299 = vsel %vm1290, %v1291, 0.0
      %v1300 = vsel %vm1290, %v1292, 0.0
      %v1301 = vsel %vm1290, %v1293, 0.0
      %v1302 = vsel %vm1290, %v1294, 0.0
      %v1303 = vsel %vm1290, %v1295, 0.0
      %v1304 = vsel %vm1290, %v1296, 0.0
      %v1305 = vsel %vm1290, %v1297, 0.0
      %v1306 = vsel %vm1290, %v1298, 0.0
      %v1307 = vadd.f32 %v1269, %v1299
      %v1308 = vadd.f32 %v1271, %v1300
      %v1309 = vadd.f32 %v1274, %v1301
      %v1310 = vadd.f32 %v1276, %v1302
      %v1311 = vadd.f32 %v1279, %v1303
      %v1312 = vadd.f32 %v1281, %v1304
      %v1313 = vadd.f32 %v1284, %v1305
      %v1314 = vadd.f32 %v1286, %v1306
      %v1315 = vmax.f32 %v1307, 0.0
      %v1316 = vmax.f32 %v1308, 0.0
      %v1317 = vmax.f32 %v1309, 0.0
      %v1318 = vmax.f32 %v1310, 0.0
      %v1319 = vmax.f32 %v1311, 0.0
      %v1320 = vmax.f32 %v1312, 0.0
      %v1321 = vmax.f32 %v1313, 0.0
      %v1322 = vmax.f32 %v1314, 0.0
      %v1323 = vpack.c.bf16 %v1316, %v1315
      %v1324 = vpack.c.bf16 %v1318, %v1317
      %v1325 = vpack.c.bf16 %v1320, %v1319
      %v1326 = vpack.c.bf16 %v1322, %v1321
      %v1327 = vld [vmem:[%s5] sm:$0xf]
      %v1328 = vld [vmem:[%s5 + $0x4] sm:$0xf]
      %v1329 = vld [vmem:[%s5 + $0x8] sm:$0xf]
      %v1330 = vld [vmem:[%s5 + $0xc] sm:$0xf]
      %v1331 = vld [vmem:[%s5 + $0x10] sm:$0xf]
      %v1332 = vld [vmem:[%s5 + $0x14] sm:$0xf]
      %v1333 = vld [vmem:[%s5 + $0x18] sm:$0xf]
      %v1334 = vld [vmem:[%s5 + $0x1c] sm:$0xf]
      %v1335 = vld [vmem:[%s5 + $0x20] sm:$0xf]
      %v1336 = vld [vmem:[%s5 + $0x24] sm:$0xf]
      %v1337 = vld [vmem:[%s5 + $0x28] sm:$0xf]
      %v1338 = vld [vmem:[%s5 + $0x2c] sm:$0xf]
      %v1339 = vld [vmem:[%s5 + $0x30] sm:$0xf]
      %v1340 = vld [vmem:[%s5 + $0x34] sm:$0xf]
      %v1341 = vld [vmem:[%s5 + $0x38] sm:$0xf]
      %v1342 = vld [vmem:[%s5 + $0x3c] sm:$0xf]
      %v1343 = vld [vmem:[%s6] sm:$0x1]
      %v1345 = vperm.slane %v1343, 0
      %v1363 = vunpack.c.l.b16 %v1327
      %v1364 = vunpack.c.l.b16 %v1328
      %v1365 = vunpack.c.l.b16 %v1329
      %v1366 = vunpack.c.l.b16 %v1330
      %v1367 = vunpack.c.l.b16 %v1331
      %v1368 = vunpack.c.l.b16 %v1332
      %v1369 = vunpack.c.l.b16 %v1333
      %v1370 = vunpack.c.l.b16 %v1334
      %v1371 = vunpack.c.l.b16 %v1335
      %v1372 = vunpack.c.l.b16 %v1336
      %v1373 = vunpack.c.l.b16 %v1337
      %v1374 = vunpack.c.l.b16 %v1338
      %v1375 = vunpack.c.l.b16 %v1339
      %v1376 = vunpack.c.l.b16 %v1340
      %v1377 = vunpack.c.l.b16 %v1341
      %v1378 = vunpack.c.l.b16 %v1342
      %v1379 = vpack.c.b16 %v1364, %v1363
      %v1380 = vpack.c.b16 %v1366, %v1365
      %v1381 = vpack.c.b16 %v1368, %v1367
      %v1382 = vpack.c.b16 %v1370, %v1369
      %v1383 = vpack.c.b16 %v1372, %v1371
      %v1384 = vpack.c.b16 %v1374, %v1373
      %v1385 = vpack.c.b16 %v1376, %v1375
      %v1386 = vpack.c.b16 %v1378, %v1377
      %1395 = vmatpush.bf16.msra.mxu0 %v1386
      %1396 = vmatpush.bf16.msra.mxu0 %v1385
      %1397 = vmatpush.bf16.msra.mxu0 %v1384
      %1398 = vmatpush.bf16.msra.mxu0 %v1383
      %1399 = vmatpush.bf16.msra.mxu0 %v1382
      %1400 = vmatpush.bf16.msra.mxu0 %v1381
      %1401 = vmatpush.bf16.msra.mxu0 %v1380
      %1402 = vmatpush.bf16.msra.mxu0 %v1379
      %1403 = vmatmul.bf16.gmra.mxu0 %v1323
      %v1404 = vpop.f32.mrf.mxu0
      %v1405 = vadd.f32 %v1345, %v1404
      %v1406 = vpop.f32.mrf.mxu0
      %v1407 = vadd.f32 %v1345, %v1406
      %1408 = vmatmul.bf16.gmra.mxu0 %v1324
      %v1409 = vpop.f32.mrf.mxu0
      %v1410 = vadd.f32 %v1345, %v1409
      %v1411 = vpop.f32.mrf.mxu0
      %v1412 = vadd.f32 %v1345, %v1411
      %1413 = vmatmul.bf16.gmra.mxu0 %v1325
      %v1414 = vpop.f32.mrf.mxu0
      %v1415 = vadd.f32 %v1345, %v1414
      %v1416 = vpop.f32.mrf.mxu0
      %v1417 = vadd.f32 %v1345, %v1416
      %1418 = vmatmul.bf16.gmra.mxu0 %v1326
      %v1419 = vpop.f32.mrf.mxu0
      %v1420 = vadd.f32 %v1345, %v1419
      %v1421 = vpop.f32.mrf.mxu0
      %v1422 = vadd.f32 %v1345, %v1421
      %1423 = vdwg.mxu0
      %v1424 = vmax.f32 %v1405, 0.0
      %v1425 = vmax.f32 %v1407, 0.0
      %v1426 = vmax.f32 %v1410, 0.0
      %v1427 = vmax.f32 %v1412, 0.0
      %v1428 = vmax.f32 %v1415, 0.0
      %v1429 = vmax.f32 %v1417, 0.0
      %v1430 = vmax.f32 %v1420, 0.0
      %v1431 = vmax.f32 %v1422, 0.0
      %v1432 = vadd.f32 %v1315, %v1424
      %v1433 = vadd.f32 %v1316, %v1425
      %v1434 = vadd.f32 %v1317, %v1426
      %v1435 = vadd.f32 %v1318, %v1427
      %v1436 = vadd.f32 %v1319, %v1428
      %v1437 = vadd.f32 %v1320, %v1429
      %v1438 = vadd.f32 %v1321, %v1430
      %v1439 = vadd.f32 %v1322, %v1431
      %1440 = vst [vmem:[%s324] sm:$0xff] %v1432
      %1441 = vst [vmem:[%s324 + $0x8] sm:$0xff] %v1433
      %1442 = vst [vmem:[%s324 + $0x10] sm:$0xff] %v1434
      %1443 = vst [vmem:[%s324 + $0x18] sm:$0xff] %v1435
      %1444 = vst [vmem:[%s324 + $0x20] sm:$0xff] %v1436
      %1445 = vst [vmem:[%s324 + $0x28] sm:$0xff] %v1437
      %1446 = vst [vmem:[%s324 + $0x30] sm:$0xff] %v1438
      %1447 = vst [vmem:[%s324 + $0x38] sm:$0xff] %v1439
      %s1448 = smul.u32 8, %s18
      %p1449 = scmp.lt.s32.totalorder %s1448, 31
      %s1450 = scalar_select %p1449, %s1448, 31
      %s1451 = smul.addr %s1450, 8
      %s1452 = scalar_lea.vmem %s7, %s1451
      // Predicated region
      $region49: #{multipart_segmentation_forward.4} parent=47 // pred_check
        %p1453 = pneg %p198
      $region50: #{multipart_segmentation_forward.4} parent=47 // pred_check_branch
        %1455 = sbr.rel (%p1453) target = $region52
      $region51: #{multipart_segmentation_forward.4} parent=47 // pred_region
        %s1456 = smul.u32 8, %s18
      $region52: #{multipart_segmentation_forward.4} parent=47 // pred_fallthru
        _
    $region48: #{multipart_segmentation_forward.4} parent=5 // pred_fallthru
      _
    %p1457 = scmp.le.s32.totalorder 2, %s13
    // Predicated region
    $region53: #{multipart_segmentation_forward.4} parent=5 // pred_check
      %p1458 = pneg %p1457
    $region54: #{multipart_segmentation_forward.4} parent=5 // pred_check_branch
      %1460 = sbr.rel (%p1458) target = $region56
    $region55: #{multipart_segmentation_forward.4} parent=5 // pred_region
      %s1461 = ssub.s32 %s13, 2
      // Predicated region
      $region57: #{multipart_segmentation_forward.4} parent=55 // pred_check
        %p1462 = pneg %p204
      $region58: #{multipart_segmentation_forward.4} parent=55 // pred_check_branch
        %1464 = sbr.rel (%p1462) target = $region60
      $region59: #{multipart_segmentation_forward.4} parent=55 // pred_region
        %s1465 = smul.u32 8, %s19
        %p1466 = scmp.lt.s32.totalorder %s1465, 31
        %s1467 = scalar_select %p1466, %s1465, 31
        %s1468 = smul.addr %s1467, 8
        %s1469 = scalar_lea.vmem %s7, %s1468
      $region60: #{multipart_segmentation_forward.4} parent=55 // pred_fallthru
        _
    $region56: #{multipart_segmentation_forward.4} parent=5 // pred_fallthru
      _
  $region6: #{multipart_segmentation_forward.4} parent=0 // loop_footer
    %s17 = sadd.s32 1, %s13
  $region7: #{multipart_segmentation_forward.4} parent=0 // loop_footer_branch
    %12 = sbr.rel target = $region3
  $region8: #{multipart_segmentation_forward.4} parent=0 // loop_exit
    _

// kernel: multipart_segmentation_forward.5
$region0: #{multipart_segmentation_forward.5}
  #allocation0 [shape = 'u32[]', space=smem, size = 0x4, offset = 0x4, fixed_abs, tag = 'smem constant byte address 0x4 - core index']
  #allocation1 [shape = 'u32[72,128]{1,0:T(1,128)}', space=vmem, size = 0x9000, scoped, tag = 'internal scratch']
  %s0 = inlined_call_operand.vmem [shape: f32[256,8,24], index: 0, kind: input, shape index: {}]
  %s1 = inlined_call_operand.vmem [shape: f32[256,8,24], index: 1, kind: input, shape index: {}]
  %s2 = inlined_call_operand.vmem [shape: f32[256,128], index: 2, kind: input, shape index: {}]
  %s3 = inlined_call_operand.vmem [shape: bf16[24,128], index: 3, kind: input, shape index: {}]
  %s4 = inlined_call_operand.vmem [shape: f32[1,128], index: 4, kind: input, shape index: {}]
  %s5 = inlined_call_operand.vmem [shape: bf16[128,128], index: 5, kind: input, shape index: {}]
  %s6 = inlined_call_operand.vmem [shape: f32[1,128], index: 6, kind: input, shape index: {}]
  %s7 = inlined_call_operand.vmem [shape: bf16[128,256], index: 7, kind: input, shape index: {}]
  %s8 = inlined_call_operand.vmem [shape: f32[1,256], index: 8, kind: input, shape index: {}]
  %s9 = inlined_call_operand.vmem [shape: f32[256,128], index: 9, kind: input, shape index: {}]
  %s10 = inlined_call_operand.vmem [shape: f32[1,128], index: 10, kind: input, shape index: {}]
  %s11 = inlined_call_operand.vmem [shape: f32[256,128], index: 11, kind: output, shape index: {}]
  %s12 = sld [smem:[#allocation0]]
  $region77: #{multipart_segmentation_forward.5} parent=0
    _
  %s14 = ssub.s32 1, %s12
  %s15 = scalar_select 0, %s14, %s12
  loop: start=0, step=1, limit=6
  $region2: #{multipart_segmentation_forward.5} parent=0 // loop_pre_header
    _
  $region3: #{multipart_segmentation_forward.5} parent=0 // loop_header
    %s17 = sphi 0, %s21
    %p18 = scmp.ge.s32.totalorder %s17, 6
    %s27 = sphi 0, %s29
    %s30 = sphi 0, %s27
    %s31 = sphi 0, %s30
    %s47 = sphi 0, %s31
    %s53 = sphi 0, %s55
    %s56 = sphi 0, %s53
    %s57 = sphi 0, %s56
    %s73 = sphi 0, %s57
    %s79 = sphi 0, %s81
    %s82 = sphi 0, %s79
    %s83 = sphi 0, %s82
    %s99 = sphi 0, %s83
    %s103 = sphi 0, %s103
    %s105 = sphi 0, %s103
    %s106 = sphi 0, %s105
    %s120 = sphi 0, %s106
    %s124 = sphi 0, %s124
    %s126 = sphi 0, %s124
    %s127 = sphi 0, %s126
    %s141 = sphi 0, %s127
    %s145 = sphi 0, %s145
    %s147 = sphi 0, %s145
    %s148 = sphi 0, %s147
    %s162 = sphi 0, %s148
    %s166 = sphi 0, %s166
    %s168 = sphi 0, %s166
    %s169 = sphi 0, %s168
    %s183 = sphi 0, %s169
    %s187 = sphi 0, %s187
    %s189 = sphi 0, %s187
    %s190 = sphi 0, %s189
    %s204 = sphi 0, %s190
    %s208 = sphi 0, %s208
    %s210 = sphi 0, %s208
    %s211 = sphi 0, %s210
    %s225 = sphi 0, %s211
    %s229 = sphi 0, %s229
    %s231 = sphi 0, %s229
    %s232 = sphi 0, %s231
    %s246 = sphi 0, %s232
    %s250 = sphi 0, %s250
    %s252 = sphi 0, %s250
    %s253 = sphi 0, %s252
    %s267 = sphi 0, %s253
    %s273 = sphi 0, %s275
    %s276 = sphi 0, %s273
    %s277 = sphi 0, %s276
    %s293 = sphi 0, %s277
  $region4: #{multipart_segmentation_forward.5} parent=0 // loop_header_branch
    %20 = sbr.rel (%p18) target = $region8
  $region5: #{multipart_segmentation_forward.5} parent=0 // loop_body
    %s22 = ssub.s32 %s17, 1
    %s23 = ssub.s32 %s17, 2
    %s24 = sadd.s32 %s17, 1
    %s25 = ssub.s32 %s17, %s24
    %p26 = scmp.eq.s32.totalorder %s25, 0
    %s28 = sadd.s32 %s27, 1
    %s29 = scalar_select %p26, %s27, %s28
    %p32 = pneg %p26
    %p33 = scmp.eq.s32.totalorder %s17, 3
    %p34 = por %p32, %p33
    %p35 = scmp.ne.s32.totalorder %s27, %s30
    %p36 = scmp.eq.s32.totalorder %s17, 0
    %p37 = por %p35, %p36
    %p38 = scmp.ne.s32.totalorder %s27, %s30
    %p39 = scmp.eq.s32.totalorder %s22, 3
    %p40 = por %p38, %p39
    %p41 = scmp.ne.s32.totalorder %s30, %s31
    %p42 = scmp.eq.s32.totalorder %s22, 0
    %p43 = por %p41, %p42
    %p44 = scmp.ne.s32.totalorder %s30, %s31
    %p45 = scmp.eq.s32.totalorder %s23, 3
    %p46 = por %p44, %p45
    %p48 = scmp.ne.s32.totalorder %s31, %s47
    %p49 = scmp.eq.s32.totalorder %s23, 0
    %p50 = por %p48, %p49
    %s51 = ssub.s32 %s17, %s24
    %p52 = scmp.eq.s32.totalorder %s51, 0
    %s54 = sadd.s32 %s53, 1
    %s55 = scalar_select %p52, %s53, %s54
    %p58 = pneg %p52
    %p59 = scmp.eq.s32.totalorder %s17, 3
    %p60 = por %p58, %p59
    %p61 = scmp.ne.s32.totalorder %s53, %s56
    %p62 = scmp.eq.s32.totalorder %s17, 0
    %p63 = por %p61, %p62
    %p64 = scmp.ne.s32.totalorder %s53, %s56
    %p65 = scmp.eq.s32.totalorder %s22, 3
    %p66 = por %p64, %p65
    %p67 = scmp.ne.s32.totalorder %s56, %s57
    %p68 = scmp.eq.s32.totalorder %s22, 0
    %p69 = por %p67, %p68
    %p70 = scmp.ne.s32.totalorder %s56, %s57
    %p71 = scmp.eq.s32.totalorder %s23, 3
    %p72 = por %p70, %p71
    %p74 = scmp.ne.s32.totalorder %s57, %s73
    %p75 = scmp.eq.s32.totalorder %s23, 0
    %p76 = por %p74, %p75
    %s77 = ssub.s32 %s17, %s24
    %p78 = scmp.eq.s32.totalorder %s77, 0
    %s80 = sadd.s32 %s79, 1
    %s81 = scalar_select %p78, %s79, %s80
    %p84 = pneg %p78
    %p85 = scmp.eq.s32.totalorder %s17, 3
    %p86 = por %p84, %p85
    %p87 = scmp.ne.s32.totalorder %s79, %s82
    %p88 = scmp.eq.s32.totalorder %s17, 0
    %p89 = por %p87, %p88
    %p90 = scmp.ne.s32.totalorder %s79, %s82
    %p91 = scmp.eq.s32.totalorder %s22, 3
    %p92 = por %p90, %p91
    %p93 = scmp.ne.s32.totalorder %s82, %s83
    %p94 = scmp.eq.s32.totalorder %s22, 0
    %p95 = por %p93, %p94
    %p96 = scmp.ne.s32.totalorder %s82, %s83
    %p97 = scmp.eq.s32.totalorder %s23, 3
    %p98 = por %p96, %p97
    %p100 = scmp.ne.s32.totalorder %s83, %s99
    %p101 = scmp.eq.s32.totalorder %s23, 0
    %p102 = por %p100, %p101
    %s104 = sadd.s32 %s103, 1
    %p107 = scmp.eq.s32.totalorder %s17, 3
    %p108 = scmp.ne.s32.totalorder %s103, %s105
    %p109 = scmp.eq.s32.totalorder %s17, 0
    %p110 = por %p108, %p109
    %p111 = scmp.ne.s32.totalorder %s103, %s105
    %p112 = scmp.eq.s32.totalorder %s22, 3
    %p113 = por %p111, %p112
    %p114 = scmp.ne.s32.totalorder %s105, %s106
    %p115 = scmp.eq.s32.totalorder %s22, 0
    %p116 = por %p114, %p115
    %p117 = scmp.ne.s32.totalorder %s105, %s106
    %p118 = scmp.eq.s32.totalorder %s23, 3
    %p119 = por %p117, %p118
    %p121 = scmp.ne.s32.totalorder %s106, %s120
    %p122 = scmp.eq.s32.totalorder %s23, 0
    %p123 = por %p121, %p122
    %s125 = sadd.s32 %s124, 1
    %p128 = scmp.eq.s32.totalorder %s17, 3
    %p129 = scmp.ne.s32.totalorder %s124, %s126
    %p130 = scmp.eq.s32.totalorder %s17, 0
    %p131 = por %p129, %p130
    %p132 = scmp.ne.s32.totalorder %s124, %s126
    %p133 = scmp.eq.s32.totalorder %s22, 3
    %p134 = por %p132, %p133
    %p135 = scmp.ne.s32.totalorder %s126, %s127
    %p136 = scmp.eq.s32.totalorder %s22, 0
    %p137 = por %p135, %p136
    %p138 = scmp.ne.s32.totalorder %s126, %s127
    %p139 = scmp.eq.s32.totalorder %s23, 3
    %p140 = por %p138, %p139
    %p142 = scmp.ne.s32.totalorder %s127, %s141
    %p143 = scmp.eq.s32.totalorder %s23, 0
    %p144 = por %p142, %p143
    %s146 = sadd.s32 %s145, 1
    %p149 = scmp.eq.s32.totalorder %s17, 3
    %p150 = scmp.ne.s32.totalorder %s145, %s147
    %p151 = scmp.eq.s32.totalorder %s17, 0
    %p152 = por %p150, %p151
    %p153 = scmp.ne.s32.totalorder %s145, %s147
    %p154 = scmp.eq.s32.totalorder %s22, 3
    %p155 = por %p153, %p154
    %p156 = scmp.ne.s32.totalorder %s147, %s148
    %p157 = scmp.eq.s32.totalorder %s22, 0
    %p158 = por %p156, %p157
    %p159 = scmp.ne.s32.totalorder %s147, %s148
    %p160 = scmp.eq.s32.totalorder %s23, 3
    %p161 = por %p159, %p160
    %p163 = scmp.ne.s32.totalorder %s148, %s162
    %p164 = scmp.eq.s32.totalorder %s23, 0
    %p165 = por %p163, %p164
    %s167 = sadd.s32 %s166, 1
    %p170 = scmp.eq.s32.totalorder %s17, 3
    %p171 = scmp.ne.s32.totalorder %s166, %s168
    %p172 = scmp.eq.s32.totalorder %s17, 0
    %p173 = por %p171, %p172
    %p174 = scmp.ne.s32.totalorder %s166, %s168
    %p175 = scmp.eq.s32.totalorder %s22, 3
    %p176 = por %p174, %p175
    %p177 = scmp.ne.s32.totalorder %s168, %s169
    %p178 = scmp.eq.s32.totalorder %s22, 0
    %p179 = por %p177, %p178
    %p180 = scmp.ne.s32.totalorder %s168, %s169
    %p181 = scmp.eq.s32.totalorder %s23, 3
    %p182 = por %p180, %p181
    %p184 = scmp.ne.s32.totalorder %s169, %s183
    %p185 = scmp.eq.s32.totalorder %s23, 0
    %p186 = por %p184, %p185
    %s188 = sadd.s32 %s187, 1
    %p191 = scmp.eq.s32.totalorder %s17, 3
    %p192 = scmp.ne.s32.totalorder %s187, %s189
    %p193 = scmp.eq.s32.totalorder %s17, 0
    %p194 = por %p192, %p193
    %p195 = scmp.ne.s32.totalorder %s187, %s189
    %p196 = scmp.eq.s32.totalorder %s22, 3
    %p197 = por %p195, %p196
    %p198 = scmp.ne.s32.totalorder %s189, %s190
    %p199 = scmp.eq.s32.totalorder %s22, 0
    %p200 = por %p198, %p199
    %p201 = scmp.ne.s32.totalorder %s189, %s190
    %p202 = scmp.eq.s32.totalorder %s23, 3
    %p203 = por %p201, %p202
    %p205 = scmp.ne.s32.totalorder %s190, %s204
    %p206 = scmp.eq.s32.totalorder %s23, 0
    %p207 = por %p205, %p206
    %s209 = sadd.s32 %s208, 1
    %p212 = scmp.eq.s32.totalorder %s17, 3
    %p213 = scmp.ne.s32.totalorder %s208, %s210
    %p214 = scmp.eq.s32.totalorder %s17, 0
    %p215 = por %p213, %p214
    %p216 = scmp.ne.s32.totalorder %s208, %s210
    %p217 = scmp.eq.s32.totalorder %s22, 3
    %p218 = por %p216, %p217
    %p219 = scmp.ne.s32.totalorder %s210, %s211
    %p220 = scmp.eq.s32.totalorder %s22, 0
    %p221 = por %p219, %p220
    %p222 = scmp.ne.s32.totalorder %s210, %s211
    %p223 = scmp.eq.s32.totalorder %s23, 3
    %p224 = por %p222, %p223
    %p226 = scmp.ne.s32.totalorder %s211, %s225
    %p227 = scmp.eq.s32.totalorder %s23, 0
    %p228 = por %p226, %p227
    %s230 = sadd.s32 %s229, 1
    %p233 = scmp.eq.s32.totalorder %s17, 3
    %p234 = scmp.ne.s32.totalorder %s229, %s231
    %p235 = scmp.eq.s32.totalorder %s17, 0
    %p236 = por %p234, %p235
    %p237 = scmp.ne.s32.totalorder %s229, %s231
    %p238 = scmp.eq.s32.totalorder %s22, 3
    %p239 = por %p237, %p238
    %p240 = scmp.ne.s32.totalorder %s231, %s232
    %p241 = scmp.eq.s32.totalorder %s22, 0
    %p242 = por %p240, %p241
    %p243 = scmp.ne.s32.totalorder %s231, %s232
    %p244 = scmp.eq.s32.totalorder %s23, 3
    %p245 = por %p243, %p244
    %p247 = scmp.ne.s32.totalorder %s232, %s246
    %p248 = scmp.eq.s32.totalorder %s23, 0
    %p249 = por %p247, %p248
    %s251 = sadd.s32 %s250, 1
    %p254 = scmp.eq.s32.totalorder %s17, 3
    %p255 = scmp.ne.s32.totalorder %s250, %s252
    %p256 = scmp.eq.s32.totalorder %s17, 0
    %p257 = por %p255, %p256
    %p258 = scmp.ne.s32.totalorder %s250, %s252
    %p259 = scmp.eq.s32.totalorder %s22, 3
    %p260 = por %p258, %p259
    %p261 = scmp.ne.s32.totalorder %s252, %s253
    %p262 = scmp.eq.s32.totalorder %s22, 0
    %p263 = por %p261, %p262
    %p264 = scmp.ne.s32.totalorder %s252, %s253
    %p265 = scmp.eq.s32.totalorder %s23, 3
    %p266 = por %p264, %p265
    %p268 = scmp.ne.s32.totalorder %s253, %s267
    %p269 = scmp.eq.s32.totalorder %s23, 0
    %p270 = por %p268, %p269
    %s271 = ssub.s32 %s17, %s24
    %p272 = scmp.eq.s32.totalorder %s271, 0
    %s274 = sadd.s32 %s273, 1
    %s275 = scalar_select %p272, %s273, %s274
    %p278 = pneg %p272
    %p279 = scmp.eq.s32.totalorder %s17, 3
    %p280 = por %p278, %p279
    %p281 = scmp.ne.s32.totalorder %s273, %s276
    %p282 = scmp.eq.s32.totalorder %s17, 0
    %p283 = por %p281, %p282
    %p284 = scmp.ne.s32.totalorder %s273, %s276
    %p285 = scmp.eq.s32.totalorder %s22, 3
    %p286 = por %p284, %p285
    %p287 = scmp.ne.s32.totalorder %s276, %s277
    %p288 = scmp.eq.s32.totalorder %s22, 0
    %p289 = por %p287, %p288
    %p290 = scmp.ne.s32.totalorder %s276, %s277
    %p291 = scmp.eq.s32.totalorder %s23, 3
    %p292 = por %p290, %p291
    %p294 = scmp.ne.s32.totalorder %s277, %s293
    %p295 = scmp.eq.s32.totalorder %s23, 0
    %p296 = por %p294, %p295
    %p297 = scmp.le.s32.totalorder 1, %s17
    %p298 = scmp.lt.s32.totalorder %s17, 5
    %p299 = pnand %p297, %p298
    %p300 = pneg %p299
    // Predicated region
    $region9: #{multipart_segmentation_forward.5} parent=5 // pred_check
      _
    $region10: #{multipart_segmentation_forward.5} parent=5 // pred_check_branch
      %302 = sbr.rel (%p299) target = $region12
    $region11: #{multipart_segmentation_forward.5} parent=5 // pred_region
      %s303 = ssub.s32 %s17, 1
      // Predicated region
      $region13: #{multipart_segmentation_forward.5} parent=11 // pred_check
        %p304 = pneg %p116
      $region14: #{multipart_segmentation_forward.5} parent=11 // pred_check_branch
        %306 = sbr.rel (%p304) target = $region16
      $region15: #{multipart_segmentation_forward.5} parent=11 // pred_region
        _
      $region16: #{multipart_segmentation_forward.5} parent=11 // pred_fallthru
        _
      // Predicated region
      $region17: #{multipart_segmentation_forward.5} parent=11 // pred_check
        %p307 = pneg %p137
      $region18: #{multipart_segmentation_forward.5} parent=11 // pred_check_branch
        %309 = sbr.rel (%p307) target = $region20
      $region19: #{multipart_segmentation_forward.5} parent=11 // pred_region
        _
      $region20: #{multipart_segmentation_forward.5} parent=11 // pred_fallthru
        _
      // Predicated region
      $region21: #{multipart_segmentation_forward.5} parent=11 // pred_check
        %p310 = pneg %p158
      $region22: #{multipart_segmentation_forward.5} parent=11 // pred_check_branch
        %312 = sbr.rel (%p310) target = $region24
      $region23: #{multipart_segmentation_forward.5} parent=11 // pred_region
        _
      $region24: #{multipart_segmentation_forward.5} parent=11 // pred_fallthru
        _
      // Predicated region
      $region25: #{multipart_segmentation_forward.5} parent=11 // pred_check
        %p313 = pneg %p179
      $region26: #{multipart_segmentation_forward.5} parent=11 // pred_check_branch
        %315 = sbr.rel (%p313) target = $region28
      $region27: #{multipart_segmentation_forward.5} parent=11 // pred_region
        _
      $region28: #{multipart_segmentation_forward.5} parent=11 // pred_fallthru
        _
      // Predicated region
      $region29: #{multipart_segmentation_forward.5} parent=11 // pred_check
        %p316 = pneg %p200
      $region30: #{multipart_segmentation_forward.5} parent=11 // pred_check_branch
        %318 = sbr.rel (%p316) target = $region32
      $region31: #{multipart_segmentation_forward.5} parent=11 // pred_region
        _
      $region32: #{multipart_segmentation_forward.5} parent=11 // pred_fallthru
        _
      // Predicated region
      $region33: #{multipart_segmentation_forward.5} parent=11 // pred_check
        %p319 = pneg %p221
      $region34: #{multipart_segmentation_forward.5} parent=11 // pred_check_branch
        %321 = sbr.rel (%p319) target = $region36
      $region35: #{multipart_segmentation_forward.5} parent=11 // pred_region
        _
      $region36: #{multipart_segmentation_forward.5} parent=11 // pred_fallthru
        _
      // Predicated region
      $region37: #{multipart_segmentation_forward.5} parent=11 // pred_check
        %p322 = pneg %p242
      $region38: #{multipart_segmentation_forward.5} parent=11 // pred_check_branch
        %324 = sbr.rel (%p322) target = $region40
      $region39: #{multipart_segmentation_forward.5} parent=11 // pred_region
        _
      $region40: #{multipart_segmentation_forward.5} parent=11 // pred_fallthru
        _
      // Predicated region
      $region41: #{multipart_segmentation_forward.5} parent=11 // pred_check
        %p325 = pneg %p263
      $region42: #{multipart_segmentation_forward.5} parent=11 // pred_check_branch
        %327 = sbr.rel (%p325) target = $region44
      $region43: #{multipart_segmentation_forward.5} parent=11 // pred_region
        _
      $region44: #{multipart_segmentation_forward.5} parent=11 // pred_fallthru
        _
    $region12: #{multipart_segmentation_forward.5} parent=5 // pred_fallthru
      _
    %p328 = scmp.lt.s32.totalorder %s17, 4
    // Predicated region
    $region45: #{multipart_segmentation_forward.5} parent=5 // pred_check
      %p329 = pneg %p328
    $region46: #{multipart_segmentation_forward.5} parent=5 // pred_check_branch
      %331 = sbr.rel (%p329) target = $region48
    $region47: #{multipart_segmentation_forward.5} parent=5 // pred_region
      // Predicated region
      $region49: #{multipart_segmentation_forward.5} parent=47 // pred_check
        %p332 = pneg %p37
      $region50: #{multipart_segmentation_forward.5} parent=47 // pred_check_branch
        %334 = sbr.rel (%p332) target = $region52
      $region51: #{multipart_segmentation_forward.5} parent=47 // pred_region
        %s335 = smul.u32 64, %s17
        %p336 = scmp.lt.s32.totalorder %s335, 255
        %s337 = scalar_select %p336, %s335, 255
        %s338 = smul.addr %s337, 8
        %s339 = scalar_lea.vmem %s0, %s338
        %s340 = smul.u32 64, %s17
      $region52: #{multipart_segmentation_forward.5} parent=47 // pred_fallthru
        _
      // Predicated region
      $region53: #{multipart_segmentation_forward.5} parent=47 // pred_check
        %p341 = pneg %p63
      $region54: #{multipart_segmentation_forward.5} parent=47 // pred_check_branch
        %343 = sbr.rel (%p341) target = $region56
      $region55: #{multipart_segmentation_forward.5} parent=47 // pred_region
        %s344 = smul.u32 64, %s17
        %p345 = scmp.lt.s32.totalorder %s344, 255
        %s346 = scalar_select %p345, %s344, 255
        %s347 = smul.addr %s346, 8
        %s348 = scalar_lea.vmem %s1, %s347
        %s349 = smul.u32 64, %s17
      $region56: #{multipart_segmentation_forward.5} parent=47 // pred_fallthru
        _
      // Predicated region
      $region57: #{multipart_segmentation_forward.5} parent=47 // pred_check
        %p350 = pneg %p89
      $region58: #{multipart_segmentation_forward.5} parent=47 // pred_check_branch
        %352 = sbr.rel (%p350) target = $region60
      $region59: #{multipart_segmentation_forward.5} parent=47 // pred_region
        %s353 = smul.u32 8, %s17
        %p354 = scmp.lt.s32.totalorder %s353, 31
        %s355 = scalar_select %p354, %s353, 31
        %s356 = smul.addr %s355, 8
        %s357 = scalar_lea.vmem %s2, %s356
        %s358 = smul.u32 8, %s17
      $region60: #{multipart_segmentation_forward.5} parent=47 // pred_fallthru
        _
    $region48: #{multipart_segmentation_forward.5} parent=5 // pred_fallthru
      _
    %p359 = scmp.le.s32.totalorder 1, %s17
    %p360 = scmp.lt.s32.totalorder %s17, 5
    %p361 = pnand %p359, %p360
    %p362 = pneg %p361
    // Predicated region
    $region61: #{multipart_segmentation_forward.5} parent=5 // pred_check
      _
    $region62: #{multipart_segmentation_forward.5} parent=5 // pred_check_branch
      %364 = sbr.rel (%p361) target = $region64
    $region63: #{multipart_segmentation_forward.5} parent=5 // pred_region
      %s365 = ssub.s32 %s17, 1
      %s366 = smul.u32 64, %s22
      %p367 = scmp.lt.s32.totalorder %s366, 255
      %s368 = scalar_select %p367, %s366, 255
      %s369 = smul.addr %s368, 8
      %s370 = scalar_lea.vmem %s0, %s369
      %p371 = pneg %p43
      %p372 = pneg %p40
      %s373 = smul.u32 64, %s22
      %p374 = scmp.lt.s32.totalorder %s373, 255
      %s375 = scalar_select %p374, %s373, 255
      %s376 = smul.addr %s375, 8
      %s377 = scalar_lea.vmem %s1, %s376
      %p378 = pneg %p69
      %p379 = pneg %p66
      %s380 = smul.u32 8, %s22
      %p381 = scmp.lt.s32.totalorder %s380, 31
      %s382 = scalar_select %p381, %s380, 31
      %s383 = smul.addr %s382, 8
      %s384 = scalar_lea.vmem %s2, %s383
      %p385 = pneg %p95
      %p386 = pneg %p92
      %p387 = pneg %p116
      %p388 = pneg %p113
      %p389 = pneg %p137
      %p390 = pneg %p134
      %p391 = pneg %p158
      %p392 = pneg %p155
      %p393 = pneg %p179
      %p394 = pneg %p176
      %p395 = pneg %p200
      %p396 = pneg %p197
      %p397 = pneg %p221
      %p398 = pneg %p218
      %p399 = pneg %p242
      %p400 = pneg %p239
      %p401 = pneg %p263
      %p402 = pneg %p260
      %p403 = pneg %p289
      %p404 = pneg %p286
      %s405 = smul.u32 8, %s22
      %p406 = scmp.lt.s32.totalorder %s405, 31
      %s407 = scalar_select %p406, %s405, 31
      %s408 = smul.addr %s407, 8
      %s409 = scalar_lea.vmem %s11, %s408
      %s410 = smul.u32 64, %s22
      %p411 = scmp.lt.s32.totalorder %s410, 255
      %s412 = scalar_select %p411, %s410, 255
      %s413 = smul.addr %s412, 8
      %s414 = scalar_lea.vmem %s0, %s413
      %s415 = smul.u32 64, %s22
      %s416 = smul.u32 64, %s22
      %p417 = scmp.lt.s32.totalorder %s416, 255
      %s418 = scalar_select %p417, %s416, 255
      %s419 = smul.addr %s418, 8
      %s420 = scalar_lea.vmem %s1, %s419
      %s421 = smul.u32 64, %s22
      %s422 = smul.u32 8, %s22
      %p423 = scmp.lt.s32.totalorder %s422, 31
      %s424 = scalar_select %p423, %s422, 31
      %s425 = smul.addr %s424, 8
      %s426 = scalar_lea.vmem %s2, %s425
      %s427 = smul.u32 8, %s22
      %s428 = smul.u32 8, %s22
      %p429 = scmp.lt.s32.totalorder %s428, 31
      %s430 = scalar_select %p429, %s428, 31
      %s431 = smul.addr %s430, 8
      %s432 = scalar_lea.vmem %s11, %s431
      %s433 = smul.u32 8, %s22
      %v435 = vld [vmem:[%s414] sm:$0xff]
      %v436 = vld [vmem:[%s414 + $0x8] sm:$0xff]
      %v437 = vld [vmem:[%s414 + $0x10] sm:$0xff]
      %v438 = vld [vmem:[%s414 + $0x18] sm:$0xff]
      %v439 = vld [vmem:[%s414 + $0x20] sm:$0xff]
      %v440 = vld [vmem:[%s414 + $0x28] sm:$0xff]
      %v441 = vld [vmem:[%s414 + $0x30] sm:$0xff]
      %v442 = vld [vmem:[%s414 + $0x38] sm:$0xff]
      %v443 = vld [vmem:[%s414 + $0x40] sm:$0xff]
      %v444 = vld [vmem:[%s414 + $0x48] sm:$0xff]
      %v445 = vld [vmem:[%s414 + $0x50] sm:$0xff]
      %v446 = vld [vmem:[%s414 + $0x58] sm:$0xff]
      %v447 = vld [vmem:[%s414 + $0x60] sm:$0xff]
      %v448 = vld [vmem:[%s414 + $0x68] sm:$0xff]
      %v449 = vld [vmem:[%s414 + $0x70] sm:$0xff]
      %v450 = vld [vmem:[%s414 + $0x78] sm:$0xff]
      %v451 = vld [vmem:[%s414 + $0x80] sm:$0xff]
      %v452 = vld [vmem:[%s414 + $0x88] sm:$0xff]
      %v453 = vld [vmem:[%s414 + $0x90] sm:$0xff]
      %v454 = vld [vmem:[%s414 + $0x98] sm:$0xff]
      %v455 = vld [vmem:[%s414 + $0xa0] sm:$0xff]
      %v456 = vld [vmem:[%s414 + $0xa8] sm:$0xff]
      %v457 = vld [vmem:[%s414 + $0xb0] sm:$0xff]
      %v458 = vld [vmem:[%s414 + $0xb8] sm:$0xff]
      %v459 = vld [vmem:[%s414 + $0xc0] sm:$0xff]
      %v460 = vld [vmem:[%s414 + $0xc8] sm:$0xff]
      %v461 = vld [vmem:[%s414 + $0xd0] sm:$0xff]
      %v462 = vld [vmem:[%s414 + $0xd8] sm:$0xff]
      %v463 = vld [vmem:[%s414 + $0xe0] sm:$0xff]
      %v464 = vld [vmem:[%s414 + $0xe8] sm:$0xff]
      %v465 = vld [vmem:[%s414 + $0xf0] sm:$0xff]
      %v466 = vld [vmem:[%s414 + $0xf8] sm:$0xff]
      %v467 = vld [vmem:[%s414 + $0x100] sm:$0xff]
      %v468 = vld [vmem:[%s414 + $0x108] sm:$0xff]
      %v469 = vld [vmem:[%s414 + $0x110] sm:$0xff]
      %v470 = vld [vmem:[%s414 + $0x118] sm:$0xff]
      %v471 = vld [vmem:[%s414 + $0x120] sm:$0xff]
      %v472 = vld [vmem:[%s414 + $0x128] sm:$0xff]
      %v473 = vld [vmem:[%s414 + $0x130] sm:$0xff]
      %v474 = vld [vmem:[%s414 + $0x138] sm:$0xff]
      %v475 = vld [vmem:[%s414 + $0x140] sm:$0xff]
      %v476 = vld [vmem:[%s414 + $0x148] sm:$0xff]
      %v477 = vld [vmem:[%s414 + $0x150] sm:$0xff]
      %v478 = vld [vmem:[%s414 + $0x158] sm:$0xff]
      %v479 = vld [vmem:[%s414 + $0x160] sm:$0xff]
      %v480 = vld [vmem:[%s414 + $0x168] sm:$0xff]
      %v481 = vld [vmem:[%s414 + $0x170] sm:$0xff]
      %v482 = vld [vmem:[%s414 + $0x178] sm:$0xff]
      %v483 = vld [vmem:[%s414 + $0x180] sm:$0xff]
      %v484 = vld [vmem:[%s414 + $0x188] sm:$0xff]
      %v485 = vld [vmem:[%s414 + $0x190] sm:$0xff]
      %v486 = vld [vmem:[%s414 + $0x198] sm:$0xff]
      %v487 = vld [vmem:[%s414 + $0x1a0] sm:$0xff]
      %v488 = vld [vmem:[%s414 + $0x1a8] sm:$0xff]
      %v489 = vld [vmem:[%s414 + $0x1b0] sm:$0xff]
      %v490 = vld [vmem:[%s414 + $0x1b8] sm:$0xff]
      %v491 = vld [vmem:[%s414 + $0x1c0] sm:$0xff]
      %v492 = vld [vmem:[%s414 + $0x1c8] sm:$0xff]
      %v493 = vld [vmem:[%s414 + $0x1d0] sm:$0xff]
      %v494 = vld [vmem:[%s414 + $0x1d8] sm:$0xff]
      %v495 = vld [vmem:[%s414 + $0x1e0] sm:$0xff]
      %v496 = vld [vmem:[%s414 + $0x1e8] sm:$0xff]
      %v497 = vld [vmem:[%s414 + $0x1f0] sm:$0xff]
      %v498 = vld [vmem:[%s414 + $0x1f8] sm:$0xff]
      %v499 = vld [vmem:[%s420] sm:$0xff]
      %v500 = vld [vmem:[%s420 + $0x8] sm:$0xff]
      %v501 = vld [vmem:[%s420 + $0x10] sm:$0xff]
      %v502 = vld [vmem:[%s420 + $0x18] sm:$0xff]
      %v503 = vld [vmem:[%s420 + $0x20] sm:$0xff]
      %v504 = vld [vmem:[%s420 + $0x28] sm:$0xff]
      %v505 = vld [vmem:[%s420 + $0x30] sm:$0xff]
      %v506 = vld [vmem:[%s420 + $0x38] sm:$0xff]
      %v507 = vld [vmem:[%s420 + $0x40] sm:$0xff]
      %v508 = vld [vmem:[%s420 + $0x48] sm:$0xff]
      %v509 = vld [vmem:[%s420 + $0x50] sm:$0xff]
      %v510 = vld [vmem:[%s420 + $0x58] sm:$0xff]
      %v511 = vld [vmem:[%s420 + $0x60] sm:$0xff]
      %v512 = vld [vmem:[%s420 + $0x68] sm:$0xff]
      %v513 = vld [vmem:[%s420 + $0x70] sm:$0xff]
      %v514 = vld [vmem:[%s420 + $0x78] sm:$0xff]
      %v515 = vld [vmem:[%s420 + $0x80] sm:$0xff]
      %v516 = vld [vmem:[%s420 + $0x88] sm:$0xff]
      %v517 = vld [vmem:[%s420 + $0x90] sm:$0xff]
      %v518 = vld [vmem:[%s420 + $0x98] sm:$0xff]
      %v519 = vld [vmem:[%s420 + $0xa0] sm:$0xff]
      %v520 = vld [vmem:[%s420 + $0xa8] sm:$0xff]
      %v521 = vld [vmem:[%s420 + $0xb0] sm:$0xff]
      %v522 = vld [vmem:[%s420 + $0xb8] sm:$0xff]
      %v523 = vld [vmem:[%s420 + $0xc0] sm:$0xff]
      %v524 = vld [vmem:[%s420 + $0xc8] sm:$0xff]
      %v525 = vld [vmem:[%s420 + $0xd0] sm:$0xff]
      %v526 = vld [vmem:[%s420 + $0xd8] sm:$0xff]
      %v527 = vld [vmem:[%s420 + $0xe0] sm:$0xff]
      %v528 = vld [vmem:[%s420 + $0xe8] sm:$0xff]
      %v529 = vld [vmem:[%s420 + $0xf0] sm:$0xff]
      %v530 = vld [vmem:[%s420 + $0xf8] sm:$0xff]
      %v531 = vld [vmem:[%s420 + $0x100] sm:$0xff]
      %v532 = vld [vmem:[%s420 + $0x108] sm:$0xff]
      %v533 = vld [vmem:[%s420 + $0x110] sm:$0xff]
      %v534 = vld [vmem:[%s420 + $0x118] sm:$0xff]
      %v535 = vld [vmem:[%s420 + $0x120] sm:$0xff]
      %v536 = vld [vmem:[%s420 + $0x128] sm:$0xff]
      %v537 = vld [vmem:[%s420 + $0x130] sm:$0xff]
      %v538 = vld [vmem:[%s420 + $0x138] sm:$0xff]
      %v539 = vld [vmem:[%s420 + $0x140] sm:$0xff]
      %v540 = vld [vmem:[%s420 + $0x148] sm:$0xff]
      %v541 = vld [vmem:[%s420 + $0x150] sm:$0xff]
      %v542 = vld [vmem:[%s420 + $0x158] sm:$0xff]
      %v543 = vld [vmem:[%s420 + $0x160] sm:$0xff]
      %v544 = vld [vmem:[%s420 + $0x168] sm:$0xff]
      %v545 = vld [vmem:[%s420 + $0x170] sm:$0xff]
      %v546 = vld [vmem:[%s420 + $0x178] sm:$0xff]
      %v547 = vld [vmem:[%s420 + $0x180] sm:$0xff]
      %v548 = vld [vmem:[%s420 + $0x188] sm:$0xff]
      %v549 = vld [vmem:[%s420 + $0x190] sm:$0xff]
      %v550 = vld [vmem:[%s420 + $0x198] sm:$0xff]
      %v551 = vld [vmem:[%s420 + $0x1a0] sm:$0xff]
      %v552 = vld [vmem:[%s420 + $0x1a8] sm:$0xff]
      %v553 = vld [vmem:[%s420 + $0x1b0] sm:$0xff]
      %v554 = vld [vmem:[%s420 + $0x1b8] sm:$0xff]
      %v555 = vld [vmem:[%s420 + $0x1c0] sm:$0xff]
      %v556 = vld [vmem:[%s420 + $0x1c8] sm:$0xff]
      %v557 = vld [vmem:[%s420 + $0x1d0] sm:$0xff]
      %v558 = vld [vmem:[%s420 + $0x1d8] sm:$0xff]
      %v559 = vld [vmem:[%s420 + $0x1e0] sm:$0xff]
      %v560 = vld [vmem:[%s420 + $0x1e8] sm:$0xff]
      %v561 = vld [vmem:[%s420 + $0x1f0] sm:$0xff]
      %v562 = vld [vmem:[%s420 + $0x1f8] sm:$0xff]
      %v563 = vmul.f32 %v435, %v499
      %v564 = vmul.f32 %v436, %v500
      %v565 = vmul.f32 %v437, %v501
      %v566 = vmul.f32 %v438, %v502
      %v567 = vmul.f32 %v439, %v503
      %v568 = vmul.f32 %v440, %v504
      %v569 = vmul.f32 %v441, %v505
      %v570 = vmul.f32 %v442, %v506
      %v571 = vmul.f32 %v443, %v507
      %v572 = vmul.f32 %v444, %v508
      %v573 = vmul.f32 %v445, %v509
      %v574 = vmul.f32 %v446, %v510
      %v575 = vmul.f32 %v447, %v511
      %v576 = vmul.f32 %v448, %v512
      %v577 = vmul.f32 %v449, %v513
      %v578 = vmul.f32 %v450, %v514
      %v579 = vmul.f32 %v451, %v515
      %v580 = vmul.f32 %v452, %v516
      %v581 = vmul.f32 %v453, %v517
      %v582 = vmul.f32 %v454, %v518
      %v583 = vmul.f32 %v455, %v519
      %v584 = vmul.f32 %v456, %v520
      %v585 = vmul.f32 %v457, %v521
      %v586 = vmul.f32 %v458, %v522
      %v587 = vmul.f32 %v459, %v523
      %v588 = vmul.f32 %v460, %v524
      %v589 = vmul.f32 %v461, %v525
      %v590 = vmul.f32 %v462, %v526
      %v591 = vmul.f32 %v463, %v527
      %v592 = vmul.f32 %v464, %v528
      %v593 = vmul.f32 %v465, %v529
      %v594 = vmul.f32 %v466, %v530
      %v595 = vmul.f32 %v467, %v531
      %v596 = vmul.f32 %v468, %v532
      %v597 = vmul.f32 %v469, %v533
      %v598 = vmul.f32 %v470, %v534
      %v599 = vmul.f32 %v471, %v535
      %v600 = vmul.f32 %v472, %v536
      %v601 = vmul.f32 %v473, %v537
      %v602 = vmul.f32 %v474, %v538
      %v603 = vmul.f32 %v475, %v539
      %v604 = vmul.f32 %v476, %v540
      %v605 = vmul.f32 %v477, %v541
      %v606 = vmul.f32 %v478, %v542
      %v607 = vmul.f32 %v479, %v543
      %v608 = vmul.f32 %v480, %v544
      %v609 = vmul.f32 %v481, %v545
      %v610 = vmul.f32 %v482, %v546
      %v611 = vmul.f32 %v483, %v547
      %v612 = vmul.f32 %v484, %v548
      %v613 = vmul.f32 %v485, %v549
      %v614 = vmul.f32 %v486, %v550
      %v615 = vmul.f32 %v487, %v551
      %v616 = vmul.f32 %v488, %v552
      %v617 = vmul.f32 %v489, %v553
      %v618 = vmul.f32 %v490, %v554
      %v619 = vmul.f32 %v491, %v555
      %v620 = vmul.f32 %v492, %v556
      %v621 = vmul.f32 %v493, %v557
      %v622 = vmul.f32 %v494, %v558
      %v623 = vmul.f32 %v495, %v559
      %v624 = vmul.f32 %v496, %v560
      %v625 = vmul.f32 %v497, %v561
      %v626 = vmul.f32 %v498, %v562
      %vm627 = vcmask 195584
      %v628 = vsel %vm627, %v563, 0.0
      %v629 = vrot.slane %v628, 4
      %v630 = vadd.f32 %v628, %v629
      %v631 = vrot.slane %v630, 2
      %v632 = vadd.f32 %v630, %v631
      %v633 = vrot.slane %v632, 1
      %v634 = vadd.f32 %v632, %v633
      %v635 = vsel %vm627, %v564, 0.0
      %v636 = vrot.slane %v635, 4
      %v637 = vadd.f32 %v635, %v636
      %v638 = vrot.slane %v637, 2
      %v639 = vadd.f32 %v637, %v638
      %v640 = vrot.slane %v639, 1
      %v641 = vadd.f32 %v639, %v640
      %v642 = vsel %vm627, %v565, 0.0
      %v643 = vrot.slane %v642, 4
      %v644 = vadd.f32 %v642, %v643
      %v645 = vrot.slane %v644, 2
      %v646 = vadd.f32 %v644, %v645
      %v647 = vrot.slane %v646, 1
      %v648 = vadd.f32 %v646, %v647
      %v649 = vsel %vm627, %v566, 0.0
      %v650 = vrot.slane %v649, 4
      %v651 = vadd.f32 %v649, %v650
      %v652 = vrot.slane %v651, 2
      %v653 = vadd.f32 %v651, %v652
      %v654 = vrot.slane %v653, 1
      %v655 = vadd.f32 %v653, %v654
      %v656 = vsel %vm627, %v567, 0.0
      %v657 = vrot.slane %v656, 4
      %v658 = vadd.f32 %v656, %v657
      %v659 = vrot.slane %v658, 2
      %v660 = vadd.f32 %v658, %v659
      %v661 = vrot.slane %v660, 1
      %v662 = vadd.f32 %v660, %v661
      %v663 = vsel %vm627, %v568, 0.0
      %v664 = vrot.slane %v663, 4
      %v665 = vadd.f32 %v663, %v664
      %v666 = vrot.slane %v665, 2
      %v667 = vadd.f32 %v665, %v666
      %v668 = vrot.slane %v667, 1
      %v669 = vadd.f32 %v667, %v668
      %v670 = vsel %vm627, %v569, 0.0
      %v671 = vrot.slane %v670, 4
      %v672 = vadd.f32 %v670, %v671
      %v673 = vrot.slane %v672, 2
      %v674 = vadd.f32 %v672, %v673
      %v675 = vrot.slane %v674, 1
      %v676 = vadd.f32 %v674, %v675
      %v677 = vsel %vm627, %v570, 0.0
      %v678 = vrot.slane %v677, 4
      %v679 = vadd.f32 %v677, %v678
      %v680 = vrot.slane %v679, 2
      %v681 = vadd.f32 %v679, %v680
      %v682 = vrot.slane %v681, 1
      %v683 = vadd.f32 %v681, %v682
      %v684 = vsel %vm627, %v571, 0.0
      %v685 = vrot.slane %v684, 4
      %v686 = vadd.f32 %v684, %v685
      %v687 = vrot.slane %v686, 2
      %v688 = vadd.f32 %v686, %v687
      %v689 = vrot.slane %v688, 1
      %v690 = vadd.f32 %v688, %v689
      %v691 = vsel %vm627, %v572, 0.0
      %v692 = vrot.slane %v691, 4
      %v693 = vadd.f32 %v691, %v692
      %v694 = vrot.slane %v693, 2
      %v695 = vadd.f32 %v693, %v694
      %v696 = vrot.slane %v695, 1
      %v697 = vadd.f32 %v695, %v696
      %v698 = vsel %vm627, %v573, 0.0
      %v699 = vrot.slane %v698, 4
      %v700 = vadd.f32 %v698, %v699
      %v701 = vrot.slane %v700, 2
      %v702 = vadd.f32 %v700, %v701
      %v703 = vrot.slane %v702, 1
      %v704 = vadd.f32 %v702, %v703
      %v705 = vsel %vm627, %v574, 0.0
      %v706 = vrot.slane %v705, 4
      %v707 = vadd.f32 %v705, %v706
      %v708 = vrot.slane %v707, 2
      %v709 = vadd.f32 %v707, %v708
      %v710 = vrot.slane %v709, 1
      %v711 = vadd.f32 %v709, %v710
      %v712 = vsel %vm627, %v575, 0.0
      %v713 = vrot.slane %v712, 4
      %v714 = vadd.f32 %v712, %v713
      %v715 = vrot.slane %v714, 2
      %v716 = vadd.f32 %v714, %v715
      %v717 = vrot.slane %v716, 1
      %v718 = vadd.f32 %v716, %v717
      %v719 = vsel %vm627, %v576, 0.0
      %v720 = vrot.slane %v719, 4
      %v721 = vadd.f32 %v719, %v720
      %v722 = vrot.slane %v721, 2
      %v723 = vadd.f32 %v721, %v722
      %v724 = vrot.slane %v723, 1
      %v725 = vadd.f32 %v723, %v724
      %v726 = vsel %vm627, %v577, 0.0
      %v727 = vrot.slane %v726, 4
      %v728 = vadd.f32 %v726, %v727
      %v729 = vrot.slane %v728, 2
      %v730 = vadd.f32 %v728, %v729
      %v731 = vrot.slane %v730, 1
      %v732 = vadd.f32 %v730, %v731
      %v733 = vsel %vm627, %v578, 0.0
      %v734 = vrot.slane %v733, 4
      %v735 = vadd.f32 %v733, %v734
      %v736 = vrot.slane %v735, 2
      %v737 = vadd.f32 %v735, %v736
      %v738 = vrot.slane %v737, 1
      %v739 = vadd.f32 %v737, %v738
      %v740 = vsel %vm627, %v579, 0.0
      %v741 = vrot.slane %v740, 4
      %v742 = vadd.f32 %v740, %v741
      %v743 = vrot.slane %v742, 2
      %v744 = vadd.f32 %v742, %v743
      %v745 = vrot.slane %v744, 1
      %v746 = vadd.f32 %v744, %v745
      %v747 = vsel %vm627, %v580, 0.0
      %v748 = vrot.slane %v747, 4
      %v749 = vadd.f32 %v747, %v748
      %v750 = vrot.slane %v749, 2
      %v751 = vadd.f32 %v749, %v750
      %v752 = vrot.slane %v751, 1
      %v753 = vadd.f32 %v751, %v752
      %v754 = vsel %vm627, %v581, 0.0
      %v755 = vrot.slane %v754, 4
      %v756 = vadd.f32 %v754, %v755
      %v757 = vrot.slane %v756, 2
      %v758 = vadd.f32 %v756, %v757
      %v759 = vrot.slane %v758, 1
      %v760 = vadd.f32 %v758, %v759
      %v761 = vsel %vm627, %v582, 0.0
      %v762 = vrot.slane %v761, 4
      %v763 = vadd.f32 %v761, %v762
      %v764 = vrot.slane %v763, 2
      %v765 = vadd.f32 %v763, %v764
      %v766 = vrot.slane %v765, 1
      %v767 = vadd.f32 %v765, %v766
      %v768 = vsel %vm627, %v583, 0.0
      %v769 = vrot.slane %v768, 4
      %v770 = vadd.f32 %v768, %v769
      %v771 = vrot.slane %v770, 2
      %v772 = vadd.f32 %v770, %v771
      %v773 = vrot.slane %v772, 1
      %v774 = vadd.f32 %v772, %v773
      %v775 = vsel %vm627, %v584, 0.0
      %v776 = vrot.slane %v775, 4
      %v777 = vadd.f32 %v775, %v776
      %v778 = vrot.slane %v777, 2
      %v779 = vadd.f32 %v777, %v778
      %v780 = vrot.slane %v779, 1
      %v781 = vadd.f32 %v779, %v780
      %v782 = vsel %vm627, %v585, 0.0
      %v783 = vrot.slane %v782, 4
      %v784 = vadd.f32 %v782, %v783
      %v785 = vrot.slane %v784, 2
      %v786 = vadd.f32 %v784, %v785
      %v787 = vrot.slane %v786, 1
      %v788 = vadd.f32 %v786, %v787
      %v789 = vsel %vm627, %v586, 0.0
      %v790 = vrot.slane %v789, 4
      %v791 = vadd.f32 %v789, %v790
      %v792 = vrot.slane %v791, 2
      %v793 = vadd.f32 %v791, %v792
      %v794 = vrot.slane %v793, 1
      %v795 = vadd.f32 %v793, %v794
      %v796 = vsel %vm627, %v587, 0.0
      %v797 = vrot.slane %v796, 4
      %v798 = vadd.f32 %v796, %v797
      %v799 = vrot.slane %v798, 2
      %v800 = vadd.f32 %v798, %v799
      %v801 = vrot.slane %v800, 1
      %v802 = vadd.f32 %v800, %v801
      %v803 = vsel %vm627, %v588, 0.0
      %v804 = vrot.slane %v803, 4
      %v805 = vadd.f32 %v803, %v804
      %v806 = vrot.slane %v805, 2
      %v807 = vadd.f32 %v805, %v806
      %v808 = vrot.slane %v807, 1
      %v809 = vadd.f32 %v807, %v808
      %v810 = vsel %vm627, %v589, 0.0
      %v811 = vrot.slane %v810, 4
      %v812 = vadd.f32 %v810, %v811
      %v813 = vrot.slane %v812, 2
      %v814 = vadd.f32 %v812, %v813
      %v815 = vrot.slane %v814, 1
      %v816 = vadd.f32 %v814, %v815
      %v817 = vsel %vm627, %v590, 0.0
      %v818 = vrot.slane %v817, 4
      %v819 = vadd.f32 %v817, %v818
      %v820 = vrot.slane %v819, 2
      %v821 = vadd.f32 %v819, %v820
      %v822 = vrot.slane %v821, 1
      %v823 = vadd.f32 %v821, %v822
      %v824 = vsel %vm627, %v591, 0.0
      %v825 = vrot.slane %v824, 4
      %v826 = vadd.f32 %v824, %v825
      %v827 = vrot.slane %v826, 2
      %v828 = vadd.f32 %v826, %v827
      %v829 = vrot.slane %v828, 1
      %v830 = vadd.f32 %v828, %v829
      %v831 = vsel %vm627, %v592, 0.0
      %v832 = vrot.slane %v831, 4
      %v833 = vadd.f32 %v831, %v832
      %v834 = vrot.slane %v833, 2
      %v835 = vadd.f32 %v833, %v834
      %v836 = vrot.slane %v835, 1
      %v837 = vadd.f32 %v835, %v836
      %v838 = vsel %vm627, %v593, 0.0
      %v839 = vrot.slane %v838, 4
      %v840 = vadd.f32 %v838, %v839
      %v841 = vrot.slane %v840, 2
      %v842 = vadd.f32 %v840, %v841
      %v843 = vrot.slane %v842, 1
      %v844 = vadd.f32 %v842, %v843
      %v845 = vsel %vm627, %v594, 0.0
      %v846 = vrot.slane %v845, 4
      %v847 = vadd.f32 %v845, %v846
      %v848 = vrot.slane %v847, 2
      %v849 = vadd.f32 %v847, %v848
      %v850 = vrot.slane %v849, 1
      %v851 = vadd.f32 %v849, %v850
      %v852 = vsel %vm627, %v595, 0.0
      %v853 = vrot.slane %v852, 4
      %v854 = vadd.f32 %v852, %v853
      %v855 = vrot.slane %v854, 2
      %v856 = vadd.f32 %v854, %v855
      %v857 = vrot.slane %v856, 1
      %v858 = vadd.f32 %v856, %v857
      %v859 = vsel %vm627, %v596, 0.0
      %v860 = vrot.slane %v859, 4
      %v861 = vadd.f32 %v859, %v860
      %v862 = vrot.slane %v861, 2
      %v863 = vadd.f32 %v861, %v862
      %v864 = vrot.slane %v863, 1
      %v865 = vadd.f32 %v863, %v864
      %v866 = vsel %vm627, %v597, 0.0
      %v867 = vrot.slane %v866, 4
      %v868 = vadd.f32 %v866, %v867
      %v869 = vrot.slane %v868, 2
      %v870 = vadd.f32 %v868, %v869
      %v871 = vrot.slane %v870, 1
      %v872 = vadd.f32 %v870, %v871
      %v873 = vsel %vm627, %v598, 0.0
      %v874 = vrot.slane %v873, 4
      %v875 = vadd.f32 %v873, %v874
      %v876 = vrot.slane %v875, 2
      %v877 = vadd.f32 %v875, %v876
      %v878 = vrot.slane %v877, 1
      %v879 = vadd.f32 %v877, %v878
      %v880 = vsel %vm627, %v599, 0.0
      %v881 = vrot.slane %v880, 4
      %v882 = vadd.f32 %v880, %v881
      %v883 = vrot.slane %v882, 2
      %v884 = vadd.f32 %v882, %v883
      %v885 = vrot.slane %v884, 1
      %v886 = vadd.f32 %v884, %v885
      %v887 = vsel %vm627, %v600, 0.0
      %v888 = vrot.slane %v887, 4
      %v889 = vadd.f32 %v887, %v888
      %v890 = vrot.slane %v889, 2
      %v891 = vadd.f32 %v889, %v890
      %v892 = vrot.slane %v891, 1
      %v893 = vadd.f32 %v891, %v892
      %v894 = vsel %vm627, %v601, 0.0
      %v895 = vrot.slane %v894, 4
      %v896 = vadd.f32 %v894, %v895
      %v897 = vrot.slane %v896, 2
      %v898 = vadd.f32 %v896, %v897
      %v899 = vrot.slane %v898, 1
      %v900 = vadd.f32 %v898, %v899
      %v901 = vsel %vm627, %v602, 0.0
      %v902 = vrot.slane %v901, 4
      %v903 = vadd.f32 %v901, %v902
      %v904 = vrot.slane %v903, 2
      %v905 = vadd.f32 %v903, %v904
      %v906 = vrot.slane %v905, 1
      %v907 = vadd.f32 %v905, %v906
      %v908 = vsel %vm627, %v603, 0.0
      %v909 = vrot.slane %v908, 4
      %v910 = vadd.f32 %v908, %v909
      %v911 = vrot.slane %v910, 2
      %v912 = vadd.f32 %v910, %v911
      %v913 = vrot.slane %v912, 1
      %v914 = vadd.f32 %v912, %v913
      %v915 = vsel %vm627, %v604, 0.0
      %v916 = vrot.slane %v915, 4
      %v917 = vadd.f32 %v915, %v916
      %v918 = vrot.slane %v917, 2
      %v919 = vadd.f32 %v917, %v918
      %v920 = vrot.slane %v919, 1
      %v921 = vadd.f32 %v919, %v920
      %v922 = vsel %vm627, %v605, 0.0
      %v923 = vrot.slane %v922, 4
      %v924 = vadd.f32 %v922, %v923
      %v925 = vrot.slane %v924, 2
      %v926 = vadd.f32 %v924, %v925
      %v927 = vrot.slane %v926, 1
      %v928 = vadd.f32 %v926, %v927
      %v929 = vsel %vm627, %v606, 0.0
      %v930 = vrot.slane %v929, 4
      %v931 = vadd.f32 %v929, %v930
      %v932 = vrot.slane %v931, 2
      %v933 = vadd.f32 %v931, %v932
      %v934 = vrot.slane %v933, 1
      %v935 = vadd.f32 %v933, %v934
      %v936 = vsel %vm627, %v607, 0.0
      %v937 = vrot.slane %v936, 4
      %v938 = vadd.f32 %v936, %v937
      %v939 = vrot.slane %v938, 2
      %v940 = vadd.f32 %v938, %v939
      %v941 = vrot.slane %v940, 1
      %v942 = vadd.f32 %v940, %v941
      %v943 = vsel %vm627, %v608, 0.0
      %v944 = vrot.slane %v943, 4
      %v945 = vadd.f32 %v943, %v944
      %v946 = vrot.slane %v945, 2
      %v947 = vadd.f32 %v945, %v946
      %v948 = vrot.slane %v947, 1
      %v949 = vadd.f32 %v947, %v948
      %v950 = vsel %vm627, %v609, 0.0
      %v951 = vrot.slane %v950, 4
      %v952 = vadd.f32 %v950, %v951
      %v953 = vrot.slane %v952, 2
      %v954 = vadd.f32 %v952, %v953
      %v955 = vrot.slane %v954, 1
      %v956 = vadd.f32 %v954, %v955
      %v957 = vsel %vm627, %v610, 0.0
      %v958 = vrot.slane %v957, 4
      %v959 = vadd.f32 %v957, %v958
      %v960 = vrot.slane %v959, 2
      %v961 = vadd.f32 %v959, %v960
      %v962 = vrot.slane %v961, 1
      %v963 = vadd.f32 %v961, %v962
      %v964 = vsel %vm627, %v611, 0.0
      %v965 = vrot.slane %v964, 4
      %v966 = vadd.f32 %v964, %v965
      %v967 = vrot.slane %v966, 2
      %v968 = vadd.f32 %v966, %v967
      %v969 = vrot.slane %v968, 1
      %v970 = vadd.f32 %v968, %v969
      %v971 = vsel %vm627, %v612, 0.0
      %v972 = vrot.slane %v971, 4
      %v973 = vadd.f32 %v971, %v972
      %v974 = vrot.slane %v973, 2
      %v975 = vadd.f32 %v973, %v974
      %v976 = vrot.slane %v975, 1
      %v977 = vadd.f32 %v975, %v976
      %v978 = vsel %vm627, %v613, 0.0
      %v979 = vrot.slane %v978, 4
      %v980 = vadd.f32 %v978, %v979
      %v981 = vrot.slane %v980, 2
      %v982 = vadd.f32 %v980, %v981
      %v983 = vrot.slane %v982, 1
      %v984 = vadd.f32 %v982, %v983
      %v985 = vsel %vm627, %v614, 0.0
      %v986 = vrot.slane %v985, 4
      %v987 = vadd.f32 %v985, %v986
      %v988 = vrot.slane %v987, 2
      %v989 = vadd.f32 %v987, %v988
      %v990 = vrot.slane %v989, 1
      %v991 = vadd.f32 %v989, %v990
      %v992 = vsel %vm627, %v615, 0.0
      %v993 = vrot.slane %v992, 4
      %v994 = vadd.f32 %v992, %v993
      %v995 = vrot.slane %v994, 2
      %v996 = vadd.f32 %v994, %v995
      %v997 = vrot.slane %v996, 1
      %v998 = vadd.f32 %v996, %v997
      %v999 = vsel %vm627, %v616, 0.0
      %v1000 = vrot.slane %v999, 4
      %v1001 = vadd.f32 %v999, %v1000
      %v1002 = vrot.slane %v1001, 2
      %v1003 = vadd.f32 %v1001, %v1002
      %v1004 = vrot.slane %v1003, 1
      %v1005 = vadd.f32 %v1003, %v1004
      %v1006 = vsel %vm627, %v617, 0.0
      %v1007 = vrot.slane %v1006, 4
      %v1008 = vadd.f32 %v1006, %v1007
      %v1009 = vrot.slane %v1008, 2
      %v1010 = vadd.f32 %v1008, %v1009
      %v1011 = vrot.slane %v1010, 1
      %v1012 = vadd.f32 %v1010, %v1011
      %v1013 = vsel %vm627, %v618, 0.0
      %v1014 = vrot.slane %v1013, 4
      %v1015 = vadd.f32 %v1013, %v1014
      %v1016 = vrot.slane %v1015, 2
      %v1017 = vadd.f32 %v1015, %v1016
      %v1018 = vrot.slane %v1017, 1
      %v1019 = vadd.f32 %v1017, %v1018
      %v1020 = vsel %vm627, %v619, 0.0
      %v1021 = vrot.slane %v1020, 4
      %v1022 = vadd.f32 %v1020, %v1021
      %v1023 = vrot.slane %v1022, 2
      %v1024 = vadd.f32 %v1022, %v1023
      %v1025 = vrot.slane %v1024, 1
      %v1026 = vadd.f32 %v1024, %v1025
      %v1027 = vsel %vm627, %v620, 0.0
      %v1028 = vrot.slane %v1027, 4
      %v1029 = vadd.f32 %v1027, %v1028
      %v1030 = vrot.slane %v1029, 2
      %v1031 = vadd.f32 %v1029, %v1030
      %v1032 = vrot.slane %v1031, 1
      %v1033 = vadd.f32 %v1031, %v1032
      %v1034 = vsel %vm627, %v621, 0.0
      %v1035 = vrot.slane %v1034, 4
      %v1036 = vadd.f32 %v1034, %v1035
      %v1037 = vrot.slane %v1036, 2
      %v1038 = vadd.f32 %v1036, %v1037
      %v1039 = vrot.slane %v1038, 1
      %v1040 = vadd.f32 %v1038, %v1039
      %v1041 = vsel %vm627, %v622, 0.0
      %v1042 = vrot.slane %v1041, 4
      %v1043 = vadd.f32 %v1041, %v1042
      %v1044 = vrot.slane %v1043, 2
      %v1045 = vadd.f32 %v1043, %v1044
      %v1046 = vrot.slane %v1045, 1
      %v1047 = vadd.f32 %v1045, %v1046
      %v1048 = vsel %vm627, %v623, 0.0
      %v1049 = vrot.slane %v1048, 4
      %v1050 = vadd.f32 %v1048, %v1049
      %v1051 = vrot.slane %v1050, 2
      %v1052 = vadd.f32 %v1050, %v1051
      %v1053 = vrot.slane %v1052, 1
      %v1054 = vadd.f32 %v1052, %v1053
      %v1055 = vsel %vm627, %v624, 0.0
      %v1056 = vrot.slane %v1055, 4
      %v1057 = vadd.f32 %v1055, %v1056
      %v1058 = vrot.slane %v1057, 2
      %v1059 = vadd.f32 %v1057, %v1058
      %v1060 = vrot.slane %v1059, 1
      %v1061 = vadd.f32 %v1059, %v1060
      %v1062 = vsel %vm627, %v625, 0.0
      %v1063 = vrot.slane %v1062, 4
      %v1064 = vadd.f32 %v1062, %v1063
      %v1065 = vrot.slane %v1064, 2
      %v1066 = vadd.f32 %v1064, %v1065
      %v1067 = vrot.slane %v1066, 1
      %v1068 = vadd.f32 %v1066, %v1067
      %v1069 = vsel %vm627, %v626, 0.0
      %v1070 = vrot.slane %v1069, 4
      %v1071 = vadd.f32 %v1069, %v1070
      %v1072 = vrot.slane %v1071, 2
      %v1073 = vadd.f32 %v1071, %v1072
      %v1074 = vrot.slane %v1073, 1
      %v1075 = vadd.f32 %v1073, %v1074
      %v1076 = vpack.c.bf16 %v634, %v634
      %v1077 = vpack.c.bf16 %v641, %v641
      %v1078 = vpack.c.bf16 %v648, %v648
      %v1079 = vpack.c.bf16 %v655, %v655
      %v1080 = vpack.c.bf16 %v662, %v662
      %v1081 = vpack.c.bf16 %v669, %v669
      %v1082 = vpack.c.bf16 %v676, %v676
      %v1083 = vpack.c.bf16 %v683, %v683
      %v1084 = vpack.c.bf16 %v690, %v690
      %v1085 = vpack.c.bf16 %v697, %v697
      %v1086 = vpack.c.bf16 %v704, %v704
      %v1087 = vpack.c.bf16 %v711, %v711
      %v1088 = vpack.c.bf16 %v718, %v718
      %v1089 = vpack.c.bf16 %v725, %v725
      %v1090 = vpack.c.bf16 %v732, %v732
      %v1091 = vpack.c.bf16 %v739, %v739
      %v1092 = vpack.c.bf16 %v746, %v746
      %v1093 = vpack.c.bf16 %v753, %v753
      %v1094 = vpack.c.bf16 %v760, %v760
      %v1095 = vpack.c.bf16 %v767, %v767
      %v1096 = vpack.c.bf16 %v774, %v774
      %v1097 = vpack.c.bf16 %v781, %v781
      %v1098 = vpack.c.bf16 %v788, %v788
      %v1099 = vpack.c.bf16 %v795, %v795
      %v1100 = vpack.c.bf16 %v802, %v802
      %v1101 = vpack.c.bf16 %v809, %v809
      %v1102 = vpack.c.bf16 %v816, %v816
      %v1103 = vpack.c.bf16 %v823, %v823
      %v1104 = vpack.c.bf16 %v830, %v830
      %v1105 = vpack.c.bf16 %v837, %v837
      %v1106 = vpack.c.bf16 %v844, %v844
      %v1107 = vpack.c.bf16 %v851, %v851
      %v1108 = vpack.c.bf16 %v858, %v858
      %v1109 = vpack.c.bf16 %v865, %v865
      %v1110 = vpack.c.bf16 %v872, %v872
      %v1111 = vpack.c.bf16 %v879, %v879
      %v1112 = vpack.c.bf16 %v886, %v886
      %v1113 = vpack.c.bf16 %v893, %v893
      %v1114 = vpack.c.bf16 %v900, %v900
      %v1115 = vpack.c.bf16 %v907, %v907
      %v1116 = vpack.c.bf16 %v914, %v914
      %v1117 = vpack.c.bf16 %v921, %v921
      %v1118 = vpack.c.bf16 %v928, %v928
      %v1119 = vpack.c.bf16 %v935, %v935
      %v1120 = vpack.c.bf16 %v942, %v942
      %v1121 = vpack.c.bf16 %v949, %v949
      %v1122 = vpack.c.bf16 %v956, %v956
      %v1123 = vpack.c.bf16 %v963, %v963
      %v1124 = vpack.c.bf16 %v970, %v970
      %v1125 = vpack.c.bf16 %v977, %v977
      %v1126 = vpack.c.bf16 %v984, %v984
      %v1127 = vpack.c.bf16 %v991, %v991
      %v1128 = vpack.c.bf16 %v998, %v998
      %v1129 = vpack.c.bf16 %v1005, %v1005
      %v1130 = vpack.c.bf16 %v1012, %v1012
      %v1131 = vpack.c.bf16 %v1019, %v1019
      %v1132 = vpack.c.bf16 %v1026, %v1026
      %v1133 = vpack.c.bf16 %v1033, %v1033
      %v1134 = vpack.c.bf16 %v1040, %v1040
      %v1135 = vpack.c.bf16 %v1047, %v1047
      %v1136 = vpack.c.bf16 %v1054, %v1054
      %v1137 = vpack.c.bf16 %v1061, %v1061
      %v1138 = vpack.c.bf16 %v1068, %v1068
      %v1139 = vpack.c.bf16 %v1075, %v1075
      %v1140 = vld [vmem:[%s3] sm:$0xf]
      %v1141 = vld [vmem:[%s3 + $0x4] sm:$0xf]
      %v1142 = vld [vmem:[%s3 + $0x8] sm:$0xf]
      %v1143 = vld [vmem:[%s4] sm:$0x1]
      %v1145 = vperm.slane %v1143, 0
      %v1211 = vunpack.c.l.b16 %v1076
      %v1212 = vunpack.c.l.b16 %v1077
      %v1213 = vunpack.c.l.b16 %v1078
      %v1214 = vunpack.c.l.b16 %v1079
      %v1215 = vunpack.c.l.b16 %v1080
      %v1216 = vunpack.c.l.b16 %v1081
      %v1217 = vunpack.c.l.b16 %v1082
      %v1218 = vunpack.c.l.b16 %v1083
      %v1219 = vunpack.c.l.b16 %v1084
      %v1220 = vunpack.c.l.b16 %v1085
      %v1221 = vunpack.c.l.b16 %v1086
      %v1222 = vunpack.c.l.b16 %v1087
      %v1223 = vunpack.c.l.b16 %v1088
      %v1224 = vunpack.c.l.b16 %v1089
      %v1225 = vunpack.c.l.b16 %v1090
      %v1226 = vunpack.c.l.b16 %v1091
      %v1227 = vunpack.c.l.b16 %v1092
      %v1228 = vunpack.c.l.b16 %v1093
      %v1229 = vunpack.c.l.b16 %v1094
      %v1230 = vunpack.c.l.b16 %v1095
      %v1231 = vunpack.c.l.b16 %v1096
      %v1232 = vunpack.c.l.b16 %v1097
      %v1233 = vunpack.c.l.b16 %v1098
      %v1234 = vunpack.c.l.b16 %v1099
      %v1235 = vunpack.c.l.b16 %v1100
      %v1236 = vunpack.c.l.b16 %v1101
      %v1237 = vunpack.c.l.b16 %v1102
      %v1238 = vunpack.c.l.b16 %v1103
      %v1239 = vunpack.c.l.b16 %v1104
      %v1240 = vunpack.c.l.b16 %v1105
      %v1241 = vunpack.c.l.b16 %v1106
      %v1242 = vunpack.c.l.b16 %v1107
      %v1243 = vunpack.c.l.b16 %v1108
      %v1244 = vunpack.c.l.b16 %v1109
      %v1245 = vunpack.c.l.b16 %v1110
      %v1246 = vunpack.c.l.b16 %v1111
      %v1247 = vunpack.c.l.b16 %v1112
      %v1248 = vunpack.c.l.b16 %v1113
      %v1249 = vunpack.c.l.b16 %v1114
      %v1250 = vunpack.c.l.b16 %v1115
      %v1251 = vunpack.c.l.b16 %v1116
      %v1252 = vunpack.c.l.b16 %v1117
      %v1253 = vunpack.c.l.b16 %v1118
      %v1254 = vunpack.c.l.b16 %v1119
      %v1255 = vunpack.c.l.b16 %v1120
      %v1256 = vunpack.c.l.b16 %v1121
      %v1257 = vunpack.c.l.b16 %v1122
      %v1258 = vunpack.c.l.b16 %v1123
      %v1259 = vunpack.c.l.b16 %v1124
      %v1260 = vunpack.c.l.b16 %v1125
      %v1261 = vunpack.c.l.b16 %v1126
      %v1262 = vunpack.c.l.b16 %v1127
      %v1263 = vunpack.c.l.b16 %v1128
      %v1264 = vunpack.c.l.b16 %v1129
      %v1265 = vunpack.c.l.b16 %v1130
      %v1266 = vunpack.c.l.b16 %v1131
      %v1267 = vunpack.c.l.b16 %v1132
      %v1268 = vunpack.c.l.b16 %v1133
      %v1269 = vunpack.c.l.b16 %v1134
      %v1270 = vunpack.c.l.b16 %v1135
      %v1271 = vunpack.c.l.b16 %v1136
      %v1272 = vunpack.c.l.b16 %v1137
      %v1273 = vunpack.c.l.b16 %v1138
      %v1274 = vunpack.c.l.b16 %v1139
      %vm1275 = vcmask 1041409
      %v1276 = vsel %vm1275, %v1212, %v1211
      %vm1277 = vcmask 1042434
      %v1278 = vsel %vm1277, %v1213, %v1276
      %vm1279 = vcmask 1043459
      %v1280 = vsel %vm1279, %v1214, %v1278
      %vm1281 = vcmask 1044484
      %v1282 = vsel %vm1281, %v1215, %v1280
      %vm1283 = vcmask 1045509
      %v1284 = vsel %vm1283, %v1216, %v1282
      %vm1285 = vcmask 1046534
      %v1286 = vsel %vm1285, %v1217, %v1284
      %vm1287 = vcmask 1047559
      %v1288 = vsel %vm1287, %v1218, %v1286
      %v1289 = vsel %vm1275, %v1220, %v1219
      %v1290 = vsel %vm1277, %v1221, %v1289
      %v1291 = vsel %vm1279, %v1222, %v1290
      %v1292 = vsel %vm1281, %v1223, %v1291
      %v1293 = vsel %vm1283, %v1224, %v1292
      %v1294 = vsel %vm1285, %v1225, %v1293
      %v1295 = vsel %vm1287, %v1226, %v1294
      %v1296 = vsel %vm1275, %v1228, %v1227
      %v1297 = vsel %vm1277, %v1229, %v1296
      %v1298 = vsel %vm1279, %v1230, %v1297
      %v1299 = vsel %vm1281, %v1231, %v1298
      %v1300 = vsel %vm1283, %v1232, %v1299
      %v1301 = vsel %vm1285, %v1233, %v1300
      %v1302 = vsel %vm1287, %v1234, %v1301
      %v1303 = vsel %vm1275, %v1236, %v1235
      %v1304 = vsel %vm1277, %v1237, %v1303
      %v1305 = vsel %vm1279, %v1238, %v1304
      %v1306 = vsel %vm1281, %v1239, %v1305
      %v1307 = vsel %vm1283, %v1240, %v1306
      %v1308 = vsel %vm1285, %v1241, %v1307
      %v1309 = vsel %vm1287, %v1242, %v1308
      %v1310 = vsel %vm1275, %v1244, %v1243
      %v1311 = vsel %vm1277, %v1245, %v1310
      %v1312 = vsel %vm1279, %v1246, %v1311
      %v1313 = vsel %vm1281, %v1247, %v1312
      %v1314 = vsel %vm1283, %v1248, %v1313
      %v1315 = vsel %vm1285, %v1249, %v1314
      %v1316 = vsel %vm1287, %v1250, %v1315
      %v1317 = vsel %vm1275, %v1252, %v1251
      %v1318 = vsel %vm1277, %v1253, %v1317
      %v1319 = vsel %vm1279, %v1254, %v1318
      %v1320 = vsel %vm1281, %v1255, %v1319
      %v1321 = vsel %vm1283, %v1256, %v1320
      %v1322 = vsel %vm1285, %v1257, %v1321
      %v1323 = vsel %vm1287, %v1258, %v1322
      %v1324 = vsel %vm1275, %v1260, %v1259
      %v1325 = vsel %vm1277, %v1261, %v1324
      %v1326 = vsel %vm1279, %v1262, %v1325
      %v1327 = vsel %vm1281, %v1263, %v1326
      %v1328 = vsel %vm1283, %v1264, %v1327
      %v1329 = vsel %vm1285, %v1265, %v1328
      %v1330 = vsel %vm1287, %v1266, %v1329
      %v1331 = vsel %vm1275, %v1268, %v1267
      %v1332 = vsel %vm1277, %v1269, %v1331
      %v1333 = vsel %vm1279, %v1270, %v1332
      %v1334 = vsel %vm1281, %v1271, %v1333
      %v1335 = vsel %vm1283, %v1272, %v1334
      %v1336 = vsel %vm1285, %v1273, %v1335
      %v1337 = vsel %vm1287, %v1274, %v1336
      %v1338 = vpack.c.b16 %v1295, %v1288
      %v1339 = vpack.c.b16 %v1309, %v1302
      %v1340 = vpack.c.b16 %v1323, %v1316
      %v1341 = vpack.c.b16 %v1337, %v1330
      %v1345 = vunpack.c.l.b16 %v1140
      %v1346 = vunpack.c.l.b16 %v1141
      %v1347 = vunpack.c.l.b16 %v1142
      %v1348 = vpack.c.b16 %v1346, %v1345
      %v1349 = vpack.c.b16 %v1347, %v1347
      %v1352 = vsel %vm627, %v1338, 0
      %v1355 = vsel %vm627, %v1339, 0
      %v1358 = vsel %vm627, %v1340, 0
      %v1361 = vsel %vm627, %v1341, 0
      %vm1363 = vcmask 1043456
      %v1365 = vsel %vm1363, %v1349, 0
      %1367 = vmatpush.bf16.msra.mxu0 0
      %1368 = vmatpush.bf16.msra.mxu0 0
      %1369 = vmatpush.bf16.msra.mxu0 0
      %1370 = vmatpush.bf16.msra.mxu0 0
      %1371 = vmatpush.bf16.msra.mxu0 0
      %1372 = vmatpush.bf16.msra.mxu0 0
      %1373 = vmatpush.bf16.msra.mxu0 %v1365
      %1374 = vmatpush.bf16.msra.mxu0 %v1348
      %1375 = vmatmul.bf16.gmra.mxu0 %v1352
      %v1376 = vpop.f32.mrf.mxu0
      %v1377 = vadd.f32 %v1145, %v1376
      %v1378 = vpop.f32.mrf.mxu0
      %v1379 = vadd.f32 %v1145, %v1378
      %1380 = vmatmul.bf16.gmra.mxu0 %v1355
      %v1381 = vpop.f32.mrf.mxu0
      %v1382 = vadd.f32 %v1145, %v1381
      %v1383 = vpop.f32.mrf.mxu0
      %v1384 = vadd.f32 %v1145, %v1383
      %1385 = vmatmul.bf16.gmra.mxu0 %v1358
      %v1386 = vpop.f32.mrf.mxu0
      %v1387 = vadd.f32 %v1145, %v1386
      %v1388 = vpop.f32.mrf.mxu0
      %v1389 = vadd.f32 %v1145, %v1388
      %1390 = vmatmul.bf16.gmra.mxu0 %v1361
      %v1391 = vpop.f32.mrf.mxu0
      %v1392 = vadd.f32 %v1145, %v1391
      %v1393 = vpop.f32.mrf.mxu0
      %v1394 = vadd.f32 %v1145, %v1393
      %1395 = vdwg.mxu0
      %v1396 = vlaneseq
      %v1397 = vand.u32 %v1396, 127
      %vm1398 = vcmp.lt.s32.totalorder %v1397, 48
      %v1399 = vld [vmem:[%s426] sm:$0xff]
      %v1400 = vld [vmem:[%s426 + $0x8] sm:$0xff]
      %v1401 = vld [vmem:[%s426 + $0x10] sm:$0xff]
      %v1402 = vld [vmem:[%s426 + $0x18] sm:$0xff]
      %v1403 = vld [vmem:[%s426 + $0x20] sm:$0xff]
      %v1404 = vld [vmem:[%s426 + $0x28] sm:$0xff]
      %v1405 = vld [vmem:[%s426 + $0x30] sm:$0xff]
      %v1406 = vld [vmem:[%s426 + $0x38] sm:$0xff]
      %v1407 = vsel %vm1398, %v1399, 0.0
      %v1408 = vsel %vm1398, %v1400, 0.0
      %v1409 = vsel %vm1398, %v1401, 0.0
      %v1410 = vsel %vm1398, %v1402, 0.0
      %v1411 = vsel %vm1398, %v1403, 0.0
      %v1412 = vsel %vm1398, %v1404, 0.0
      %v1413 = vsel %vm1398, %v1405, 0.0
      %v1414 = vsel %vm1398, %v1406, 0.0
      %v1415 = vadd.f32 %v1377, %v1407
      %v1416 = vadd.f32 %v1379, %v1408
      %v1417 = vadd.f32 %v1382, %v1409
      %v1418 = vadd.f32 %v1384, %v1410
      %v1419 = vadd.f32 %v1387, %v1411
      %v1420 = vadd.f32 %v1389, %v1412
      %v1421 = vadd.f32 %v1392, %v1413
      %v1422 = vadd.f32 %v1394, %v1414
      %v1423 = vmax.f32 %v1415, 0.0
      %v1424 = vmax.f32 %v1416, 0.0
      %v1425 = vmax.f32 %v1417, 0.0
      %v1426 = vmax.f32 %v1418, 0.0
      %v1427 = vmax.f32 %v1419, 0.0
      %v1428 = vmax.f32 %v1420, 0.0
      %v1429 = vmax.f32 %v1421, 0.0
      %v1430 = vmax.f32 %v1422, 0.0
      %v1431 = vpack.c.bf16 %v1424, %v1423
      %v1432 = vpack.c.bf16 %v1426, %v1425
      %v1433 = vpack.c.bf16 %v1428, %v1427
      %v1434 = vpack.c.bf16 %v1430, %v1429
      %v1435 = vld [vmem:[%s5] sm:$0xf]
      %v1436 = vld [vmem:[%s5 + $0x4] sm:$0xf]
      %v1437 = vld [vmem:[%s5 + $0x8] sm:$0xf]
      %v1438 = vld [vmem:[%s5 + $0xc] sm:$0xf]
      %v1439 = vld [vmem:[%s5 + $0x10] sm:$0xf]
      %v1440 = vld [vmem:[%s5 + $0x14] sm:$0xf]
      %v1441 = vld [vmem:[%s5 + $0x18] sm:$0xf]
      %v1442 = vld [vmem:[%s5 + $0x1c] sm:$0xf]
      %v1443 = vld [vmem:[%s5 + $0x20] sm:$0xf]
      %v1444 = vld [vmem:[%s5 + $0x24] sm:$0xf]
      %v1445 = vld [vmem:[%s5 + $0x28] sm:$0xf]
      %v1446 = vld [vmem:[%s5 + $0x2c] sm:$0xf]
      %v1447 = vld [vmem:[%s5 + $0x30] sm:$0xf]
      %v1448 = vld [vmem:[%s5 + $0x34] sm:$0xf]
      %v1449 = vld [vmem:[%s5 + $0x38] sm:$0xf]
      %v1450 = vld [vmem:[%s5 + $0x3c] sm:$0xf]
      %v1451 = vld [vmem:[%s6] sm:$0x1]
      %v1453 = vperm.slane %v1451, 0
      %v1471 = vunpack.c.l.b16 %v1435
      %v1472 = vunpack.c.l.b16 %v1436
      %v1473 = vunpack.c.l.b16 %v1437
      %v1474 = vunpack.c.l.b16 %v1438
      %v1475 = vunpack.c.l.b16 %v1439
      %v1476 = vunpack.c.l.b16 %v1440
      %v1477 = vunpack.c.l.b16 %v1441
      %v1478 = vunpack.c.l.b16 %v1442
      %v1479 = vunpack.c.l.b16 %v1443
      %v1480 = vunpack.c.l.b16 %v1444
      %v1481 = vunpack.c.l.b16 %v1445
      %v1482 = vunpack.c.l.b16 %v1446
      %v1483 = vunpack.c.l.b16 %v1447
      %v1484 = vunpack.c.l.b16 %v1448
      %v1485 = vunpack.c.l.b16 %v1449
      %v1486 = vunpack.c.l.b16 %v1450
      %v1487 = vpack.c.b16 %v1472, %v1471
      %v1488 = vpack.c.b16 %v1474, %v1473
      %v1489 = vpack.c.b16 %v1476, %v1475
      %v1490 = vpack.c.b16 %v1478, %v1477
      %v1491 = vpack.c.b16 %v1480, %v1479
      %v1492 = vpack.c.b16 %v1482, %v1481
      %v1493 = vpack.c.b16 %v1484, %v1483
      %v1494 = vpack.c.b16 %v1486, %v1485
      %1503 = vmatpush.bf16.msra.mxu0 %v1494
      %1504 = vmatpush.bf16.msra.mxu0 %v1493
      %1505 = vmatpush.bf16.msra.mxu0 %v1492
      %1506 = vmatpush.bf16.msra.mxu0 %v1491
      %1507 = vmatpush.bf16.msra.mxu0 %v1490
      %1508 = vmatpush.bf16.msra.mxu0 %v1489
      %1509 = vmatpush.bf16.msra.mxu0 %v1488
      %1510 = vmatpush.bf16.msra.mxu0 %v1487
      %1511 = vmatmul.bf16.gmra.mxu0 %v1431
      %v1512 = vpop.f32.mrf.mxu0
      %v1513 = vadd.f32 %v1453, %v1512
      %v1514 = vpop.f32.mrf.mxu0
      %v1515 = vadd.f32 %v1453, %v1514
      %1516 = vmatmul.bf16.gmra.mxu0 %v1432
      %v1517 = vpop.f32.mrf.mxu0
      %v1518 = vadd.f32 %v1453, %v1517
      %v1519 = vpop.f32.mrf.mxu0
      %v1520 = vadd.f32 %v1453, %v1519
      %1521 = vmatmul.bf16.gmra.mxu0 %v1433
      %v1522 = vpop.f32.mrf.mxu0
      %v1523 = vadd.f32 %v1453, %v1522
      %v1524 = vpop.f32.mrf.mxu0
      %v1525 = vadd.f32 %v1453, %v1524
      %1526 = vmatmul.bf16.gmra.mxu0 %v1434
      %v1527 = vpop.f32.mrf.mxu0
      %v1528 = vadd.f32 %v1453, %v1527
      %v1529 = vpop.f32.mrf.mxu0
      %v1530 = vadd.f32 %v1453, %v1529
      %1531 = vdwg.mxu0
      %v1532 = vmax.f32 %v1513, 0.0
      %v1533 = vmax.f32 %v1515, 0.0
      %v1534 = vmax.f32 %v1518, 0.0
      %v1535 = vmax.f32 %v1520, 0.0
      %v1536 = vmax.f32 %v1523, 0.0
      %v1537 = vmax.f32 %v1525, 0.0
      %v1538 = vmax.f32 %v1528, 0.0
      %v1539 = vmax.f32 %v1530, 0.0
      %v1540 = vpack.c.bf16 %v1533, %v1532
      %v1541 = vpack.c.bf16 %v1535, %v1534
      %v1542 = vpack.c.bf16 %v1537, %v1536
      %v1543 = vpack.c.bf16 %v1539, %v1538
      %v1544 = vld [vmem:[%s7] sm:$0xff]
      %v1545 = vld [vmem:[%s7 + $0x8] sm:$0xff]
      %v1546 = vld [vmem:[%s7 + $0x10] sm:$0xff]
      %v1547 = vld [vmem:[%s7 + $0x18] sm:$0xff]
      %v1548 = vld [vmem:[%s7 + $0x20] sm:$0xff]
      %v1549 = vld [vmem:[%s7 + $0x28] sm:$0xff]
      %v1550 = vld [vmem:[%s7 + $0x30] sm:$0xff]
      %v1551 = vld [vmem:[%s7 + $0x38] sm:$0xff]
      %v1552 = vld [vmem:[%s7 + $0x40] sm:$0xff]
      %v1553 = vld [vmem:[%s7 + $0x48] sm:$0xff]
      %v1554 = vld [vmem:[%s7 + $0x50] sm:$0xff]
      %v1555 = vld [vmem:[%s7 + $0x58] sm:$0xff]
      %v1556 = vld [vmem:[%s7 + $0x60] sm:$0xff]
      %v1557 = vld [vmem:[%s7 + $0x68] sm:$0xff]
      %v1558 = vld [vmem:[%s7 + $0x70] sm:$0xff]
      %v1559 = vld [vmem:[%s7 + $0x78] sm:$0xff]
      %v1560 = vld [vmem:[%s8] sm:$0x3]
      %v1562 = vperm.slane %v1560, 0
      %v1563 = vperm.slane %v1560, 1
      %v1582 = vunpack.c.l.b16 %v1544
      %v1583 = vunpack.c.h.b16 %v1544
      %v1584 = vunpack.c.l.b16 %v1545
      %v1585 = vunpack.c.h.b16 %v1545
      %v1586 = vunpack.c.l.b16 %v1546
      %v1587 = vunpack.c.h.b16 %v1546
      %v1588 = vunpack.c.l.b16 %v1547
      %v1589 = vunpack.c.h.b16 %v1547
      %v1590 = vunpack.c.l.b16 %v1548
      %v1591 = vunpack.c.h.b16 %v1548
      %v1592 = vunpack.c.l.b16 %v1549
      %v1593 = vunpack.c.h.b16 %v1549
      %v1594 = vunpack.c.l.b16 %v1550
      %v1595 = vunpack.c.h.b16 %v1550
      %v1596 = vunpack.c.l.b16 %v1551
      %v1597 = vunpack.c.h.b16 %v1551
      %v1598 = vunpack.c.l.b16 %v1552
      %v1599 = vunpack.c.h.b16 %v1552
      %v1600 = vunpack.c.l.b16 %v1553
      %v1601 = vunpack.c.h.b16 %v1553
      %v1602 = vunpack.c.l.b16 %v1554
      %v1603 = vunpack.c.h.b16 %v1554
      %v1604 = vunpack.c.l.b16 %v1555
      %v1605 = vunpack.c.h.b16 %v1555
      %v1606 = vunpack.c.l.b16 %v1556
      %v1607 = vunpack.c.h.b16 %v1556
      %v1608 = vunpack.c.l.b16 %v1557
      %v1609 = vunpack.c.h.b16 %v1557
      %v1610 = vunpack.c.l.b16 %v1558
      %v1611 = vunpack.c.h.b16 %v1558
      %v1612 = vunpack.c.l.b16 %v1559
      %v1613 = vunpack.c.h.b16 %v1559
      %v1614 = vpack.c.b16 %v1584, %v1582
      %v1615 = vpack.c.b16 %v1585, %v1583
      %v1616 = vpack.c.b16 %v1588, %v1586
      %v1617 = vpack.c.b16 %v1589, %v1587
      %v1618 = vpack.c.b16 %v1592, %v1590
      %v1619 = vpack.c.b16 %v1593, %v1591
      %v1620 = vpack.c.b16 %v1596, %v1594
      %v1621 = vpack.c.b16 %v1597, %v1595
      %v1622 = vpack.c.b16 %v1600, %v1598
      %v1623 = vpack.c.b16 %v1601, %v1599
      %v1624 = vpack.c.b16 %v1604, %v1602
      %v1625 = vpack.c.b16 %v1605, %v1603
      %v1626 = vpack.c.b16 %v1608, %v1606
      %v1627 = vpack.c.b16 %v1609, %v1607
      %v1628 = vpack.c.b16 %v1612, %v1610
      %v1629 = vpack.c.b16 %v1613, %v1611
      %1646 = vmatpush.bf16.msra.mxu0 %v1628
      %1647 = vmatpush.bf16.msra.mxu0 %v1626
      %1648 = vmatpush.bf16.msra.mxu0 %v1624
      %1649 = vmatpush.bf16.msra.mxu0 %v1622
      %1650 = vmatpush.bf16.msra.mxu0 %v1620
      %1651 = vmatpush.bf16.msra.mxu0 %v1618
      %1652 = vmatpush.bf16.msra.mxu0 %v1616
      %1653 = vmatpush.bf16.msra.mxu0 %v1614
      %1654 = vmatmul.bf16.gmra.mxu0 %v1540
      %v1655 = vpop.f32.mrf.mxu0
      %v1656 = vadd.f32 %v1562, %v1655
      %v1657 = vpop.f32.mrf.mxu0
      %v1658 = vadd.f32 %v1562, %v1657
      %1659 = vmatmul.bf16.gmra.mxu0 %v1541
      %v1660 = vpop.f32.mrf.mxu0
      %v1661 = vadd.f32 %v1562, %v1660
      %v1662 = vpop.f32.mrf.mxu0
      %v1663 = vadd.f32 %v1562, %v1662
      %1664 = vmatmul.bf16.gmra.mxu0 %v1542
      %v1665 = vpop.f32.mrf.mxu0
      %v1666 = vadd.f32 %v1562, %v1665
      %v1667 = vpop.f32.mrf.mxu0
      %v1668 = vadd.f32 %v1562, %v1667
      %1669 = vmatmul.bf16.gmra.mxu0 %v1543
      %v1670 = vpop.f32.mrf.mxu0
      %v1671 = vadd.f32 %v1562, %v1670
      %v1672 = vpop.f32.mrf.mxu0
      %v1673 = vadd.f32 %v1562, %v1672
      %1674 = vdwg.mxu0
      %1675 = vmatpush.bf16.msra.mxu0 %v1629
      %1676 = vmatpush.bf16.msra.mxu0 %v1627
      %1677 = vmatpush.bf16.msra.mxu0 %v1625
      %1678 = vmatpush.bf16.msra.mxu0 %v1623
      %1679 = vmatpush.bf16.msra.mxu0 %v1621
      %1680 = vmatpush.bf16.msra.mxu0 %v1619
      %1681 = vmatpush.bf16.msra.mxu0 %v1617
      %1682 = vmatpush.bf16.msra.mxu0 %v1615
      %1683 = vmatmul.bf16.gmra.mxu0 %v1540
      %v1684 = vpop.f32.mrf.mxu0
      %v1685 = vadd.f32 %v1563, %v1684
      %v1686 = vpop.f32.mrf.mxu0
      %v1687 = vadd.f32 %v1563, %v1686
      %1688 = vmatmul.bf16.gmra.mxu0 %v1541
      %v1689 = vpop.f32.mrf.mxu0
      %v1690 = vadd.f32 %v1563, %v1689
      %v1691 = vpop.f32.mrf.mxu0
      %v1692 = vadd.f32 %v1563, %v1691
      %1693 = vmatmul.bf16.gmra.mxu0 %v1542
      %v1694 = vpop.f32.mrf.mxu0
      %v1695 = vadd.f32 %v1563, %v1694
      %v1696 = vpop.f32.mrf.mxu0
      %v1697 = vadd.f32 %v1563, %v1696
      %1698 = vmatmul.bf16.gmra.mxu0 %v1543
      %v1699 = vpop.f32.mrf.mxu0
      %v1700 = vadd.f32 %v1563, %v1699
      %v1701 = vpop.f32.mrf.mxu0
      %v1702 = vadd.f32 %v1563, %v1701
      %1703 = vdwg.mxu0
      %v1704 = vmax.f32 %v1656, 0.0
      %v1705 = vmax.f32 %v1685, 0.0
      %v1706 = vmax.f32 %v1658, 0.0
      %v1707 = vmax.f32 %v1687, 0.0
      %v1708 = vmax.f32 %v1661, 0.0
      %v1709 = vmax.f32 %v1690, 0.0
      %v1710 = vmax.f32 %v1663, 0.0
      %v1711 = vmax.f32 %v1692, 0.0
      %v1712 = vmax.f32 %v1666, 0.0
      %v1713 = vmax.f32 %v1695, 0.0
      %v1714 = vmax.f32 %v1668, 0.0
      %v1715 = vmax.f32 %v1697, 0.0
      %v1716 = vmax.f32 %v1671, 0.0
      %v1717 = vmax.f32 %v1700, 0.0
      %v1718 = vmax.f32 %v1673, 0.0
      %v1719 = vmax.f32 %v1702, 0.0
      %v1720 = vld [vmem:[%s9] sm:$0xff]
      %v1721 = vld [vmem:[%s9 + $0x8] sm:$0xff]
      %v1722 = vld [vmem:[%s9 + $0x10] sm:$0xff]
      %v1723 = vld [vmem:[%s9 + $0x18] sm:$0xff]
      %v1724 = vld [vmem:[%s9 + $0x20] sm:$0xff]
      %v1725 = vld [vmem:[%s9 + $0x28] sm:$0xff]
      %v1726 = vld [vmem:[%s9 + $0x30] sm:$0xff]
      %v1727 = vld [vmem:[%s9 + $0x38] sm:$0xff]
      %v1728 = vld [vmem:[%s9 + $0x40] sm:$0xff]
      %v1729 = vld [vmem:[%s9 + $0x48] sm:$0xff]
      %v1730 = vld [vmem:[%s9 + $0x50] sm:$0xff]
      %v1731 = vld [vmem:[%s9 + $0x58] sm:$0xff]
      %v1732 = vld [vmem:[%s9 + $0x60] sm:$0xff]
      %v1733 = vld [vmem:[%s9 + $0x68] sm:$0xff]
      %v1734 = vld [vmem:[%s9 + $0x70] sm:$0xff]
      %v1735 = vld [vmem:[%s9 + $0x78] sm:$0xff]
      %v1736 = vld [vmem:[%s9 + $0x80] sm:$0xff]
      %v1737 = vld [vmem:[%s9 + $0x88] sm:$0xff]
      %v1738 = vld [vmem:[%s9 + $0x90] sm:$0xff]
      %v1739 = vld [vmem:[%s9 + $0x98] sm:$0xff]
      %v1740 = vld [vmem:[%s9 + $0xa0] sm:$0xff]
      %v1741 = vld [vmem:[%s9 + $0xa8] sm:$0xff]
      %v1742 = vld [vmem:[%s9 + $0xb0] sm:$0xff]
      %v1743 = vld [vmem:[%s9 + $0xb8] sm:$0xff]
      %v1744 = vld [vmem:[%s9 + $0xc0] sm:$0xff]
      %v1745 = vld [vmem:[%s9 + $0xc8] sm:$0xff]
      %v1746 = vld [vmem:[%s9 + $0xd0] sm:$0xff]
      %v1747 = vld [vmem:[%s9 + $0xd8] sm:$0xff]
      %v1748 = vld [vmem:[%s9 + $0xe0] sm:$0xff]
      %v1749 = vld [vmem:[%s9 + $0xe8] sm:$0xff]
      %v1750 = vld [vmem:[%s9 + $0xf0] sm:$0xff]
      %v1751 = vld [vmem:[%s9 + $0xf8] sm:$0xff]
      %v1752 = vld [vmem:[%s10] sm:$0x1]
      %v1754 = vperm.slane %v1752, 0
      %1756 = vmatpush.msra.mxu0 %v1735
      %1757 = vmatpush.msra.mxu0 %v1734
      %1758 = vmatpush.msra.mxu0 %v1733
      %1759 = vmatpush.msra.mxu0 %v1732
      %1760 = vmatpush.msra.mxu0 %v1731
      %1761 = vmatpush.msra.mxu0 %v1730
      %1762 = vmatpush.msra.mxu0 %v1729
      %1763 = vmatpush.msra.mxu0 %v1728
      %1764 = vmatpush.msra.mxu0 %v1727
      %1765 = vmatpush.msra.mxu0 %v1726
      %1766 = vmatpush.msra.mxu0 %v1725
      %1767 = vmatpush.msra.mxu0 %v1724
      %1768 = vmatpush.msra.mxu0 %v1723
      %1769 = vmatpush.msra.mxu0 %v1722
      %1770 = vmatpush.msra.mxu0 %v1721
      %1771 = vmatpush.msra.mxu0 %v1720
      %1772 = vmatmul.f32.gmra.mxu0 %v1704
      %v1773 = vpop.f32.mrf.mxu0
      %v1774 = vadd.f32 %v1754, %v1773
      %1775 = vmatmul.f32.gmra.mxu0 %v1706
      %v1776 = vpop.f32.mrf.mxu0
      %v1777 = vadd.f32 %v1754, %v1776
      %1778 = vmatmul.f32.gmra.mxu0 %v1708
      %v1779 = vpop.f32.mrf.mxu0
      %v1780 = vadd.f32 %v1754, %v1779
      %1781 = vmatmul.f32.gmra.mxu0 %v1710
      %v1782 = vpop.f32.mrf.mxu0
      %v1783 = vadd.f32 %v1754, %v1782
      %1784 = vmatmul.f32.gmra.mxu0 %v1712
      %v1785 = vpop.f32.mrf.mxu0
      %v1786 = vadd.f32 %v1754, %v1785
      %1787 = vmatmul.f32.gmra.mxu0 %v1714
      %v1788 = vpop.f32.mrf.mxu0
      %v1789 = vadd.f32 %v1754, %v1788
      %1790 = vmatmul.f32.gmra.mxu0 %v1716
      %v1791 = vpop.f32.mrf.mxu0
      %v1792 = vadd.f32 %v1754, %v1791
      %1793 = vmatmul.f32.gmra.mxu0 %v1718
      %v1794 = vpop.f32.mrf.mxu0
      %v1795 = vadd.f32 %v1754, %v1794
      %1796 = vdwg.mxu0
      %1797 = vmatpush.msra.mxu0 %v1751
      %1798 = vmatpush.msra.mxu0 %v1750
      %1799 = vmatpush.msra.mxu0 %v1749
      %1800 = vmatpush.msra.mxu0 %v1748
      %1801 = vmatpush.msra.mxu0 %v1747
      %1802 = vmatpush.msra.mxu0 %v1746
      %1803 = vmatpush.msra.mxu0 %v1745
      %1804 = vmatpush.msra.mxu0 %v1744
      %1805 = vmatpush.msra.mxu0 %v1743
      %1806 = vmatpush.msra.mxu0 %v1742
      %1807 = vmatpush.msra.mxu0 %v1741
      %1808 = vmatpush.msra.mxu0 %v1740
      %1809 = vmatpush.msra.mxu0 %v1739
      %1810 = vmatpush.msra.mxu0 %v1738
      %1811 = vmatpush.msra.mxu0 %v1737
      %1812 = vmatpush.msra.mxu0 %v1736
      %1813 = vmatmul.f32.gmra.mxu0 %v1705
      %v1814 = vpop.f32.mrf.mxu0
      %v1815 = vadd.f32 %v1774, %v1814
      %1816 = vmatmul.f32.gmra.mxu0 %v1707
      %v1817 = vpop.f32.mrf.mxu0
      %v1818 = vadd.f32 %v1777, %v1817
      %1819 = vmatmul.f32.gmra.mxu0 %v1709
      %v1820 = vpop.f32.mrf.mxu0
      %v1821 = vadd.f32 %v1780, %v1820
      %1822 = vmatmul.f32.gmra.mxu0 %v1711
      %v1823 = vpop.f32.mrf.mxu0
      %v1824 = vadd.f32 %v1783, %v1823
      %1825 = vmatmul.f32.gmra.mxu0 %v1713
      %v1826 = vpop.f32.mrf.mxu0
      %v1827 = vadd.f32 %v1786, %v1826
      %1828 = vmatmul.f32.gmra.mxu0 %v1715
      %v1829 = vpop.f32.mrf.mxu0
      %v1830 = vadd.f32 %v1789, %v1829
      %1831 = vmatmul.f32.gmra.mxu0 %v1717
      %v1832 = vpop.f32.mrf.mxu0
      %v1833 = vadd.f32 %v1792, %v1832
      %1834 = vmatmul.f32.gmra.mxu0 %v1719
      %v1835 = vpop.f32.mrf.mxu0
      %v1836 = vadd.f32 %v1795, %v1835
      %1837 = vdwg.mxu0
      %1838 = vst [vmem:[%s432] sm:$0xff] %v1815
      %1839 = vst [vmem:[%s432 + $0x8] sm:$0xff] %v1818
      %1840 = vst [vmem:[%s432 + $0x10] sm:$0xff] %v1821
      %1841 = vst [vmem:[%s432 + $0x18] sm:$0xff] %v1824
      %1842 = vst [vmem:[%s432 + $0x20] sm:$0xff] %v1827
      %1843 = vst [vmem:[%s432 + $0x28] sm:$0xff] %v1830
      %1844 = vst [vmem:[%s432 + $0x30] sm:$0xff] %v1833
      %1845 = vst [vmem:[%s432 + $0x38] sm:$0xff] %v1836
      %s1846 = smul.u32 8, %s22
      %p1847 = scmp.lt.s32.totalorder %s1846, 31
      %s1848 = scalar_select %p1847, %s1846, 31
      %s1849 = smul.addr %s1848, 8
      %s1850 = scalar_lea.vmem %s11, %s1849
      // Predicated region
      $region65: #{multipart_segmentation_forward.5} parent=63 // pred_check
        %p1851 = pneg %p286
      $region66: #{multipart_segmentation_forward.5} parent=63 // pred_check_branch
        %1853 = sbr.rel (%p1851) target = $region68
      $region67: #{multipart_segmentation_forward.5} parent=63 // pred_region
        %s1854 = smul.u32 8, %s22
      $region68: #{multipart_segmentation_forward.5} parent=63 // pred_fallthru
        _
    $region64: #{multipart_segmentation_forward.5} parent=5 // pred_fallthru
      _
    %p1855 = scmp.le.s32.totalorder 2, %s17
    // Predicated region
    $region69: #{multipart_segmentation_forward.5} parent=5 // pred_check
      %p1856 = pneg %p1855
    $region70: #{multipart_segmentation_forward.5} parent=5 // pred_check_branch
      %1858 = sbr.rel (%p1856) target = $region72
    $region71: #{multipart_segmentation_forward.5} parent=5 // pred_region
      %s1859 = ssub.s32 %s17, 2
      // Predicated region
      $region73: #{multipart_segmentation_forward.5} parent=71 // pred_check
        %p1860 = pneg %p292
      $region74: #{multipart_segmentation_forward.5} parent=71 // pred_check_branch
        %1862 = sbr.rel (%p1860) target = $region76
      $region75: #{multipart_segmentation_forward.5} parent=71 // pred_region
        %s1863 = smul.u32 8, %s23
        %p1864 = scmp.lt.s32.totalorder %s1863, 31
        %s1865 = scalar_select %p1864, %s1863, 31
        %s1866 = smul.addr %s1865, 8
        %s1867 = scalar_lea.vmem %s11, %s1866
      $region76: #{multipart_segmentation_forward.5} parent=71 // pred_fallthru
        _
    $region72: #{multipart_segmentation_forward.5} parent=5 // pred_fallthru
      _
  $region6: #{multipart_segmentation_forward.5} parent=0 // loop_footer
    %s21 = sadd.s32 1, %s17
  $region7: #{multipart_segmentation_forward.5} parent=0 // loop_footer_branch
    %16 = sbr.rel target = $region3
  $region8: #{multipart_segmentation_forward.5} parent=0 // loop_exit
    _

</llo_original>
